<compile_context>
chip_gen: v6e
topology: v6e:2x2x1
jax: 0.10.0
libtpu: 0.0.40
codegen_flags: <defaults>
</compile_context>

<pallas_src>
import functools

import jax
import jax.numpy as jnp
from jax import lax
from jax.experimental import pallas as pl
from jax.experimental.pallas import tpu as pltpu


def _round_up(n, m):
    return ((n + m - 1) // m) * m


# --------------------------------------------------------------------------- #
# Kernel: one grid step == one chunk of `tc` recurrent timesteps.
# --------------------------------------------------------------------------- #
def _dnd_lstm_kernel(x_ref, h0_ref, c0_ref,
                     wi_ref, wh_ref, b_ref, knt_ref, mask_ref, vals_ref,
                     wfc_ref,
                     out_ref, h_out_ref, c_out_ref,
                     xproj_ref, hh_ref,
                     *, t_total, tc):
    HP = h0_ref.shape[1]
    chunk = pl.program_id(0)

    # Initialize the resident carry (h/c live in output VMEM blocks whose
    # index_map is constant over the grid, so they persist across chunks).
    @pl.when(chunk == 0)
    def _():
        h_out_ref[...] = h0_ref[...]
        c_out_ref[...] = c0_ref[...]

    # Hoisted (non-recurrent) input projection for the whole chunk:
    # one M=tc matmul instead of tc M=1 matmuls on the serial path.
    xproj_ref[...] = jnp.dot(x_ref[...], wi_ref[...],
                             preferred_element_type=jnp.float32) + b_ref[...]

    # Loop-invariant reads of the resident VMEM blocks.
    wh = wh_ref[...]
    knt = knt_ref[...]
    mask = mask_ref[...]
    vals = vals_ref[...]

    def step(t, carry):
        h, c = carry

        # Recurrent part only: (1, HP) @ (HP, 5*HP) + precomputed xproj row.
        preact = xproj_ref[pl.ds(t, 1), :] + jnp.dot(
            h, wh, preferred_element_type=jnp.float32)

        gates = jax.nn.sigmoid(preact[:, :4 * HP])
        f_t = gates[:, 0 * HP:1 * HP]          # 128-lane aligned slices
        i_t = gates[:, 1 * HP:2 * HP]
        o_t = gates[:, 2 * HP:3 * HP]
        r_t = gates[:, 3 * HP:4 * HP]
        c_cand = jnp.tanh(preact[:, 4 * HP:5 * HP])

        c_t = f_t * c + i_t * c_cand

        # DND 1-NN cosine retrieval (keys pre-normalized + pre-transposed;
        # query normalization dropped: argmax invariant to positive scaling).
        sims = jnp.dot(c_t, knt, preferred_element_type=jnp.float32) + mask
        best = jnp.max(sims, axis=-1, keepdims=True)
        onehot = (sims >= best).astype(jnp.float32)
        cnt = jnp.sum(onehot, axis=-1, keepdims=True)
        # Tie-normalization AFTER the matmul: one scalar reciprocal on (1,1)
        # instead of a (1, DP) broadcast divide on the serial path.
        m_t = jnp.dot(onehot, vals,
                      preferred_element_type=jnp.float32) * pl.reciprocal(cnt)

        c_t = c_t + r_t * m_t
        h_t = o_t * jnp.tanh(c_t)

        # Stash h_t; fc projection deferred to one chunk-level matmul below.
        hh_ref[pl.ds(t, 1), :] = h_t

        # Steps past the true sequence length (zero-padded tail) must not
        # advance the recurrent state.
        valid = (chunk * tc + t) < t_total
        h = jnp.where(valid, h_t, h)
        c = jnp.where(valid, c_t, c)
        return h, c

    h_fin, c_fin = lax.fori_loop(0, tc, step,
                                 (h_out_ref[...], c_out_ref[...]),
                                 unroll=True)
    h_out_ref[...] = h_fin
    c_out_ref[...] = c_fin

    # Deferred output projection: one (tc, HP) @ (HP, HP) matmul per chunk
    # (off the per-step serial chain), lane+sublane-dense store.
    out_ref[...] = jnp.dot(hh_ref[...], wfc_ref[...],
                           preferred_element_type=jnp.float32)


# --------------------------------------------------------------------------- #
# Wrapper: one-time parameter padding / fusion, then a single pallas_call
# covering the whole episode.
# --------------------------------------------------------------------------- #
def prep_dnd_lstm_params(params, in_dim, H, D):
    """Fuse/pad weights once per episode (outside the recurrent loop)."""
    IN_P = _round_up(in_dim, 128)
    HP = _round_up(H, 128)
    DP = _round_up(D, 128)

    wi_t = params["w_i2h"].T.astype(jnp.float32)         # (in_dim, 5H)
    wh_t = params["w_h2h"].T.astype(jnp.float32)         # (H, 5H)
    bsum = (params["b_i2h"] + params["b_h2h"]).astype(jnp.float32)

    # Gate columns laid out as 5 blocks of HP lanes each (gate data in lanes
    # 0:H of its block, rest zero), so gate slices are whole-vreg selects.
    Wi = jnp.zeros((IN_P, 5 * HP), jnp.float32)
    Wh = jnp.zeros((HP, 5 * HP), jnp.float32)
    b = jnp.zeros((1, 5 * HP), jnp.float32)
    for g in range(5):
        Wi = Wi.at[:in_dim, g * HP:g * HP + H].set(wi_t[:, g * H:(g + 1) * H])
        Wh = Wh.at[:H, g * HP:g * HP + H].set(wh_t[:, g * H:(g + 1) * H])
        b = b.at[0, g * HP:g * HP + H].set(bsum[g * H:(g + 1) * H])

    keys = params["dnd_keys"].astype(jnp.float32)
    kn = keys * jax.lax.rsqrt(jnp.sum(keys * keys, axis=-1, keepdims=True) + 1e-8)
    knT = jnp.zeros((HP, DP), jnp.float32).at[:H, :D].set(kn.T)
    # Additive mask so padded dictionary slots never win the max.
    mask = jnp.full((1, DP), -1e30, jnp.float32).at[:, :D].set(0.0)
    vals = jnp.zeros((DP, HP), jnp.float32).at[:D, :H].set(
        params["dnd_vals"].astype(jnp.float32))
    wfc = jnp.zeros((HP, HP), jnp.float32).at[:H, :H].set(
        params["w_fc"].T.astype(jnp.float32))

    return dict(Wi=Wi, Wh=Wh, b=b, knT=knT, mask=mask, vals=vals, wfc=wfc,
                IN_P=IN_P, HP=HP, DP=DP, in_dim=in_dim, H=H, D=D)


def dnd_lstm_rollout(xs, h0, c0, prepped, tc=8):
    """Run T recurrent steps in ONE pallas_call.

    xs: (T, in_dim); h0, c0: (1, H).
    Returns (outs (T, H), h_T (1, H), c_T (1, H)).
    """
    T, in_dim = xs.shape
    IN_P, HP, DP, H = prepped["IN_P"], prepped["HP"], prepped["DP"], prepped["H"]

    T_pad = _round_up(T, tc)
    n_chunks = T_pad // tc

    xs_p = jnp.zeros((T_pad, IN_P), jnp.float32).at[:T, :in_dim].set(xs)
    h0_p = jnp.zeros((1, HP), jnp.float32).at[:, :H].set(h0)
    c0_p = jnp.zeros((1, HP), jnp.float32).at[:, :H].set(c0)

    kernel = functools.partial(_dnd_lstm_kernel, t_total=T, tc=tc)

    outs, h_new, c_new = pl.pallas_call(
        kernel,
        grid=(n_chunks,),
        out_shape=(
            jax.ShapeDtypeStruct((T_pad, HP), jnp.float32),  # per-step fc output
            jax.ShapeDtypeStruct((1, HP), jnp.float32),      # final h
            jax.ShapeDtypeStruct((1, HP), jnp.float32),      # final c
        ),
        in_specs=[
            pl.BlockSpec((tc, IN_P), lambda c: (c, 0)),         # x chunk (pipelined)
            pl.BlockSpec((1, HP), lambda c: (0, 0)),            # h0
            pl.BlockSpec((1, HP), lambda c: (0, 0)),            # c0
            pl.BlockSpec((IN_P, 5 * HP), lambda c: (0, 0)),     # W_i2h (resident)
            pl.BlockSpec((HP, 5 * HP), lambda c: (0, 0)),       # W_h2h (resident)
            pl.BlockSpec((1, 5 * HP), lambda c: (0, 0)),        # fused bias
            pl.BlockSpec((HP, DP), lambda c: (0, 0)),           # normalized keys^T
            pl.BlockSpec((1, DP), lambda c: (0, 0)),            # dict validity mask
            pl.BlockSpec((DP, HP), lambda c: (0, 0)),           # dict values
            pl.BlockSpec((HP, HP), lambda c: (0, 0)),           # fc weight^T
        ],
        out_specs=(
            pl.BlockSpec((tc, HP), lambda c: (c, 0)),
            pl.BlockSpec((1, HP), lambda c: (0, 0)),
            pl.BlockSpec((1, HP), lambda c: (0, 0)),
        ),
        scratch_shapes=[
            pltpu.VMEM((tc, 5 * HP), jnp.float32),   # hoisted input projection
            pltpu.VMEM((tc, HP), jnp.float32),       # per-chunk h_t history
        ],
        compiler_params=pltpu.CompilerParams(
            dimension_semantics=("arbitrary",)),     # sequential recurrence
    )(xs_p, h0_p, c0_p, prepped["Wi"], prepped["Wh"], prepped["b"],
      prepped["knT"], prepped["mask"], prepped["vals"], prepped["wfc"])

    return outs[:T, :H], h_new[:, :H], c_new[:, :H]


def dnd_lstm_mod_forward(x, hid, prepped):
    """Single-step equivalent of DNDLSTMMod.forward: x (in_dim,) -> out (H,)."""
    outs, h, c = dnd_lstm_rollout(x[None, :], hid[0], hid[1], prepped)
    return outs[0], (h, c)


# --------------------------------------------------------------------------- #
# Pure-JAX reference (original, un-fused math) for correctness checking.
# --------------------------------------------------------------------------- #
def _reference_rollout(xs, h, c, params):
    H = h.shape[1]
    kn = params["dnd_keys"] / jnp.sqrt(
        jnp.sum(params["dnd_keys"] ** 2, -1, keepdims=True) + 1e-8)
    outs = []
    for t in range(xs.shape[0]):
        x = xs[t:t + 1]
        preact = (x @ params["w_i2h"].T + params["b_i2h"]
                  + h @ params["w_h2h"].T + params["b_h2h"])
        gates = jax.nn.sigmoid(preact[:, :4 * H])
        f_t, i_t, o_t, r_t = (gates[:, k * H:(k + 1) * H] for k in range(4))
        c_cand = jnp.tanh(preact[:, 4 * H:])
        c_t = f_t * c + i_t * c_cand
        q = c_t / jnp.sqrt(jnp.sum(c_t ** 2, -1, keepdims=True) + 1e-8)
        sims = q @ kn.T
        best = jnp.max(sims, -1, keepdims=True)
        onehot = (sims >= best).astype(jnp.float32)
        onehot = onehot / jnp.sum(onehot, -1, keepdims=True)
        m_t = onehot @ params["dnd_vals"]
        c_t = c_t + r_t * m_t
        h_t = o_t * jnp.tanh(c_t)
        outs.append((h_t @ params["w_fc"].T)[0])
        h, c = h_t, c_t
    return jnp.stack(outs), h, c


if __name__ == "__main__":
    IN_DIM, OUT_DIM, DICT_LEN, T = 16, 32, 64, 8

    key = jax.random.PRNGKey(0)
    ks = jax.random.split(key, 8)

    params = {
        "w_i2h": 0.1 * jax.random.normal(ks[0], (5 * OUT_DIM, IN_DIM), jnp.float32),
        "b_i2h": 0.1 * jax.random.normal(ks[1], (5 * OUT_DIM,), jnp.float32),
        "w_h2h": 0.1 * jax.random.normal(ks[2], (5 * OUT_DIM, OUT_DIM), jnp.float32),
        "b_h2h": 0.1 * jax.random.normal(ks[3], (5 * OUT_DIM,), jnp.float32),
        "dnd_keys": jax.random.normal(ks[4], (DICT_LEN, OUT_DIM), jnp.float32),
        "dnd_vals": jax.random.normal(ks[5], (DICT_LEN, OUT_DIM), jnp.float32),
        "w_fc": 0.1 * jax.random.normal(ks[6], (OUT_DIM, OUT_DIM), jnp.float32),
    }

    xs = jax.random.normal(ks[7], (T, IN_DIM), jnp.float32)   # episode of T steps
    h0 = jnp.zeros((1, OUT_DIM), jnp.float32)                 # resetnode()
    c0 = jnp.zeros((1, OUT_DIM), jnp.float32)

    prepped = prep_dnd_lstm_params(params, IN_DIM, OUT_DIM, DICT_LEN)

    outs, h1, c1 = dnd_lstm_rollout(xs, h0, c0, prepped)
    outs = jax.block_until_ready(outs)

    outs_ref, h_ref, c_ref = _reference_rollout(xs, h0, c0, params)

    assert outs.shape == (T, OUT_DIM)
    assert h1.shape == (1, OUT_DIM) and c1.shape == (1, OUT_DIM)
    assert jnp.allclose(outs, outs_ref, atol=1e-4), "output mismatch vs reference"
    assert jnp.allclose(h1, h_ref, atol=1e-4), "h mismatch vs reference"
    assert jnp.allclose(c1, c_ref, atol=1e-4), "c mismatch vs reference"

    # Single-step API (mirrors DNDLSTMMod.forward + self.hid update).
    out0, _ = dnd_lstm_mod_forward(xs[0], (h0, c0), prepped)
    out0 = jax.block_until_ready(out0)
    assert out0.shape == (OUT_DIM,)
    assert jnp.allclose(out0, outs_ref[0], atol=1e-4)

    print("KERNEL_OK")
</pallas_src>

<mosaic_0001>
module attributes {stable_mosaic.version = 11 : i64} {
  func.func @_dnd_lstm_kernel(%arg0: i32, %arg1: memref<8x128xf32, #tpu.memory_space<vmem>>, %arg2: memref<1x128xf32, #tpu.memory_space<vmem>>, %arg3: memref<1x128xf32, #tpu.memory_space<vmem>>, %arg4: memref<128x640xf32, #tpu.memory_space<vmem>>, %arg5: memref<128x640xf32, #tpu.memory_space<vmem>>, %arg6: memref<1x640xf32, #tpu.memory_space<vmem>>, %arg7: memref<128x128xf32, #tpu.memory_space<vmem>>, %arg8: memref<1x128xf32, #tpu.memory_space<vmem>>, %arg9: memref<128x128xf32, #tpu.memory_space<vmem>>, %arg10: memref<128x128xf32, #tpu.memory_space<vmem>>, %arg11: memref<8x128xf32, #tpu.memory_space<vmem>>, %arg12: memref<1x128xf32, #tpu.memory_space<vmem>>, %arg13: memref<1x128xf32, #tpu.memory_space<vmem>>, %arg14: memref<8x640xf32, #tpu.memory_space<vmem>>, %arg15: memref<8x128xf32, #tpu.memory_space<vmem>>) attributes {dimension_semantics = [#tpu.dimension_semantics<arbitrary>], iteration_bounds = array<i64: 1>, scalar_prefetch = 0 : i64, scratch_operands = 2 : i64, tpu.core_type = #tpu.core_type<tc>, window_params = [{transform_indices = @transform_0, window_bounds = array<i64: 8, 128>}, {pipeline_mode = #tpu.pipeline_mode<synchronous>, transform_indices = @transform_1, window_bounds = array<i64: 1, 128>}, {pipeline_mode = #tpu.pipeline_mode<synchronous>, transform_indices = @transform_2, window_bounds = array<i64: 1, 128>}, {pipeline_mode = #tpu.pipeline_mode<synchronous>, transform_indices = @transform_3, window_bounds = array<i64: 128, 640>}, {pipeline_mode = #tpu.pipeline_mode<synchronous>, transform_indices = @transform_4, window_bounds = array<i64: 128, 640>}, {pipeline_mode = #tpu.pipeline_mode<synchronous>, transform_indices = @transform_5, window_bounds = array<i64: 1, 640>}, {pipeline_mode = #tpu.pipeline_mode<synchronous>, transform_indices = @transform_6, window_bounds = array<i64: 128, 128>}, {pipeline_mode = #tpu.pipeline_mode<synchronous>, transform_indices = @transform_7, window_bounds = array<i64: 1, 128>}, {pipeline_mode = #tpu.pipeline_mode<synchronous>, transform_indices = @transform_8, window_bounds = array<i64: 128, 128>}, {pipeline_mode = #tpu.pipeline_mode<synchronous>, transform_indices = @transform_9, window_bounds = array<i64: 128, 128>}, {transform_indices = @transform_10, window_bounds = array<i64: 8, 128>}, {pipeline_mode = #tpu.pipeline_mode<synchronous>, transform_indices = @transform_11, window_bounds = array<i64: 1, 128>}, {pipeline_mode = #tpu.pipeline_mode<synchronous>, transform_indices = @transform_12, window_bounds = array<i64: 1, 128>}]} {
    %c0_i32 = arith.constant 0 : i32
    %0 = arith.cmpi eq, %arg0, %c0_i32 : i32
    %1 = arith.extui %0 : i1 to i32
    %c0_i32_0 = arith.constant 0 : i32
    %2 = arith.cmpi ne, %1, %c0_i32_0 : i32
    scf.if %2 {
      %c0_112 = arith.constant 0 : index
      %c0_113 = arith.constant 0 : index
      %374 = vector.load %arg2[%c0_112, %c0_113] : memref<1x128xf32, #tpu.memory_space<vmem>>, vector<1x128xf32>
      %c0_114 = arith.constant 0 : index
      %c0_115 = arith.constant 0 : index
      %375 = vector.load %arg12[%c0_114, %c0_115] : memref<1x128xf32, #tpu.memory_space<vmem>>, vector<1x128xf32>
      tpu.vector_store %arg12[%c0_114, %c0_115], %374 {strides = array<i32>} : memref<1x128xf32, #tpu.memory_space<vmem>>, vector<1x128xf32>,
      %c0_116 = arith.constant 0 : index
      %c0_117 = arith.constant 0 : index
      %376 = vector.load %arg3[%c0_116, %c0_117] : memref<1x128xf32, #tpu.memory_space<vmem>>, vector<1x128xf32>
      %c0_118 = arith.constant 0 : index
      %c0_119 = arith.constant 0 : index
      %377 = vector.load %arg13[%c0_118, %c0_119] : memref<1x128xf32, #tpu.memory_space<vmem>>, vector<1x128xf32>
      tpu.vector_store %arg13[%c0_118, %c0_119], %376 {strides = array<i32>} : memref<1x128xf32, #tpu.memory_space<vmem>>, vector<1x128xf32>,
    } else {
    }
    %c0 = arith.constant 0 : index
    %c0_1 = arith.constant 0 : index
    %3 = vector.load %arg1[%c0, %c0_1] : memref<8x128xf32, #tpu.memory_space<vmem>>, vector<8x128xf32>
    %c0_2 = arith.constant 0 : index
    %c0_3 = arith.constant 0 : index
    %4 = vector.load %arg4[%c0_2, %c0_3] : memref<128x640xf32, #tpu.memory_space<vmem>>, vector<128x640xf32>
    %cst = arith.constant dense<0.000000e+00> : vector<8x640xf32>
    %5 = tpu.matmul %3, %4, %cst {dimension_numbers = #tpu.dot_dimension_numbers<[1], [0], [0], [1], [0, 0, 1, 1], [], []>} : vector<8x128xf32>, vector<128x640xf32>, vector<8x640xf32> -> vector<8x640xf32>
    %c0_4 = arith.constant 0 : index
    %c0_5 = arith.constant 0 : index
    %6 = vector.load %arg6[%c0_4, %c0_5] : memref<1x640xf32, #tpu.memory_space<vmem>>, vector<1x640xf32>
    %7 = vector.broadcast %6 : vector<1x640xf32> to vector<8x640xf32>
    %8 = arith.addf %5, %7 : vector<8x640xf32>
    %c0_6 = arith.constant 0 : index
    %c0_7 = arith.constant 0 : index
    %9 = vector.load %arg14[%c0_6, %c0_7] : memref<8x640xf32, #tpu.memory_space<vmem>>, vector<8x640xf32>
    tpu.vector_store %arg14[%c0_6, %c0_7], %8 {strides = array<i32>} : memref<8x640xf32, #tpu.memory_space<vmem>>, vector<8x640xf32>,
    %c0_8 = arith.constant 0 : index
    %c0_9 = arith.constant 0 : index
    %10 = vector.load %arg5[%c0_8, %c0_9] : memref<128x640xf32, #tpu.memory_space<vmem>>, vector<128x640xf32>
    %c0_10 = arith.constant 0 : index
    %c0_11 = arith.constant 0 : index
    %11 = vector.load %arg7[%c0_10, %c0_11] : memref<128x128xf32, #tpu.memory_space<vmem>>, vector<128x128xf32>
    %c0_12 = arith.constant 0 : index
    %c0_13 = arith.constant 0 : index
    %12 = vector.load %arg8[%c0_12, %c0_13] : memref<1x128xf32, #tpu.memory_space<vmem>>, vector<1x128xf32>
    %c0_14 = arith.constant 0 : index
    %c0_15 = arith.constant 0 : index
    %13 = vector.load %arg9[%c0_14, %c0_15] : memref<128x128xf32, #tpu.memory_space<vmem>>, vector<128x128xf32>
    %c0_16 = arith.constant 0 : index
    %c0_17 = arith.constant 0 : index
    %14 = vector.load %arg12[%c0_16, %c0_17] : memref<1x128xf32, #tpu.memory_space<vmem>>, vector<1x128xf32>
    %c0_18 = arith.constant 0 : index
    %c0_19 = arith.constant 0 : index
    %15 = vector.load %arg13[%c0_18, %c0_19] : memref<1x128xf32, #tpu.memory_space<vmem>>, vector<1x128xf32>
    %c0_i32_20 = arith.constant 0 : i32
    %16 = arith.index_cast %c0_i32_20 : i32 to index
    %c0_21 = arith.constant 0 : index
    %17 = vector.load %arg14[%16, %c0_21] : memref<8x640xf32, #tpu.memory_space<vmem>>, vector<1x640xf32>
    %cst_22 = arith.constant dense<0.000000e+00> : vector<1x640xf32>
    %18 = tpu.matmul %14, %10, %cst_22 {dimension_numbers = #tpu.dot_dimension_numbers<[1], [0], [0], [1], [0, 0, 1, 1], [], []>} : vector<1x128xf32>, vector<128x640xf32>, vector<1x640xf32> -> vector<1x640xf32>
    %19 = arith.addf %17, %18 : vector<1x640xf32>
    %20 = vector.extract_strided_slice %19 {offsets = [0, 0], sizes = [1, 512], strides = [1, 1]} : vector<1x640xf32> to vector<1x512xf32>
    %21 = arith.negf %20 : vector<1x512xf32>
    %22 = math.exp %21 : vector<1x512xf32>
    %cst_23 = arith.constant 1.000000e+00 : f32
    %23 = vector.broadcast %cst_23 : f32 to vector<1x512xf32>
    %24 = arith.addf %23, %22 : vector<1x512xf32>
    %25 = arith.divf %23, %24 : vector<1x512xf32>
    %26 = vector.extract_strided_slice %25 {offsets = [0, 0], sizes = [1, 128], strides = [1, 1]} : vector<1x512xf32> to vector<1x128xf32>
    %27 = vector.extract_strided_slice %25 {offsets = [0, 128], sizes = [1, 128], strides = [1, 1]} : vector<1x512xf32> to vector<1x128xf32>
    %28 = vector.extract_strided_slice %25 {offsets = [0, 256], sizes = [1, 128], strides = [1, 1]} : vector<1x512xf32> to vector<1x128xf32>
    %29 = vector.extract_strided_slice %25 {offsets = [0, 384], sizes = [1, 128], strides = [1, 1]} : vector<1x512xf32> to vector<1x128xf32>
    %30 = vector.extract_strided_slice %19 {offsets = [0, 512], sizes = [1, 128], strides = [1, 1]} : vector<1x640xf32> to vector<1x128xf32>
    %31 = math.tanh %30 : vector<1x128xf32>
    %32 = arith.mulf %26, %15 : vector<1x128xf32>
    %33 = arith.mulf %27, %31 : vector<1x128xf32>
    %34 = arith.addf %32, %33 : vector<1x128xf32>
    %cst_24 = arith.constant dense<0.000000e+00> : vector<1x128xf32>
    %35 = tpu.matmul %34, %11, %cst_24 {dimension_numbers = #tpu.dot_dimension_numbers<[1], [0], [0], [1], [0, 0, 1, 1], [], []>} : vector<1x128xf32>, vector<128x128xf32>, vector<1x128xf32> -> vector<1x128xf32>
    %36 = arith.addf %35, %12 : vector<1x128xf32>
    %cst_25 = arith.constant dense<0xFF800000> : vector<1xf32>
    %37 = vector.multi_reduction <maximumf>, %36, %cst_25 [1] : vector<1x128xf32> to vector<1xf32>
    %38 = vector.shape_cast %37 : vector<1xf32> to vector<1x1xf32>
    %39 = vector.broadcast %38 : vector<1x1xf32> to vector<1x128xf32>
    %40 = arith.cmpf oge, %36, %39 : vector<1x128xf32>
    %41 = arith.extui %40 : vector<1x128xi1> to vector<1x128xi32>
    %42 = arith.sitofp %41 : vector<1x128xi32> to vector<1x128xf32>
    %cst_26 = arith.constant dense<0.000000e+00> : vector<1xf32>
    %43 = vector.multi_reduction <add>, %42, %cst_26 [1] : vector<1x128xf32> to vector<1xf32>
    %44 = vector.shape_cast %43 : vector<1xf32> to vector<1x1xf32>
    %cst_27 = arith.constant dense<0.000000e+00> : vector<1x128xf32>
    %45 = tpu.matmul %42, %13, %cst_27 {dimension_numbers = #tpu.dot_dimension_numbers<[1], [0], [0], [1], [0, 0, 1, 1], [], []>} : vector<1x128xf32>, vector<128x128xf32>, vector<1x128xf32> -> vector<1x128xf32>
    %46 = tpu.reciprocal %44 : vector<1x1xf32> -> vector<1x1xf32>
    %47 = vector.broadcast %46 : vector<1x1xf32> to vector<1x128xf32>
    %48 = arith.mulf %45, %47 : vector<1x128xf32>
    %49 = arith.mulf %29, %48 : vector<1x128xf32>
    %50 = arith.addf %34, %49 : vector<1x128xf32>
    %51 = math.tanh %50 : vector<1x128xf32>
    %52 = arith.mulf %28, %51 : vector<1x128xf32>
    %53 = arith.index_cast %c0_i32_20 : i32 to index
    %c0_28 = arith.constant 0 : index
    %54 = vector.load %arg15[%53, %c0_28] : memref<8x128xf32, #tpu.memory_space<vmem>>, vector<1x128xf32>
    tpu.vector_store %arg15[%53, %c0_28], %52 {strides = array<i32>} : memref<8x128xf32, #tpu.memory_space<vmem>>, vector<1x128xf32>,
    %c8_i32 = arith.constant 8 : i32
    %55 = arith.muli %arg0, %c8_i32 : i32
    %56 = arith.addi %55, %c0_i32_20 : i32
    %c8_i32_29 = arith.constant 8 : i32
    %57 = arith.cmpi slt, %56, %c8_i32_29 : i32
    %58 = arith.select %57, %52, %14 : vector<1x128xf32>
    %59 = arith.select %57, %50, %15 : vector<1x128xf32>
    %c1_i32 = arith.constant 1 : i32
    %60 = arith.index_cast %c1_i32 : i32 to index
    %c0_30 = arith.constant 0 : index
    %61 = vector.load %arg14[%60, %c0_30] : memref<8x640xf32, #tpu.memory_space<vmem>>, vector<1x640xf32>
    %cst_31 = arith.constant dense<0.000000e+00> : vector<1x640xf32>
    %62 = tpu.matmul %58, %10, %cst_31 {dimension_numbers = #tpu.dot_dimension_numbers<[1], [0], [0], [1], [0, 0, 1, 1], [], []>} : vector<1x128xf32>, vector<128x640xf32>, vector<1x640xf32> -> vector<1x640xf32>
    %63 = arith.addf %61, %62 : vector<1x640xf32>
    %64 = vector.extract_strided_slice %63 {offsets = [0, 0], sizes = [1, 512], strides = [1, 1]} : vector<1x640xf32> to vector<1x512xf32>
    %65 = arith.negf %64 : vector<1x512xf32>
    %66 = math.exp %65 : vector<1x512xf32>
    %cst_32 = arith.constant 1.000000e+00 : f32
    %67 = vector.broadcast %cst_32 : f32 to vector<1x512xf32>
    %68 = arith.addf %67, %66 : vector<1x512xf32>
    %69 = arith.divf %67, %68 : vector<1x512xf32>
    %70 = vector.extract_strided_slice %69 {offsets = [0, 0], sizes = [1, 128], strides = [1, 1]} : vector<1x512xf32> to vector<1x128xf32>
    %71 = vector.extract_strided_slice %69 {offsets = [0, 128], sizes = [1, 128], strides = [1, 1]} : vector<1x512xf32> to vector<1x128xf32>
    %72 = vector.extract_strided_slice %69 {offsets = [0, 256], sizes = [1, 128], strides = [1, 1]} : vector<1x512xf32> to vector<1x128xf32>
    %73 = vector.extract_strided_slice %69 {offsets = [0, 384], sizes = [1, 128], strides = [1, 1]} : vector<1x512xf32> to vector<1x128xf32>
    %74 = vector.extract_strided_slice %63 {offsets = [0, 512], sizes = [1, 128], strides = [1, 1]} : vector<1x640xf32> to vector<1x128xf32>
    %75 = math.tanh %74 : vector<1x128xf32>
    %76 = arith.mulf %70, %59 : vector<1x128xf32>
    %77 = arith.mulf %71, %75 : vector<1x128xf32>
    %78 = arith.addf %76, %77 : vector<1x128xf32>
    %cst_33 = arith.constant dense<0.000000e+00> : vector<1x128xf32>
    %79 = tpu.matmul %78, %11, %cst_33 {dimension_numbers = #tpu.dot_dimension_numbers<[1], [0], [0], [1], [0, 0, 1, 1], [], []>} : vector<1x128xf32>, vector<128x128xf32>, vector<1x128xf32> -> vector<1x128xf32>
    %80 = arith.addf %79, %12 : vector<1x128xf32>
    %cst_34 = arith.constant dense<0xFF800000> : vector<1xf32>
    %81 = vector.multi_reduction <maximumf>, %80, %cst_34 [1] : vector<1x128xf32> to vector<1xf32>
    %82 = vector.shape_cast %81 : vector<1xf32> to vector<1x1xf32>
    %83 = vector.broadcast %82 : vector<1x1xf32> to vector<1x128xf32>
    %84 = arith.cmpf oge, %80, %83 : vector<1x128xf32>
    %85 = arith.extui %84 : vector<1x128xi1> to vector<1x128xi32>
    %86 = arith.sitofp %85 : vector<1x128xi32> to vector<1x128xf32>
    %cst_35 = arith.constant dense<0.000000e+00> : vector<1xf32>
    %87 = vector.multi_reduction <add>, %86, %cst_35 [1] : vector<1x128xf32> to vector<1xf32>
    %88 = vector.shape_cast %87 : vector<1xf32> to vector<1x1xf32>
    %cst_36 = arith.constant dense<0.000000e+00> : vector<1x128xf32>
    %89 = tpu.matmul %86, %13, %cst_36 {dimension_numbers = #tpu.dot_dimension_numbers<[1], [0], [0], [1], [0, 0, 1, 1], [], []>} : vector<1x128xf32>, vector<128x128xf32>, vector<1x128xf32> -> vector<1x128xf32>
    %90 = tpu.reciprocal %88 : vector<1x1xf32> -> vector<1x1xf32>
    %91 = vector.broadcast %90 : vector<1x1xf32> to vector<1x128xf32>
    %92 = arith.mulf %89, %91 : vector<1x128xf32>
    %93 = arith.mulf %73, %92 : vector<1x128xf32>
    %94 = arith.addf %78, %93 : vector<1x128xf32>
    %95 = math.tanh %94 : vector<1x128xf32>
    %96 = arith.mulf %72, %95 : vector<1x128xf32>
    %97 = arith.index_cast %c1_i32 : i32 to index
    %c0_37 = arith.constant 0 : index
    %98 = vector.load %arg15[%97, %c0_37] : memref<8x128xf32, #tpu.memory_space<vmem>>, vector<1x128xf32>
    tpu.vector_store %arg15[%97, %c0_37], %96 {strides = array<i32>} : memref<8x128xf32, #tpu.memory_space<vmem>>, vector<1x128xf32>,
    %c8_i32_38 = arith.constant 8 : i32
    %99 = arith.muli %arg0, %c8_i32_38 : i32
    %100 = arith.addi %99, %c1_i32 : i32
    %c8_i32_39 = arith.constant 8 : i32
    %101 = arith.cmpi slt, %100, %c8_i32_39 : i32
    %102 = arith.select %101, %96, %58 : vector<1x128xf32>
    %103 = arith.select %101, %94, %59 : vector<1x128xf32>
    %c2_i32 = arith.constant 2 : i32
    %104 = arith.index_cast %c2_i32 : i32 to index
    %c0_40 = arith.constant 0 : index
    %105 = vector.load %arg14[%104, %c0_40] : memref<8x640xf32, #tpu.memory_space<vmem>>, vector<1x640xf32>
    %cst_41 = arith.constant dense<0.000000e+00> : vector<1x640xf32>
    %106 = tpu.matmul %102, %10, %cst_41 {dimension_numbers = #tpu.dot_dimension_numbers<[1], [0], [0], [1], [0, 0, 1, 1], [], []>} : vector<1x128xf32>, vector<128x640xf32>, vector<1x640xf32> -> vector<1x640xf32>
    %107 = arith.addf %105, %106 : vector<1x640xf32>
    %108 = vector.extract_strided_slice %107 {offsets = [0, 0], sizes = [1, 512], strides = [1, 1]} : vector<1x640xf32> to vector<1x512xf32>
    %109 = arith.negf %108 : vector<1x512xf32>
    %110 = math.exp %109 : vector<1x512xf32>
    %cst_42 = arith.constant 1.000000e+00 : f32
    %111 = vector.broadcast %cst_42 : f32 to vector<1x512xf32>
    %112 = arith.addf %111, %110 : vector<1x512xf32>
    %113 = arith.divf %111, %112 : vector<1x512xf32>
    %114 = vector.extract_strided_slice %113 {offsets = [0, 0], sizes = [1, 128], strides = [1, 1]} : vector<1x512xf32> to vector<1x128xf32>
    %115 = vector.extract_strided_slice %113 {offsets = [0, 128], sizes = [1, 128], strides = [1, 1]} : vector<1x512xf32> to vector<1x128xf32>
    %116 = vector.extract_strided_slice %113 {offsets = [0, 256], sizes = [1, 128], strides = [1, 1]} : vector<1x512xf32> to vector<1x128xf32>
    %117 = vector.extract_strided_slice %113 {offsets = [0, 384], sizes = [1, 128], strides = [1, 1]} : vector<1x512xf32> to vector<1x128xf32>
    %118 = vector.extract_strided_slice %107 {offsets = [0, 512], sizes = [1, 128], strides = [1, 1]} : vector<1x640xf32> to vector<1x128xf32>
    %119 = math.tanh %118 : vector<1x128xf32>
    %120 = arith.mulf %114, %103 : vector<1x128xf32>
    %121 = arith.mulf %115, %119 : vector<1x128xf32>
    %122 = arith.addf %120, %121 : vector<1x128xf32>
    %cst_43 = arith.constant dense<0.000000e+00> : vector<1x128xf32>
    %123 = tpu.matmul %122, %11, %cst_43 {dimension_numbers = #tpu.dot_dimension_numbers<[1], [0], [0], [1], [0, 0, 1, 1], [], []>} : vector<1x128xf32>, vector<128x128xf32>, vector<1x128xf32> -> vector<1x128xf32>
    %124 = arith.addf %123, %12 : vector<1x128xf32>
    %cst_44 = arith.constant dense<0xFF800000> : vector<1xf32>
    %125 = vector.multi_reduction <maximumf>, %124, %cst_44 [1] : vector<1x128xf32> to vector<1xf32>
    %126 = vector.shape_cast %125 : vector<1xf32> to vector<1x1xf32>
    %127 = vector.broadcast %126 : vector<1x1xf32> to vector<1x128xf32>
    %128 = arith.cmpf oge, %124, %127 : vector<1x128xf32>
    %129 = arith.extui %128 : vector<1x128xi1> to vector<1x128xi32>
    %130 = arith.sitofp %129 : vector<1x128xi32> to vector<1x128xf32>
    %cst_45 = arith.constant dense<0.000000e+00> : vector<1xf32>
    %131 = vector.multi_reduction <add>, %130, %cst_45 [1] : vector<1x128xf32> to vector<1xf32>
    %132 = vector.shape_cast %131 : vector<1xf32> to vector<1x1xf32>
    %cst_46 = arith.constant dense<0.000000e+00> : vector<1x128xf32>
    %133 = tpu.matmul %130, %13, %cst_46 {dimension_numbers = #tpu.dot_dimension_numbers<[1], [0], [0], [1], [0, 0, 1, 1], [], []>} : vector<1x128xf32>, vector<128x128xf32>, vector<1x128xf32> -> vector<1x128xf32>
    %134 = tpu.reciprocal %132 : vector<1x1xf32> -> vector<1x1xf32>
    %135 = vector.broadcast %134 : vector<1x1xf32> to vector<1x128xf32>
    %136 = arith.mulf %133, %135 : vector<1x128xf32>
    %137 = arith.mulf %117, %136 : vector<1x128xf32>
    %138 = arith.addf %122, %137 : vector<1x128xf32>
    %139 = math.tanh %138 : vector<1x128xf32>
    %140 = arith.mulf %116, %139 : vector<1x128xf32>
    %141 = arith.index_cast %c2_i32 : i32 to index
    %c0_47 = arith.constant 0 : index
    %142 = vector.load %arg15[%141, %c0_47] : memref<8x128xf32, #tpu.memory_space<vmem>>, vector<1x128xf32>
    tpu.vector_store %arg15[%141, %c0_47], %140 {strides = array<i32>} : memref<8x128xf32, #tpu.memory_space<vmem>>, vector<1x128xf32>,
    %c8_i32_48 = arith.constant 8 : i32
    %143 = arith.muli %arg0, %c8_i32_48 : i32
    %144 = arith.addi %143, %c2_i32 : i32
    %c8_i32_49 = arith.constant 8 : i32
    %145 = arith.cmpi slt, %144, %c8_i32_49 : i32
    %146 = arith.select %145, %140, %102 : vector<1x128xf32>
    %147 = arith.select %145, %138, %103 : vector<1x128xf32>
    %c3_i32 = arith.constant 3 : i32
    %148 = arith.index_cast %c3_i32 : i32 to index
    %c0_50 = arith.constant 0 : index
    %149 = vector.load %arg14[%148, %c0_50] : memref<8x640xf32, #tpu.memory_space<vmem>>, vector<1x640xf32>
    %cst_51 = arith.constant dense<0.000000e+00> : vector<1x640xf32>
    %150 = tpu.matmul %146, %10, %cst_51 {dimension_numbers = #tpu.dot_dimension_numbers<[1], [0], [0], [1], [0, 0, 1, 1], [], []>} : vector<1x128xf32>, vector<128x640xf32>, vector<1x640xf32> -> vector<1x640xf32>
    %151 = arith.addf %149, %150 : vector<1x640xf32>
    %152 = vector.extract_strided_slice %151 {offsets = [0, 0], sizes = [1, 512], strides = [1, 1]} : vector<1x640xf32> to vector<1x512xf32>
    %153 = arith.negf %152 : vector<1x512xf32>
    %154 = math.exp %153 : vector<1x512xf32>
    %cst_52 = arith.constant 1.000000e+00 : f32
    %155 = vector.broadcast %cst_52 : f32 to vector<1x512xf32>
    %156 = arith.addf %155, %154 : vector<1x512xf32>
    %157 = arith.divf %155, %156 : vector<1x512xf32>
    %158 = vector.extract_strided_slice %157 {offsets = [0, 0], sizes = [1, 128], strides = [1, 1]} : vector<1x512xf32> to vector<1x128xf32>
    %159 = vector.extract_strided_slice %157 {offsets = [0, 128], sizes = [1, 128], strides = [1, 1]} : vector<1x512xf32> to vector<1x128xf32>
    %160 = vector.extract_strided_slice %157 {offsets = [0, 256], sizes = [1, 128], strides = [1, 1]} : vector<1x512xf32> to vector<1x128xf32>
    %161 = vector.extract_strided_slice %157 {offsets = [0, 384], sizes = [1, 128], strides = [1, 1]} : vector<1x512xf32> to vector<1x128xf32>
    %162 = vector.extract_strided_slice %151 {offsets = [0, 512], sizes = [1, 128], strides = [1, 1]} : vector<1x640xf32> to vector<1x128xf32>
    %163 = math.tanh %162 : vector<1x128xf32>
    %164 = arith.mulf %158, %147 : vector<1x128xf32>
    %165 = arith.mulf %159, %163 : vector<1x128xf32>
    %166 = arith.addf %164, %165 : vector<1x128xf32>
    %cst_53 = arith.constant dense<0.000000e+00> : vector<1x128xf32>
    %167 = tpu.matmul %166, %11, %cst_53 {dimension_numbers = #tpu.dot_dimension_numbers<[1], [0], [0], [1], [0, 0, 1, 1], [], []>} : vector<1x128xf32>, vector<128x128xf32>, vector<1x128xf32> -> vector<1x128xf32>
    %168 = arith.addf %167, %12 : vector<1x128xf32>
    %cst_54 = arith.constant dense<0xFF800000> : vector<1xf32>
    %169 = vector.multi_reduction <maximumf>, %168, %cst_54 [1] : vector<1x128xf32> to vector<1xf32>
    %170 = vector.shape_cast %169 : vector<1xf32> to vector<1x1xf32>
    %171 = vector.broadcast %170 : vector<1x1xf32> to vector<1x128xf32>
    %172 = arith.cmpf oge, %168, %171 : vector<1x128xf32>
    %173 = arith.extui %172 : vector<1x128xi1> to vector<1x128xi32>
    %174 = arith.sitofp %173 : vector<1x128xi32> to vector<1x128xf32>
    %cst_55 = arith.constant dense<0.000000e+00> : vector<1xf32>
    %175 = vector.multi_reduction <add>, %174, %cst_55 [1] : vector<1x128xf32> to vector<1xf32>
    %176 = vector.shape_cast %175 : vector<1xf32> to vector<1x1xf32>
    %cst_56 = arith.constant dense<0.000000e+00> : vector<1x128xf32>
    %177 = tpu.matmul %174, %13, %cst_56 {dimension_numbers = #tpu.dot_dimension_numbers<[1], [0], [0], [1], [0, 0, 1, 1], [], []>} : vector<1x128xf32>, vector<128x128xf32>, vector<1x128xf32> -> vector<1x128xf32>
    %178 = tpu.reciprocal %176 : vector<1x1xf32> -> vector<1x1xf32>
    %179 = vector.broadcast %178 : vector<1x1xf32> to vector<1x128xf32>
    %180 = arith.mulf %177, %179 : vector<1x128xf32>
    %181 = arith.mulf %161, %180 : vector<1x128xf32>
    %182 = arith.addf %166, %181 : vector<1x128xf32>
    %183 = math.tanh %182 : vector<1x128xf32>
    %184 = arith.mulf %160, %183 : vector<1x128xf32>
    %185 = arith.index_cast %c3_i32 : i32 to index
    %c0_57 = arith.constant 0 : index
    %186 = vector.load %arg15[%185, %c0_57] : memref<8x128xf32, #tpu.memory_space<vmem>>, vector<1x128xf32>
    tpu.vector_store %arg15[%185, %c0_57], %184 {strides = array<i32>} : memref<8x128xf32, #tpu.memory_space<vmem>>, vector<1x128xf32>,
    %c8_i32_58 = arith.constant 8 : i32
    %187 = arith.muli %arg0, %c8_i32_58 : i32
    %188 = arith.addi %187, %c3_i32 : i32
    %c8_i32_59 = arith.constant 8 : i32
    %189 = arith.cmpi slt, %188, %c8_i32_59 : i32
    %190 = arith.select %189, %184, %146 : vector<1x128xf32>
    %191 = arith.select %189, %182, %147 : vector<1x128xf32>
    %c4_i32 = arith.constant 4 : i32
    %192 = arith.index_cast %c4_i32 : i32 to index
    %c0_60 = arith.constant 0 : index
    %193 = vector.load %arg14[%192, %c0_60] : memref<8x640xf32, #tpu.memory_space<vmem>>, vector<1x640xf32>
    %cst_61 = arith.constant dense<0.000000e+00> : vector<1x640xf32>
    %194 = tpu.matmul %190, %10, %cst_61 {dimension_numbers = #tpu.dot_dimension_numbers<[1], [0], [0], [1], [0, 0, 1, 1], [], []>} : vector<1x128xf32>, vector<128x640xf32>, vector<1x640xf32> -> vector<1x640xf32>
    %195 = arith.addf %193, %194 : vector<1x640xf32>
    %196 = vector.extract_strided_slice %195 {offsets = [0, 0], sizes = [1, 512], strides = [1, 1]} : vector<1x640xf32> to vector<1x512xf32>
    %197 = arith.negf %196 : vector<1x512xf32>
    %198 = math.exp %197 : vector<1x512xf32>
    %cst_62 = arith.constant 1.000000e+00 : f32
    %199 = vector.broadcast %cst_62 : f32 to vector<1x512xf32>
    %200 = arith.addf %199, %198 : vector<1x512xf32>
    %201 = arith.divf %199, %200 : vector<1x512xf32>
    %202 = vector.extract_strided_slice %201 {offsets = [0, 0], sizes = [1, 128], strides = [1, 1]} : vector<1x512xf32> to vector<1x128xf32>
    %203 = vector.extract_strided_slice %201 {offsets = [0, 128], sizes = [1, 128], strides = [1, 1]} : vector<1x512xf32> to vector<1x128xf32>
    %204 = vector.extract_strided_slice %201 {offsets = [0, 256], sizes = [1, 128], strides = [1, 1]} : vector<1x512xf32> to vector<1x128xf32>
    %205 = vector.extract_strided_slice %201 {offsets = [0, 384], sizes = [1, 128], strides = [1, 1]} : vector<1x512xf32> to vector<1x128xf32>
    %206 = vector.extract_strided_slice %195 {offsets = [0, 512], sizes = [1, 128], strides = [1, 1]} : vector<1x640xf32> to vector<1x128xf32>
    %207 = math.tanh %206 : vector<1x128xf32>
    %208 = arith.mulf %202, %191 : vector<1x128xf32>
    %209 = arith.mulf %203, %207 : vector<1x128xf32>
    %210 = arith.addf %208, %209 : vector<1x128xf32>
    %cst_63 = arith.constant dense<0.000000e+00> : vector<1x128xf32>
    %211 = tpu.matmul %210, %11, %cst_63 {dimension_numbers = #tpu.dot_dimension_numbers<[1], [0], [0], [1], [0, 0, 1, 1], [], []>} : vector<1x128xf32>, vector<128x128xf32>, vector<1x128xf32> -> vector<1x128xf32>
    %212 = arith.addf %211, %12 : vector<1x128xf32>
    %cst_64 = arith.constant dense<0xFF800000> : vector<1xf32>
    %213 = vector.multi_reduction <maximumf>, %212, %cst_64 [1] : vector<1x128xf32> to vector<1xf32>
    %214 = vector.shape_cast %213 : vector<1xf32> to vector<1x1xf32>
    %215 = vector.broadcast %214 : vector<1x1xf32> to vector<1x128xf32>
    %216 = arith.cmpf oge, %212, %215 : vector<1x128xf32>
    %217 = arith.extui %216 : vector<1x128xi1> to vector<1x128xi32>
    %218 = arith.sitofp %217 : vector<1x128xi32> to vector<1x128xf32>
    %cst_65 = arith.constant dense<0.000000e+00> : vector<1xf32>
    %219 = vector.multi_reduction <add>, %218, %cst_65 [1] : vector<1x128xf32> to vector<1xf32>
    %220 = vector.shape_cast %219 : vector<1xf32> to vector<1x1xf32>
    %cst_66 = arith.constant dense<0.000000e+00> : vector<1x128xf32>
    %221 = tpu.matmul %218, %13, %cst_66 {dimension_numbers = #tpu.dot_dimension_numbers<[1], [0], [0], [1], [0, 0, 1, 1], [], []>} : vector<1x128xf32>, vector<128x128xf32>, vector<1x128xf32> -> vector<1x128xf32>
    %222 = tpu.reciprocal %220 : vector<1x1xf32> -> vector<1x1xf32>
    %223 = vector.broadcast %222 : vector<1x1xf32> to vector<1x128xf32>
    %224 = arith.mulf %221, %223 : vector<1x128xf32>
    %225 = arith.mulf %205, %224 : vector<1x128xf32>
    %226 = arith.addf %210, %225 : vector<1x128xf32>
    %227 = math.tanh %226 : vector<1x128xf32>
    %228 = arith.mulf %204, %227 : vector<1x128xf32>
    %229 = arith.index_cast %c4_i32 : i32 to index
    %c0_67 = arith.constant 0 : index
    %230 = vector.load %arg15[%229, %c0_67] : memref<8x128xf32, #tpu.memory_space<vmem>>, vector<1x128xf32>
    tpu.vector_store %arg15[%229, %c0_67], %228 {strides = array<i32>} : memref<8x128xf32, #tpu.memory_space<vmem>>, vector<1x128xf32>,
    %c8_i32_68 = arith.constant 8 : i32
    %231 = arith.muli %arg0, %c8_i32_68 : i32
    %232 = arith.addi %231, %c4_i32 : i32
    %c8_i32_69 = arith.constant 8 : i32
    %233 = arith.cmpi slt, %232, %c8_i32_69 : i32
    %234 = arith.select %233, %228, %190 : vector<1x128xf32>
    %235 = arith.select %233, %226, %191 : vector<1x128xf32>
    %c5_i32 = arith.constant 5 : i32
    %236 = arith.index_cast %c5_i32 : i32 to index
    %c0_70 = arith.constant 0 : index
    %237 = vector.load %arg14[%236, %c0_70] : memref<8x640xf32, #tpu.memory_space<vmem>>, vector<1x640xf32>
    %cst_71 = arith.constant dense<0.000000e+00> : vector<1x640xf32>
    %238 = tpu.matmul %234, %10, %cst_71 {dimension_numbers = #tpu.dot_dimension_numbers<[1], [0], [0], [1], [0, 0, 1, 1], [], []>} : vector<1x128xf32>, vector<128x640xf32>, vector<1x640xf32> -> vector<1x640xf32>
    %239 = arith.addf %237, %238 : vector<1x640xf32>
    %240 = vector.extract_strided_slice %239 {offsets = [0, 0], sizes = [1, 512], strides = [1, 1]} : vector<1x640xf32> to vector<1x512xf32>
    %241 = arith.negf %240 : vector<1x512xf32>
    %242 = math.exp %241 : vector<1x512xf32>
    %cst_72 = arith.constant 1.000000e+00 : f32
    %243 = vector.broadcast %cst_72 : f32 to vector<1x512xf32>
    %244 = arith.addf %243, %242 : vector<1x512xf32>
    %245 = arith.divf %243, %244 : vector<1x512xf32>
    %246 = vector.extract_strided_slice %245 {offsets = [0, 0], sizes = [1, 128], strides = [1, 1]} : vector<1x512xf32> to vector<1x128xf32>
    %247 = vector.extract_strided_slice %245 {offsets = [0, 128], sizes = [1, 128], strides = [1, 1]} : vector<1x512xf32> to vector<1x128xf32>
    %248 = vector.extract_strided_slice %245 {offsets = [0, 256], sizes = [1, 128], strides = [1, 1]} : vector<1x512xf32> to vector<1x128xf32>
    %249 = vector.extract_strided_slice %245 {offsets = [0, 384], sizes = [1, 128], strides = [1, 1]} : vector<1x512xf32> to vector<1x128xf32>
    %250 = vector.extract_strided_slice %239 {offsets = [0, 512], sizes = [1, 128], strides = [1, 1]} : vector<1x640xf32> to vector<1x128xf32>
    %251 = math.tanh %250 : vector<1x128xf32>
    %252 = arith.mulf %246, %235 : vector<1x128xf32>
    %253 = arith.mulf %247, %251 : vector<1x128xf32>
    %254 = arith.addf %252, %253 : vector<1x128xf32>
    %cst_73 = arith.constant dense<0.000000e+00> : vector<1x128xf32>
    %255 = tpu.matmul %254, %11, %cst_73 {dimension_numbers = #tpu.dot_dimension_numbers<[1], [0], [0], [1], [0, 0, 1, 1], [], []>} : vector<1x128xf32>, vector<128x128xf32>, vector<1x128xf32> -> vector<1x128xf32>
    %256 = arith.addf %255, %12 : vector<1x128xf32>
    %cst_74 = arith.constant dense<0xFF800000> : vector<1xf32>
    %257 = vector.multi_reduction <maximumf>, %256, %cst_74 [1] : vector<1x128xf32> to vector<1xf32>
    %258 = vector.shape_cast %257 : vector<1xf32> to vector<1x1xf32>
    %259 = vector.broadcast %258 : vector<1x1xf32> to vector<1x128xf32>
    %260 = arith.cmpf oge, %256, %259 : vector<1x128xf32>
    %261 = arith.extui %260 : vector<1x128xi1> to vector<1x128xi32>
    %262 = arith.sitofp %261 : vector<1x128xi32> to vector<1x128xf32>
    %cst_75 = arith.constant dense<0.000000e+00> : vector<1xf32>
    %263 = vector.multi_reduction <add>, %262, %cst_75 [1] : vector<1x128xf32> to vector<1xf32>
    %264 = vector.shape_cast %263 : vector<1xf32> to vector<1x1xf32>
    %cst_76 = arith.constant dense<0.000000e+00> : vector<1x128xf32>
    %265 = tpu.matmul %262, %13, %cst_76 {dimension_numbers = #tpu.dot_dimension_numbers<[1], [0], [0], [1], [0, 0, 1, 1], [], []>} : vector<1x128xf32>, vector<128x128xf32>, vector<1x128xf32> -> vector<1x128xf32>
    %266 = tpu.reciprocal %264 : vector<1x1xf32> -> vector<1x1xf32>
    %267 = vector.broadcast %266 : vector<1x1xf32> to vector<1x128xf32>
    %268 = arith.mulf %265, %267 : vector<1x128xf32>
    %269 = arith.mulf %249, %268 : vector<1x128xf32>
    %270 = arith.addf %254, %269 : vector<1x128xf32>
    %271 = math.tanh %270 : vector<1x128xf32>
    %272 = arith.mulf %248, %271 : vector<1x128xf32>
    %273 = arith.index_cast %c5_i32 : i32 to index
    %c0_77 = arith.constant 0 : index
    %274 = vector.load %arg15[%273, %c0_77] : memref<8x128xf32, #tpu.memory_space<vmem>>, vector<1x128xf32>
    tpu.vector_store %arg15[%273, %c0_77], %272 {strides = array<i32>} : memref<8x128xf32, #tpu.memory_space<vmem>>, vector<1x128xf32>,
    %c8_i32_78 = arith.constant 8 : i32
    %275 = arith.muli %arg0, %c8_i32_78 : i32
    %276 = arith.addi %275, %c5_i32 : i32
    %c8_i32_79 = arith.constant 8 : i32
    %277 = arith.cmpi slt, %276, %c8_i32_79 : i32
    %278 = arith.select %277, %272, %234 : vector<1x128xf32>
    %279 = arith.select %277, %270, %235 : vector<1x128xf32>
    %c6_i32 = arith.constant 6 : i32
    %280 = arith.index_cast %c6_i32 : i32 to index
    %c0_80 = arith.constant 0 : index
    %281 = vector.load %arg14[%280, %c0_80] : memref<8x640xf32, #tpu.memory_space<vmem>>, vector<1x640xf32>
    %cst_81 = arith.constant dense<0.000000e+00> : vector<1x640xf32>
    %282 = tpu.matmul %278, %10, %cst_81 {dimension_numbers = #tpu.dot_dimension_numbers<[1], [0], [0], [1], [0, 0, 1, 1], [], []>} : vector<1x128xf32>, vector<128x640xf32>, vector<1x640xf32> -> vector<1x640xf32>
    %283 = arith.addf %281, %282 : vector<1x640xf32>
    %284 = vector.extract_strided_slice %283 {offsets = [0, 0], sizes = [1, 512], strides = [1, 1]} : vector<1x640xf32> to vector<1x512xf32>
    %285 = arith.negf %284 : vector<1x512xf32>
    %286 = math.exp %285 : vector<1x512xf32>
    %cst_82 = arith.constant 1.000000e+00 : f32
    %287 = vector.broadcast %cst_82 : f32 to vector<1x512xf32>
    %288 = arith.addf %287, %286 : vector<1x512xf32>
    %289 = arith.divf %287, %288 : vector<1x512xf32>
    %290 = vector.extract_strided_slice %289 {offsets = [0, 0], sizes = [1, 128], strides = [1, 1]} : vector<1x512xf32> to vector<1x128xf32>
    %291 = vector.extract_strided_slice %289 {offsets = [0, 128], sizes = [1, 128], strides = [1, 1]} : vector<1x512xf32> to vector<1x128xf32>
    %292 = vector.extract_strided_slice %289 {offsets = [0, 256], sizes = [1, 128], strides = [1, 1]} : vector<1x512xf32> to vector<1x128xf32>
    %293 = vector.extract_strided_slice %289 {offsets = [0, 384], sizes = [1, 128], strides = [1, 1]} : vector<1x512xf32> to vector<1x128xf32>
    %294 = vector.extract_strided_slice %283 {offsets = [0, 512], sizes = [1, 128], strides = [1, 1]} : vector<1x640xf32> to vector<1x128xf32>
    %295 = math.tanh %294 : vector<1x128xf32>
    %296 = arith.mulf %290, %279 : vector<1x128xf32>
    %297 = arith.mulf %291, %295 : vector<1x128xf32>
    %298 = arith.addf %296, %297 : vector<1x128xf32>
    %cst_83 = arith.constant dense<0.000000e+00> : vector<1x128xf32>
    %299 = tpu.matmul %298, %11, %cst_83 {dimension_numbers = #tpu.dot_dimension_numbers<[1], [0], [0], [1], [0, 0, 1, 1], [], []>} : vector<1x128xf32>, vector<128x128xf32>, vector<1x128xf32> -> vector<1x128xf32>
    %300 = arith.addf %299, %12 : vector<1x128xf32>
    %cst_84 = arith.constant dense<0xFF800000> : vector<1xf32>
    %301 = vector.multi_reduction <maximumf>, %300, %cst_84 [1] : vector<1x128xf32> to vector<1xf32>
    %302 = vector.shape_cast %301 : vector<1xf32> to vector<1x1xf32>
    %303 = vector.broadcast %302 : vector<1x1xf32> to vector<1x128xf32>
    %304 = arith.cmpf oge, %300, %303 : vector<1x128xf32>
    %305 = arith.extui %304 : vector<1x128xi1> to vector<1x128xi32>
    %306 = arith.sitofp %305 : vector<1x128xi32> to vector<1x128xf32>
    %cst_85 = arith.constant dense<0.000000e+00> : vector<1xf32>
    %307 = vector.multi_reduction <add>, %306, %cst_85 [1] : vector<1x128xf32> to vector<1xf32>
    %308 = vector.shape_cast %307 : vector<1xf32> to vector<1x1xf32>
    %cst_86 = arith.constant dense<0.000000e+00> : vector<1x128xf32>
    %309 = tpu.matmul %306, %13, %cst_86 {dimension_numbers = #tpu.dot_dimension_numbers<[1], [0], [0], [1], [0, 0, 1, 1], [], []>} : vector<1x128xf32>, vector<128x128xf32>, vector<1x128xf32> -> vector<1x128xf32>
    %310 = tpu.reciprocal %308 : vector<1x1xf32> -> vector<1x1xf32>
    %311 = vector.broadcast %310 : vector<1x1xf32> to vector<1x128xf32>
    %312 = arith.mulf %309, %311 : vector<1x128xf32>
    %313 = arith.mulf %293, %312 : vector<1x128xf32>
    %314 = arith.addf %298, %313 : vector<1x128xf32>
    %315 = math.tanh %314 : vector<1x128xf32>
    %316 = arith.mulf %292, %315 : vector<1x128xf32>
    %317 = arith.index_cast %c6_i32 : i32 to index
    %c0_87 = arith.constant 0 : index
    %318 = vector.load %arg15[%317, %c0_87] : memref<8x128xf32, #tpu.memory_space<vmem>>, vector<1x128xf32>
    tpu.vector_store %arg15[%317, %c0_87], %316 {strides = array<i32>} : memref<8x128xf32, #tpu.memory_space<vmem>>, vector<1x128xf32>,
    %c8_i32_88 = arith.constant 8 : i32
    %319 = arith.muli %arg0, %c8_i32_88 : i32
    %320 = arith.addi %319, %c6_i32 : i32
    %c8_i32_89 = arith.constant 8 : i32
    %321 = arith.cmpi slt, %320, %c8_i32_89 : i32
    %322 = arith.select %321, %316, %278 : vector<1x128xf32>
    %323 = arith.select %321, %314, %279 : vector<1x128xf32>
    %c7_i32 = arith.constant 7 : i32
    %324 = arith.index_cast %c7_i32 : i32 to index
    %c0_90 = arith.constant 0 : index
    %325 = vector.load %arg14[%324, %c0_90] : memref<8x640xf32, #tpu.memory_space<vmem>>, vector<1x640xf32>
    %cst_91 = arith.constant dense<0.000000e+00> : vector<1x640xf32>
    %326 = tpu.matmul %322, %10, %cst_91 {dimension_numbers = #tpu.dot_dimension_numbers<[1], [0], [0], [1], [0, 0, 1, 1], [], []>} : vector<1x128xf32>, vector<128x640xf32>, vector<1x640xf32> -> vector<1x640xf32>
    %327 = arith.addf %325, %326 : vector<1x640xf32>
    %328 = vector.extract_strided_slice %327 {offsets = [0, 0], sizes = [1, 512], strides = [1, 1]} : vector<1x640xf32> to vector<1x512xf32>
    %329 = arith.negf %328 : vector<1x512xf32>
    %330 = math.exp %329 : vector<1x512xf32>
    %cst_92 = arith.constant 1.000000e+00 : f32
    %331 = vector.broadcast %cst_92 : f32 to vector<1x512xf32>
    %332 = arith.addf %331, %330 : vector<1x512xf32>
    %333 = arith.divf %331, %332 : vector<1x512xf32>
    %334 = vector.extract_strided_slice %333 {offsets = [0, 0], sizes = [1, 128], strides = [1, 1]} : vector<1x512xf32> to vector<1x128xf32>
    %335 = vector.extract_strided_slice %333 {offsets = [0, 128], sizes = [1, 128], strides = [1, 1]} : vector<1x512xf32> to vector<1x128xf32>
    %336 = vector.extract_strided_slice %333 {offsets = [0, 256], sizes = [1, 128], strides = [1, 1]} : vector<1x512xf32> to vector<1x128xf32>
    %337 = vector.extract_strided_slice %333 {offsets = [0, 384], sizes = [1, 128], strides = [1, 1]} : vector<1x512xf32> to vector<1x128xf32>
    %338 = vector.extract_strided_slice %327 {offsets = [0, 512], sizes = [1, 128], strides = [1, 1]} : vector<1x640xf32> to vector<1x128xf32>
    %339 = math.tanh %338 : vector<1x128xf32>
    %340 = arith.mulf %334, %323 : vector<1x128xf32>
    %341 = arith.mulf %335, %339 : vector<1x128xf32>
    %342 = arith.addf %340, %341 : vector<1x128xf32>
    %cst_93 = arith.constant dense<0.000000e+00> : vector<1x128xf32>
    %343 = tpu.matmul %342, %11, %cst_93 {dimension_numbers = #tpu.dot_dimension_numbers<[1], [0], [0], [1], [0, 0, 1, 1], [], []>} : vector<1x128xf32>, vector<128x128xf32>, vector<1x128xf32> -> vector<1x128xf32>
    %344 = arith.addf %343, %12 : vector<1x128xf32>
    %cst_94 = arith.constant dense<0xFF800000> : vector<1xf32>
    %345 = vector.multi_reduction <maximumf>, %344, %cst_94 [1] : vector<1x128xf32> to vector<1xf32>
    %346 = vector.shape_cast %345 : vector<1xf32> to vector<1x1xf32>
    %347 = vector.broadcast %346 : vector<1x1xf32> to vector<1x128xf32>
    %348 = arith.cmpf oge, %344, %347 : vector<1x128xf32>
    %349 = arith.extui %348 : vector<1x128xi1> to vector<1x128xi32>
    %350 = arith.sitofp %349 : vector<1x128xi32> to vector<1x128xf32>
    %cst_95 = arith.constant dense<0.000000e+00> : vector<1xf32>
    %351 = vector.multi_reduction <add>, %350, %cst_95 [1] : vector<1x128xf32> to vector<1xf32>
    %352 = vector.shape_cast %351 : vector<1xf32> to vector<1x1xf32>
    %cst_96 = arith.constant dense<0.000000e+00> : vector<1x128xf32>
    %353 = tpu.matmul %350, %13, %cst_96 {dimension_numbers = #tpu.dot_dimension_numbers<[1], [0], [0], [1], [0, 0, 1, 1], [], []>} : vector<1x128xf32>, vector<128x128xf32>, vector<1x128xf32> -> vector<1x128xf32>
    %354 = tpu.reciprocal %352 : vector<1x1xf32> -> vector<1x1xf32>
    %355 = vector.broadcast %354 : vector<1x1xf32> to vector<1x128xf32>
    %356 = arith.mulf %353, %355 : vector<1x128xf32>
    %357 = arith.mulf %337, %356 : vector<1x128xf32>
    %358 = arith.addf %342, %357 : vector<1x128xf32>
    %359 = math.tanh %358 : vector<1x128xf32>
    %360 = arith.mulf %336, %359 : vector<1x128xf32>
    %361 = arith.index_cast %c7_i32 : i32 to index
    %c0_97 = arith.constant 0 : index
    %362 = vector.load %arg15[%361, %c0_97] : memref<8x128xf32, #tpu.memory_space<vmem>>, vector<1x128xf32>
    tpu.vector_store %arg15[%361, %c0_97], %360 {strides = array<i32>} : memref<8x128xf32, #tpu.memory_space<vmem>>, vector<1x128xf32>,
    %c8_i32_98 = arith.constant 8 : i32
    %363 = arith.muli %arg0, %c8_i32_98 : i32
    %364 = arith.addi %363, %c7_i32 : i32
    %c8_i32_99 = arith.constant 8 : i32
    %365 = arith.cmpi slt, %364, %c8_i32_99 : i32
    %366 = arith.select %365, %360, %322 : vector<1x128xf32>
    %367 = arith.select %365, %358, %323 : vector<1x128xf32>
    %c8_i32_100 = arith.constant 8 : i32
    %c0_101 = arith.constant 0 : index
    %c0_102 = arith.constant 0 : index
    %368 = vector.load %arg12[%c0_101, %c0_102] : memref<1x128xf32, #tpu.memory_space<vmem>>, vector<1x128xf32>
    tpu.vector_store %arg12[%c0_101, %c0_102], %366 {strides = array<i32>} : memref<1x128xf32, #tpu.memory_space<vmem>>, vector<1x128xf32>,
    %c0_103 = arith.constant 0 : index
    %c0_104 = arith.constant 0 : index
    %369 = vector.load %arg13[%c0_103, %c0_104] : memref<1x128xf32, #tpu.memory_space<vmem>>, vector<1x128xf32>
    tpu.vector_store %arg13[%c0_103, %c0_104], %367 {strides = array<i32>} : memref<1x128xf32, #tpu.memory_space<vmem>>, vector<1x128xf32>,
    %c0_105 = arith.constant 0 : index
    %c0_106 = arith.constant 0 : index
    %370 = vector.load %arg15[%c0_105, %c0_106] : memref<8x128xf32, #tpu.memory_space<vmem>>, vector<8x128xf32>
    %c0_107 = arith.constant 0 : index
    %c0_108 = arith.constant 0 : index
    %371 = vector.load %arg10[%c0_107, %c0_108] : memref<128x128xf32, #tpu.memory_space<vmem>>, vector<128x128xf32>
    %cst_109 = arith.constant dense<0.000000e+00> : vector<8x128xf32>
    %372 = tpu.matmul %370, %371, %cst_109 {dimension_numbers = #tpu.dot_dimension_numbers<[1], [0], [0], [1], [0, 0, 1, 1], [], []>} : vector<8x128xf32>, vector<128x128xf32>, vector<8x128xf32> -> vector<8x128xf32>
    %c0_110 = arith.constant 0 : index
    %c0_111 = arith.constant 0 : index
    %373 = vector.load %arg11[%c0_110, %c0_111] : memref<8x128xf32, #tpu.memory_space<vmem>>, vector<8x128xf32>
    tpu.vector_store %arg11[%c0_110, %c0_111], %372 {strides = array<i32>} : memref<8x128xf32, #tpu.memory_space<vmem>>, vector<8x128xf32>,
    return
  }
  func.func @transform_0(%arg0: i32) -> (i32, i32) {
    %c0_i32 = arith.constant 0 : i32
    %c0_i32_0 = arith.constant 0 : i32
    return %arg0, %c0_i32 : i32, i32
  }
  func.func @transform_1(%arg0: i32) -> (i32, i32) {
    %c0_i32 = arith.constant 0 : i32
    %c0_i32_0 = arith.constant 0 : i32
    %c0_i32_1 = arith.constant 0 : i32
    return %c0_i32, %c0_i32_0 : i32, i32
  }
  func.func @transform_2(%arg0: i32) -> (i32, i32) {
    %c0_i32 = arith.constant 0 : i32
    %c0_i32_0 = arith.constant 0 : i32
    %c0_i32_1 = arith.constant 0 : i32
    return %c0_i32, %c0_i32_0 : i32, i32
  }
  func.func @transform_3(%arg0: i32) -> (i32, i32) {
    %c0_i32 = arith.constant 0 : i32
    %c0_i32_0 = arith.constant 0 : i32
    %c0_i32_1 = arith.constant 0 : i32
    return %c0_i32, %c0_i32_0 : i32, i32
  }
  func.func @transform_4(%arg0: i32) -> (i32, i32) {
    %c0_i32 = arith.constant 0 : i32
    %c0_i32_0 = arith.constant 0 : i32
    %c0_i32_1 = arith.constant 0 : i32
    return %c0_i32, %c0_i32_0 : i32, i32
  }
  func.func @transform_5(%arg0: i32) -> (i32, i32) {
    %c0_i32 = arith.constant 0 : i32
    %c0_i32_0 = arith.constant 0 : i32
    %c0_i32_1 = arith.constant 0 : i32
    return %c0_i32, %c0_i32_0 : i32, i32
  }
  func.func @transform_6(%arg0: i32) -> (i32, i32) {
    %c0_i32 = arith.constant 0 : i32
    %c0_i32_0 = arith.constant 0 : i32
    %c0_i32_1 = arith.constant 0 : i32
    return %c0_i32, %c0_i32_0 : i32, i32
  }
  func.func @transform_7(%arg0: i32) -> (i32, i32) {
    %c0_i32 = arith.constant 0 : i32
    %c0_i32_0 = arith.constant 0 : i32
    %c0_i32_1 = arith.constant 0 : i32
    return %c0_i32, %c0_i32_0 : i32, i32
  }
  func.func @transform_8(%arg0: i32) -> (i32, i32) {
    %c0_i32 = arith.constant 0 : i32
    %c0_i32_0 = arith.constant 0 : i32
    %c0_i32_1 = arith.constant 0 : i32
    return %c0_i32, %c0_i32_0 : i32, i32
  }
  func.func @transform_9(%arg0: i32) -> (i32, i32) {
    %c0_i32 = arith.constant 0 : i32
    %c0_i32_0 = arith.constant 0 : i32
    %c0_i32_1 = arith.constant 0 : i32
    return %c0_i32, %c0_i32_0 : i32, i32
  }
  func.func @transform_10(%arg0: i32) -> (i32, i32) {
    %c0_i32 = arith.constant 0 : i32
    %c0_i32_0 = arith.constant 0 : i32
    return %arg0, %c0_i32 : i32, i32
  }
  func.func @transform_11(%arg0: i32) -> (i32, i32) {
    %c0_i32 = arith.constant 0 : i32
    %c0_i32_0 = arith.constant 0 : i32
    %c0_i32_1 = arith.constant 0 : i32
    return %c0_i32, %c0_i32_0 : i32, i32
  }
  func.func @transform_12(%arg0: i32) -> (i32, i32) {
    %c0_i32 = arith.constant 0 : i32
    %c0_i32_0 = arith.constant 0 : i32
    %c0_i32_1 = arith.constant 0 : i32
    return %c0_i32, %c0_i32_0 : i32, i32
  }
}

</mosaic_0001>

<llo_original>
// kernel: tpu_custom_call.1
$region0: #{tpu_custom_call.1}
  #allocation0 [shape = 'u32[]', space=smem, size = 0x4, offset = 0x4, fixed_abs, tag = 'smem constant byte address 0x4 - core index']
  #allocation1 [shape = 'u32[144,128]{1,0:T(1,128)}', space=vmem, size = 0x12000, scoped, tag = 'internal scratch']
  #allocation2 [shape = 'f32[8,640]{1,0:T(8,128)}', space=vmem, size = 0x5000, scoped, tag = 'scratch operand']
  #allocation3 [shape = 'f32[8,128]{1,0:T(8,128)}', space=vmem, size = 0x1000, scoped, tag = 'scratch operand']
  %s0 = inlined_call_operand.hbm [shape: f32[8,128], index: 0, kind: input, shape index: {}]
  %s1 = inlined_call_operand.vmem [shape: f32[1,128], index: 1, kind: input, shape index: {}]
  %s2 = inlined_call_operand.vmem [shape: f32[1,128], index: 2, kind: input, shape index: {}]
  %s3 = inlined_call_operand.hbm [shape: f32[128,640], index: 3, kind: input, shape index: {}]
  %s4 = inlined_call_operand.hbm [shape: f32[128,640], index: 4, kind: input, shape index: {}]
  %s5 = inlined_call_operand.vmem [shape: f32[1,640], index: 5, kind: input, shape index: {}]
  %s6 = inlined_call_operand.hbm [shape: f32[128,128], index: 6, kind: input, shape index: {}]
  %s7 = inlined_call_operand.vmem [shape: f32[1,128], index: 7, kind: input, shape index: {}]
  %s8 = inlined_call_operand.hbm [shape: f32[128,128], index: 8, kind: input, shape index: {}]
  %s9 = inlined_call_operand.hbm [shape: f32[128,128], index: 9, kind: input, shape index: {}]
  %s10 = inlined_call_operand.hbm [shape: f32[8,128], index: 10, kind: output, shape index: {0}]
  %s11 = inlined_call_operand.hbm [shape: f32[1,128], index: 11, kind: output, shape index: {1}]
  %s12 = inlined_call_operand.hbm [shape: f32[1,128], index: 12, kind: output, shape index: {2}]
  %13 = xla_tuple %s10, %s11, %s12
  %s14 = sld [smem:[#allocation0]]
  $region94: #{tpu_custom_call.1} parent=0
    _
  %s16 = ssub.s32 1, %s14
  %s17 = scalar_select 0, %s16, %s14
  $region1: #{tpu_custom_call.1} parent=0
    #allocation4 [shape = 'u8[4096]{0}', space=vmem, size = 0x1000, scoped, tag = 'input window, operand 0, single buffered']
    #allocation5 [shape = 's32[1]{0}', space=sflag, size = 0x4, scoped, tag = 'scoped memory for tpu_custom_call.1']
    #allocation6 [shape = 's32[1]{0}', space=sflag, size = 0x4, scoped, tag = 'scoped memory for tpu_custom_call.1']
    #allocation7 [shape = 'u8[327680]{0}', space=vmem, size = 0x50000, scoped, tag = 'input window, operand 3, single buffered']
    #allocation8 [shape = 's32[1]{0}', space=sflag, size = 0x4, scoped, tag = 'scoped memory for tpu_custom_call.1']
    #allocation9 [shape = 'u8[327680]{0}', space=vmem, size = 0x50000, scoped, tag = 'input window, operand 4, single buffered']
    #allocation10 [shape = 'u8[65536]{0}', space=vmem, size = 0x10000, scoped, tag = 'input window, operand 6, single buffered']
    #allocation11 [shape = 's32[1]{0}', space=sflag, size = 0x4, scoped, tag = 'scoped memory for tpu_custom_call.1']
    #allocation12 [shape = 'u8[65536]{0}', space=vmem, size = 0x10000, scoped, tag = 'input window, operand 8, single buffered']
    #allocation13 [shape = 'u8[65536]{0}', space=vmem, size = 0x10000, scoped, tag = 'input window, operand 9, single buffered']
    #allocation14 [shape = 's32[1]{0}', space=sflag, size = 0x4, scoped, tag = 'scoped memory for tpu_custom_call.1']
    #allocation15 [shape = 'u8[4096]{0}', space=vmem, size = 0x1000, scoped, tag = 'output window, operand 0, single buffered']
    #allocation16 [shape = 'u8[512]{0}', space=vmem, size = 0x400, scoped, tag = 'output window, operand 1, single buffered']
    #allocation17 [shape = 's32[1]{0}', space=sflag, size = 0x4, scoped, tag = 'scoped memory for tpu_custom_call.1']
    #allocation18 [shape = 'u8[512]{0}', space=vmem, size = 0x400, scoped, tag = 'output window, operand 2, single buffered']
    %18 = vsyncpa [#allocation5], 0
    %19 = vsyncpa [#allocation8], 0
    %20 = vsyncpa [#allocation11], 0
    %21 = vsyncpa [#allocation14], 0
    %22 = vsyncpa [#allocation6], 0
    %23 = vsyncpa [#allocation17], 0
    // Predicated region
    $region2: #{tpu_custom_call.1} parent=1 // pred_check
      _
    $region3: #{tpu_custom_call.1} parent=1 // pred_check_branch
      %25 = sbr.rel (0) target = $region5
    $region4: #{tpu_custom_call.1} parent=1 // pred_region
      %s27 = ssub.s32 128, 128
      %28 = vsyncadd [#allocation5], %s27
      %s30 = sshll.u32 [#allocation4], 4
      %s31 = int_to_ptr.vmem [resolvable:$true] %s30
      %33 = dma.hbm_to_vmem [thread:$0]  %s0, 128, %s31, [#allocation5]
    $region5: #{tpu_custom_call.1} parent=1 // pred_fallthru
      _
    // Predicated region
    $region6: #{tpu_custom_call.1} parent=1 // pred_check
      _
    $region7: #{tpu_custom_call.1} parent=1 // pred_check_branch
      %35 = sbr.rel (0) target = $region9
    $region8: #{tpu_custom_call.1} parent=1 // pred_region
      _
    $region9: #{tpu_custom_call.1} parent=1 // pred_fallthru
      _
    // Predicated region
    $region10: #{tpu_custom_call.1} parent=1 // pred_check
      _
    $region11: #{tpu_custom_call.1} parent=1 // pred_check_branch
      %37 = sbr.rel (0) target = $region13
    $region12: #{tpu_custom_call.1} parent=1 // pred_region
      _
    $region13: #{tpu_custom_call.1} parent=1 // pred_fallthru
      _
    // Predicated region
    $region14: #{tpu_custom_call.1} parent=1 // pred_check
      _
    $region15: #{tpu_custom_call.1} parent=1 // pred_check_branch
      %39 = sbr.rel (0) target = $region17
    $region16: #{tpu_custom_call.1} parent=1 // pred_region
      %s41 = ssub.s32 10240, 10240
      %42 = vsyncadd [#allocation8], %s41
      %s43 = sshll.u32 [#allocation7], 4
      %s44 = int_to_ptr.vmem [resolvable:$true] %s43
      %49 = dma.hbm_to_vmem [thread:$0]  %s3, 10240, %s44, [#allocation8], 640, 640, 40
    $region17: #{tpu_custom_call.1} parent=1 // pred_fallthru
      _
    // Predicated region
    $region18: #{tpu_custom_call.1} parent=1 // pred_check
      _
    $region19: #{tpu_custom_call.1} parent=1 // pred_check_branch
      %51 = sbr.rel (0) target = $region21
    $region20: #{tpu_custom_call.1} parent=1 // pred_region
      %s53 = ssub.s32 10240, 10240
      %54 = vsyncadd [#allocation8], %s53
      %s55 = sshll.u32 [#allocation9], 4
      %s56 = int_to_ptr.vmem [resolvable:$true] %s55
      %61 = dma.hbm_to_vmem [thread:$0]  %s4, 10240, %s56, [#allocation8], 640, 640, 40
    $region21: #{tpu_custom_call.1} parent=1 // pred_fallthru
      _
    // Predicated region
    $region22: #{tpu_custom_call.1} parent=1 // pred_check
      _
    $region23: #{tpu_custom_call.1} parent=1 // pred_check_branch
      %63 = sbr.rel (0) target = $region25
    $region24: #{tpu_custom_call.1} parent=1 // pred_region
      _
    $region25: #{tpu_custom_call.1} parent=1 // pred_fallthru
      _
    // Predicated region
    $region26: #{tpu_custom_call.1} parent=1 // pred_check
      _
    $region27: #{tpu_custom_call.1} parent=1 // pred_check_branch
      %65 = sbr.rel (0) target = $region29
    $region28: #{tpu_custom_call.1} parent=1 // pred_region
      %s67 = ssub.s32 2048, 2048
      %68 = vsyncadd [#allocation11], %s67
      %s69 = sshll.u32 [#allocation10], 4
      %s70 = int_to_ptr.vmem [resolvable:$true] %s69
      %75 = dma.hbm_to_vmem [thread:$0]  %s6, 2048, %s70, [#allocation11], 128, 128, 8
    $region29: #{tpu_custom_call.1} parent=1 // pred_fallthru
      _
    // Predicated region
    $region30: #{tpu_custom_call.1} parent=1 // pred_check
      _
    $region31: #{tpu_custom_call.1} parent=1 // pred_check_branch
      %77 = sbr.rel (0) target = $region33
    $region32: #{tpu_custom_call.1} parent=1 // pred_region
      _
    $region33: #{tpu_custom_call.1} parent=1 // pred_fallthru
      _
    // Predicated region
    $region34: #{tpu_custom_call.1} parent=1 // pred_check
      _
    $region35: #{tpu_custom_call.1} parent=1 // pred_check_branch
      %79 = sbr.rel (0) target = $region37
    $region36: #{tpu_custom_call.1} parent=1 // pred_region
      %s81 = ssub.s32 2048, 2048
      %82 = vsyncadd [#allocation11], %s81
      %s83 = sshll.u32 [#allocation12], 4
      %s84 = int_to_ptr.vmem [resolvable:$true] %s83
      %89 = dma.hbm_to_vmem [thread:$0]  %s8, 2048, %s84, [#allocation11], 128, 128, 8
    $region37: #{tpu_custom_call.1} parent=1 // pred_fallthru
      _
    // Predicated region
    $region38: #{tpu_custom_call.1} parent=1 // pred_check
      _
    $region39: #{tpu_custom_call.1} parent=1 // pred_check_branch
      %91 = sbr.rel (0) target = $region41
    $region40: #{tpu_custom_call.1} parent=1 // pred_region
      %s93 = ssub.s32 2048, 2048
      %94 = vsyncadd [#allocation14], %s93
      %s95 = sshll.u32 [#allocation13], 4
      %s96 = int_to_ptr.vmem [resolvable:$true] %s95
      %101 = dma.hbm_to_vmem [thread:$0]  %s9, 2048, %s96, [#allocation14], 128, 128, 8
    $region41: #{tpu_custom_call.1} parent=1 // pred_fallthru
      _
    // Predicated region
    $region42: #{tpu_custom_call.1} parent=1 // pred_check
      _
    $region43: #{tpu_custom_call.1} parent=1 // pred_check_branch
      %103 = sbr.rel (0) target = $region45
    $region44: #{tpu_custom_call.1} parent=1 // pred_region
      %104 = dma.done [#allocation5], 128
    $region45: #{tpu_custom_call.1} parent=1 // pred_fallthru
      _
    // Predicated region
    $region46: #{tpu_custom_call.1} parent=1 // pred_check
      _
    $region47: #{tpu_custom_call.1} parent=1 // pred_check_branch
      %106 = sbr.rel (0) target = $region49
    $region48: #{tpu_custom_call.1} parent=1 // pred_region
      %107 = dma.done [#allocation8], 10240
    $region49: #{tpu_custom_call.1} parent=1 // pred_fallthru
      _
    // Predicated region
    $region50: #{tpu_custom_call.1} parent=1 // pred_check
      _
    $region51: #{tpu_custom_call.1} parent=1 // pred_check_branch
      %109 = sbr.rel (0) target = $region53
    $region52: #{tpu_custom_call.1} parent=1 // pred_region
      %110 = dma.done [#allocation8], 10240
    $region53: #{tpu_custom_call.1} parent=1 // pred_fallthru
      _
    // Predicated region
    $region54: #{tpu_custom_call.1} parent=1 // pred_check
      _
    $region55: #{tpu_custom_call.1} parent=1 // pred_check_branch
      %112 = sbr.rel (0) target = $region57
    $region56: #{tpu_custom_call.1} parent=1 // pred_region
      %113 = dma.done [#allocation11], 2048
    $region57: #{tpu_custom_call.1} parent=1 // pred_fallthru
      _
    // Predicated region
    $region58: #{tpu_custom_call.1} parent=1 // pred_check
      _
    $region59: #{tpu_custom_call.1} parent=1 // pred_check_branch
      %115 = sbr.rel (0) target = $region61
    $region60: #{tpu_custom_call.1} parent=1 // pred_region
      %116 = dma.done [#allocation11], 2048
    $region61: #{tpu_custom_call.1} parent=1 // pred_fallthru
      _
    // Predicated region
    $region62: #{tpu_custom_call.1} parent=1 // pred_check
      _
    $region63: #{tpu_custom_call.1} parent=1 // pred_check_branch
      %118 = sbr.rel (0) target = $region65
    $region64: #{tpu_custom_call.1} parent=1 // pred_region
      %119 = dma.done [#allocation14], 2048
    $region65: #{tpu_custom_call.1} parent=1 // pred_fallthru
      _
    %p120 = scmp.eq.s32.totalorder 0, 0
    // Predicated region
    $region66: #{tpu_custom_call.1} parent=1 // pred_check
      %p121 = pneg %p120
    $region67: #{tpu_custom_call.1} parent=1 // pred_check_branch
      %123 = sbr.rel (%p121) target = $region69
    $region68: #{tpu_custom_call.1} parent=1 // pred_region
      %v124 = vld [vmem:[%s1] sm:$0x1]
      %125 = vst [vmem:[#allocation16] sm:$0x1] %v124
      %v126 = vld [vmem:[%s2] sm:$0x1]
      %127 = vst [vmem:[#allocation18] sm:$0x1] %v126
    $region69: #{tpu_custom_call.1} parent=1 // pred_fallthru
      _
    %v128 = vld [vmem:[#allocation4] sm:$0xff]
    %v129 = vld [vmem:[#allocation7] sm:$0xff]
    %v130 = vld [vmem:[#allocation7 + $0x8] sm:$0xff]
    %v131 = vld [vmem:[#allocation7 + $0x10] sm:$0xff]
    %v132 = vld [vmem:[#allocation7 + $0x18] sm:$0xff]
    %v133 = vld [vmem:[#allocation7 + $0x20] sm:$0xff]
    %v134 = vld [vmem:[#allocation7 + $0x28] sm:$0xff]
    %v135 = vld [vmem:[#allocation7 + $0x30] sm:$0xff]
    %v136 = vld [vmem:[#allocation7 + $0x38] sm:$0xff]
    %v137 = vld [vmem:[#allocation7 + $0x40] sm:$0xff]
    %v138 = vld [vmem:[#allocation7 + $0x48] sm:$0xff]
    %v139 = vld [vmem:[#allocation7 + $0x50] sm:$0xff]
    %v140 = vld [vmem:[#allocation7 + $0x58] sm:$0xff]
    %v141 = vld [vmem:[#allocation7 + $0x60] sm:$0xff]
    %v142 = vld [vmem:[#allocation7 + $0x68] sm:$0xff]
    %v143 = vld [vmem:[#allocation7 + $0x70] sm:$0xff]
    %v144 = vld [vmem:[#allocation7 + $0x78] sm:$0xff]
    %v145 = vld [vmem:[#allocation7 + $0x80] sm:$0xff]
    %v146 = vld [vmem:[#allocation7 + $0x88] sm:$0xff]
    %v147 = vld [vmem:[#allocation7 + $0x90] sm:$0xff]
    %v148 = vld [vmem:[#allocation7 + $0x98] sm:$0xff]
    %v149 = vld [vmem:[#allocation7 + $0xa0] sm:$0xff]
    %v150 = vld [vmem:[#allocation7 + $0xa8] sm:$0xff]
    %v151 = vld [vmem:[#allocation7 + $0xb0] sm:$0xff]
    %v152 = vld [vmem:[#allocation7 + $0xb8] sm:$0xff]
    %v153 = vld [vmem:[#allocation7 + $0xc0] sm:$0xff]
    %v154 = vld [vmem:[#allocation7 + $0xc8] sm:$0xff]
    %v155 = vld [vmem:[#allocation7 + $0xd0] sm:$0xff]
    %v156 = vld [vmem:[#allocation7 + $0xd8] sm:$0xff]
    %v157 = vld [vmem:[#allocation7 + $0xe0] sm:$0xff]
    %v158 = vld [vmem:[#allocation7 + $0xe8] sm:$0xff]
    %v159 = vld [vmem:[#allocation7 + $0xf0] sm:$0xff]
    %v160 = vld [vmem:[#allocation7 + $0xf8] sm:$0xff]
    %v161 = vld [vmem:[#allocation7 + $0x100] sm:$0xff]
    %v162 = vld [vmem:[#allocation7 + $0x108] sm:$0xff]
    %v163 = vld [vmem:[#allocation7 + $0x110] sm:$0xff]
    %v164 = vld [vmem:[#allocation7 + $0x118] sm:$0xff]
    %v165 = vld [vmem:[#allocation7 + $0x120] sm:$0xff]
    %v166 = vld [vmem:[#allocation7 + $0x128] sm:$0xff]
    %v167 = vld [vmem:[#allocation7 + $0x130] sm:$0xff]
    %v168 = vld [vmem:[#allocation7 + $0x138] sm:$0xff]
    %v169 = vld [vmem:[#allocation7 + $0x140] sm:$0xff]
    %v170 = vld [vmem:[#allocation7 + $0x148] sm:$0xff]
    %v171 = vld [vmem:[#allocation7 + $0x150] sm:$0xff]
    %v172 = vld [vmem:[#allocation7 + $0x158] sm:$0xff]
    %v173 = vld [vmem:[#allocation7 + $0x160] sm:$0xff]
    %v174 = vld [vmem:[#allocation7 + $0x168] sm:$0xff]
    %v175 = vld [vmem:[#allocation7 + $0x170] sm:$0xff]
    %v176 = vld [vmem:[#allocation7 + $0x178] sm:$0xff]
    %v177 = vld [vmem:[#allocation7 + $0x180] sm:$0xff]
    %v178 = vld [vmem:[#allocation7 + $0x188] sm:$0xff]
    %v179 = vld [vmem:[#allocation7 + $0x190] sm:$0xff]
    %v180 = vld [vmem:[#allocation7 + $0x198] sm:$0xff]
    %v181 = vld [vmem:[#allocation7 + $0x1a0] sm:$0xff]
    %v182 = vld [vmem:[#allocation7 + $0x1a8] sm:$0xff]
    %v183 = vld [vmem:[#allocation7 + $0x1b0] sm:$0xff]
    %v184 = vld [vmem:[#allocation7 + $0x1b8] sm:$0xff]
    %v185 = vld [vmem:[#allocation7 + $0x1c0] sm:$0xff]
    %v186 = vld [vmem:[#allocation7 + $0x1c8] sm:$0xff]
    %v187 = vld [vmem:[#allocation7 + $0x1d0] sm:$0xff]
    %v188 = vld [vmem:[#allocation7 + $0x1d8] sm:$0xff]
    %v189 = vld [vmem:[#allocation7 + $0x1e0] sm:$0xff]
    %v190 = vld [vmem:[#allocation7 + $0x1e8] sm:$0xff]
    %v191 = vld [vmem:[#allocation7 + $0x1f0] sm:$0xff]
    %v192 = vld [vmem:[#allocation7 + $0x1f8] sm:$0xff]
    %v193 = vld [vmem:[#allocation7 + $0x200] sm:$0xff]
    %v194 = vld [vmem:[#allocation7 + $0x208] sm:$0xff]
    %v195 = vld [vmem:[#allocation7 + $0x210] sm:$0xff]
    %v196 = vld [vmem:[#allocation7 + $0x218] sm:$0xff]
    %v197 = vld [vmem:[#allocation7 + $0x220] sm:$0xff]
    %v198 = vld [vmem:[#allocation7 + $0x228] sm:$0xff]
    %v199 = vld [vmem:[#allocation7 + $0x230] sm:$0xff]
    %v200 = vld [vmem:[#allocation7 + $0x238] sm:$0xff]
    %v201 = vld [vmem:[#allocation7 + $0x240] sm:$0xff]
    %v202 = vld [vmem:[#allocation7 + $0x248] sm:$0xff]
    %v203 = vld [vmem:[#allocation7 + $0x250] sm:$0xff]
    %v204 = vld [vmem:[#allocation7 + $0x258] sm:$0xff]
    %v205 = vld [vmem:[#allocation7 + $0x260] sm:$0xff]
    %v206 = vld [vmem:[#allocation7 + $0x268] sm:$0xff]
    %v207 = vld [vmem:[#allocation7 + $0x270] sm:$0xff]
    %v208 = vld [vmem:[#allocation7 + $0x278] sm:$0xff]
    %v209 = vld [vmem:[%s5] sm:$0x1f]
    %v211 = vlaneseq
    %v212 = vshrl.u32 %v211, 7
    %v213 = vsub.s32 0, %v212
    %v214 = vrot.slane %v209, %v213
    %v215 = vlaneseq
    %v216 = vshrl.u32 %v215, 7
    %v217 = vsub.s32 1, %v216
    %v218 = vrot.slane %v209, %v217
    %v219 = vlaneseq
    %v220 = vshrl.u32 %v219, 7
    %v221 = vsub.s32 2, %v220
    %v222 = vrot.slane %v209, %v221
    %v223 = vlaneseq
    %v224 = vshrl.u32 %v223, 7
    %v225 = vsub.s32 3, %v224
    %v226 = vrot.slane %v209, %v225
    %v227 = vlaneseq
    %v228 = vshrl.u32 %v227, 7
    %v229 = vsub.s32 4, %v228
    %v230 = vrot.slane %v209, %v229
    %236 = vmatprep.subr.mxu0 %v205
    %237 = vmatpush1.msra.mxu0 %v204
    %238 = vmatprep.subr.mxu0 %v200
    %239 = vmatpush1.msra.mxu0 %v199
    %240 = vmatprep.subr.mxu0 %v195
    %241 = vmatpush1.msra.mxu0 %v194
    %242 = vmatprep.subr.mxu0 %v190
    %243 = vmatpush1.msra.mxu0 %v189
    %244 = vmatprep.subr.mxu0 %v185
    %245 = vmatpush1.msra.mxu0 %v184
    %246 = vmatprep.subr.mxu0 %v180
    %247 = vmatpush1.msra.mxu0 %v179
    %248 = vmatprep.subr.mxu0 %v175
    %249 = vmatpush1.msra.mxu0 %v174
    %250 = vmatprep.subr.mxu0 %v170
    %251 = vmatpush1.msra.mxu0 %v169
    %252 = vmatprep.subr.mxu0 %v165
    %253 = vmatpush1.msra.mxu0 %v164
    %254 = vmatprep.subr.mxu0 %v160
    %255 = vmatpush1.msra.mxu0 %v159
    %256 = vmatprep.subr.mxu0 %v155
    %257 = vmatpush1.msra.mxu0 %v154
    %258 = vmatprep.subr.mxu0 %v150
    %259 = vmatpush1.msra.mxu0 %v149
    %260 = vmatprep.subr.mxu0 %v145
    %261 = vmatpush1.msra.mxu0 %v144
    %262 = vmatprep.subr.mxu0 %v140
    %263 = vmatpush1.msra.mxu0 %v139
    %264 = vmatprep.subr.mxu0 %v135
    %265 = vmatpush1.msra.mxu0 %v134
    %266 = vmatprep.subr.mxu0 %v130
    %267 = vmatpush1.msra.mxu0 %v129
    %268 = vmatprep.subr.mxu0 0.0
    %269 = vmatpush2.msra.mxu0 0.0
    %270 = vmatprep.subr.mxu0 0.0
    %271 = vmatpush2.msra.mxu0 0.0
    %272 = vmatprep.subr.mxu0 0.0
    %273 = vmatpush2.msra.mxu0 0.0
    %274 = vmatprep.subr.mxu0 0.0
    %275 = vmatpush2.msra.mxu0 0.0
    %276 = vmatprep.subr.mxu0 0.0
    %277 = vmatpush2.msra.mxu0 0.0
    %278 = vmatprep.subr.mxu0 0.0
    %279 = vmatpush2.msra.mxu0 0.0
    %280 = vmatprep.subr.mxu0 0.0
    %281 = vmatpush2.msra.mxu0 0.0
    %282 = vmatprep.subr.mxu0 0.0
    %283 = vmatpush2.msra.mxu0 0.0
    %284 = vmatprep.subr.mxu0 0.0
    %285 = vmatpush2.msra.mxu0 0.0
    %286 = vmatprep.subr.mxu0 0.0
    %287 = vmatpush2.msra.mxu0 0.0
    %288 = vmatprep.subr.mxu0 0.0
    %289 = vmatpush2.msra.mxu0 0.0
    %290 = vmatprep.subr.mxu0 0.0
    %291 = vmatpush2.msra.mxu0 0.0
    %292 = vmatprep.subr.mxu0 0.0
    %293 = vmatpush2.msra.mxu0 0.0
    %294 = vmatprep.subr.mxu0 0.0
    %295 = vmatpush2.msra.mxu0 0.0
    %296 = vmatprep.subr.mxu0 0.0
    %297 = vmatpush2.msra.mxu0 0.0
    %298 = vmatprep.subr.mxu0 0.0
    %299 = vmatpush2.msra.mxu0 0.0
    %300 = vmatprep.mubr.f32.mxu0 0.0
    %301 = vmatmul.mubr.f32.gmra.mxu0 %v128
    %v302 = vpop.f32.mrf.mxu0
    %v303 = vadd.f32 %v214, %v302
    %v304 = vpop.f32.mrf.mxu0
    %v305 = vadd.f32 %v218, %v304
    %306 = vdwg.mxu0
    %307 = vmatprep.subr.mxu0 %v207
    %308 = vmatpush1.msra.mxu0 %v206
    %309 = vmatprep.subr.mxu0 %v202
    %310 = vmatpush1.msra.mxu0 %v201
    %311 = vmatprep.subr.mxu0 %v197
    %312 = vmatpush1.msra.mxu0 %v196
    %313 = vmatprep.subr.mxu0 %v192
    %314 = vmatpush1.msra.mxu0 %v191
    %315 = vmatprep.subr.mxu0 %v187
    %316 = vmatpush1.msra.mxu0 %v186
    %317 = vmatprep.subr.mxu0 %v182
    %318 = vmatpush1.msra.mxu0 %v181
    %319 = vmatprep.subr.mxu0 %v177
    %320 = vmatpush1.msra.mxu0 %v176
    %321 = vmatprep.subr.mxu0 %v172
    %322 = vmatpush1.msra.mxu0 %v171
    %323 = vmatprep.subr.mxu0 %v167
    %324 = vmatpush1.msra.mxu0 %v166
    %325 = vmatprep.subr.mxu0 %v162
    %326 = vmatpush1.msra.mxu0 %v161
    %327 = vmatprep.subr.mxu0 %v157
    %328 = vmatpush1.msra.mxu0 %v156
    %329 = vmatprep.subr.mxu0 %v152
    %330 = vmatpush1.msra.mxu0 %v151
    %331 = vmatprep.subr.mxu0 %v147
    %332 = vmatpush1.msra.mxu0 %v146
    %333 = vmatprep.subr.mxu0 %v142
    %334 = vmatpush1.msra.mxu0 %v141
    %335 = vmatprep.subr.mxu0 %v137
    %336 = vmatpush1.msra.mxu0 %v136
    %337 = vmatprep.subr.mxu0 %v132
    %338 = vmatpush1.msra.mxu0 %v131
    %339 = vmatprep.subr.mxu0 0.0
    %340 = vmatpush2.msra.mxu0 0.0
    %341 = vmatprep.subr.mxu0 0.0
    %342 = vmatpush2.msra.mxu0 0.0
    %343 = vmatprep.subr.mxu0 0.0
    %344 = vmatpush2.msra.mxu0 0.0
    %345 = vmatprep.subr.mxu0 0.0
    %346 = vmatpush2.msra.mxu0 0.0
    %347 = vmatprep.subr.mxu0 0.0
    %348 = vmatpush2.msra.mxu0 0.0
    %349 = vmatprep.subr.mxu0 0.0
    %350 = vmatpush2.msra.mxu0 0.0
    %351 = vmatprep.subr.mxu0 0.0
    %352 = vmatpush2.msra.mxu0 0.0
    %353 = vmatprep.subr.mxu0 0.0
    %354 = vmatpush2.msra.mxu0 0.0
    %355 = vmatprep.subr.mxu0 0.0
    %356 = vmatpush2.msra.mxu0 0.0
    %357 = vmatprep.subr.mxu0 0.0
    %358 = vmatpush2.msra.mxu0 0.0
    %359 = vmatprep.subr.mxu0 0.0
    %360 = vmatpush2.msra.mxu0 0.0
    %361 = vmatprep.subr.mxu0 0.0
    %362 = vmatpush2.msra.mxu0 0.0
    %363 = vmatprep.subr.mxu0 0.0
    %364 = vmatpush2.msra.mxu0 0.0
    %365 = vmatprep.subr.mxu0 0.0
    %366 = vmatpush2.msra.mxu0 0.0
    %367 = vmatprep.subr.mxu0 0.0
    %368 = vmatpush2.msra.mxu0 0.0
    %369 = vmatprep.subr.mxu0 0.0
    %370 = vmatpush2.msra.mxu0 0.0
    %371 = vmatprep.mubr.f32.mxu0 0.0
    %372 = vmatmul.mubr.f32.gmra.mxu0 %v128
    %v373 = vpop.f32.mrf.mxu0
    %v374 = vadd.f32 %v222, %v373
    %v375 = vpop.f32.mrf.mxu0
    %v376 = vadd.f32 %v226, %v375
    %377 = vdwg.mxu0
    %378 = vmatprep.subr.mxu0 0.0
    %379 = vmatpush1.msra.mxu0 %v208
    %380 = vmatprep.subr.mxu0 0.0
    %381 = vmatpush1.msra.mxu0 %v203
    %382 = vmatprep.subr.mxu0 0.0
    %383 = vmatpush1.msra.mxu0 %v198
    %384 = vmatprep.subr.mxu0 0.0
    %385 = vmatpush1.msra.mxu0 %v193
    %386 = vmatprep.subr.mxu0 0.0
    %387 = vmatpush1.msra.mxu0 %v188
    %388 = vmatprep.subr.mxu0 0.0
    %389 = vmatpush1.msra.mxu0 %v183
    %390 = vmatprep.subr.mxu0 0.0
    %391 = vmatpush1.msra.mxu0 %v178
    %392 = vmatprep.subr.mxu0 0.0
    %393 = vmatpush1.msra.mxu0 %v173
    %394 = vmatprep.subr.mxu0 0.0
    %395 = vmatpush1.msra.mxu0 %v168
    %396 = vmatprep.subr.mxu0 0.0
    %397 = vmatpush1.msra.mxu0 %v163
    %398 = vmatprep.subr.mxu0 0.0
    %399 = vmatpush1.msra.mxu0 %v158
    %400 = vmatprep.subr.mxu0 0.0
    %401 = vmatpush1.msra.mxu0 %v153
    %402 = vmatprep.subr.mxu0 0.0
    %403 = vmatpush1.msra.mxu0 %v148
    %404 = vmatprep.subr.mxu0 0.0
    %405 = vmatpush1.msra.mxu0 %v143
    %406 = vmatprep.subr.mxu0 0.0
    %407 = vmatpush1.msra.mxu0 %v138
    %408 = vmatprep.subr.mxu0 0.0
    %409 = vmatpush1.msra.mxu0 %v133
    %410 = vmatprep.subr.mxu0 0.0
    %411 = vmatpush2.msra.mxu0 0.0
    %412 = vmatprep.subr.mxu0 0.0
    %413 = vmatpush2.msra.mxu0 0.0
    %414 = vmatprep.subr.mxu0 0.0
    %415 = vmatpush2.msra.mxu0 0.0
    %416 = vmatprep.subr.mxu0 0.0
    %417 = vmatpush2.msra.mxu0 0.0
    %418 = vmatprep.subr.mxu0 0.0
    %419 = vmatpush2.msra.mxu0 0.0
    %420 = vmatprep.subr.mxu0 0.0
    %421 = vmatpush2.msra.mxu0 0.0
    %422 = vmatprep.subr.mxu0 0.0
    %423 = vmatpush2.msra.mxu0 0.0
    %424 = vmatprep.subr.mxu0 0.0
    %425 = vmatpush2.msra.mxu0 0.0
    %426 = vmatprep.subr.mxu0 0.0
    %427 = vmatpush2.msra.mxu0 0.0
    %428 = vmatprep.subr.mxu0 0.0
    %429 = vmatpush2.msra.mxu0 0.0
    %430 = vmatprep.subr.mxu0 0.0
    %431 = vmatpush2.msra.mxu0 0.0
    %432 = vmatprep.subr.mxu0 0.0
    %433 = vmatpush2.msra.mxu0 0.0
    %434 = vmatprep.subr.mxu0 0.0
    %435 = vmatpush2.msra.mxu0 0.0
    %436 = vmatprep.subr.mxu0 0.0
    %437 = vmatpush2.msra.mxu0 0.0
    %438 = vmatprep.subr.mxu0 0.0
    %439 = vmatpush2.msra.mxu0 0.0
    %440 = vmatprep.subr.mxu0 0.0
    %441 = vmatpush2.msra.mxu0 0.0
    %442 = vmatprep.mubr.f32.mxu0 0.0
    %443 = vmatmul.mubr.f32.gmra.mxu0 %v128
    %v444 = vpop.f32.mrf.mxu0
    %v445 = vadd.f32 %v230, %v444
    %v446 = vpop.f32.mrf.mxu0
    %447 = vdwg.mxu0
    %448 = vst [vmem:[#allocation2] sm:$0xff] %v303
    %449 = vst [vmem:[#allocation2 + $0x8] sm:$0xff] %v305
    %450 = vst [vmem:[#allocation2 + $0x10] sm:$0xff] %v374
    %451 = vst [vmem:[#allocation2 + $0x18] sm:$0xff] %v376
    %452 = vst [vmem:[#allocation2 + $0x20] sm:$0xff] %v445
    %v453 = vld [vmem:[#allocation9] sm:$0xff]
    %v454 = vld [vmem:[#allocation9 + $0x8] sm:$0xff]
    %v455 = vld [vmem:[#allocation9 + $0x10] sm:$0xff]
    %v456 = vld [vmem:[#allocation9 + $0x18] sm:$0xff]
    %v457 = vld [vmem:[#allocation9 + $0x20] sm:$0xff]
    %v458 = vld [vmem:[#allocation9 + $0x28] sm:$0xff]
    %v459 = vld [vmem:[#allocation9 + $0x30] sm:$0xff]
    %v460 = vld [vmem:[#allocation9 + $0x38] sm:$0xff]
    %v461 = vld [vmem:[#allocation9 + $0x40] sm:$0xff]
    %v462 = vld [vmem:[#allocation9 + $0x48] sm:$0xff]
    %v463 = vld [vmem:[#allocation9 + $0x50] sm:$0xff]
    %v464 = vld [vmem:[#allocation9 + $0x58] sm:$0xff]
    %v465 = vld [vmem:[#allocation9 + $0x60] sm:$0xff]
    %v466 = vld [vmem:[#allocation9 + $0x68] sm:$0xff]
    %v467 = vld [vmem:[#allocation9 + $0x70] sm:$0xff]
    %v468 = vld [vmem:[#allocation9 + $0x78] sm:$0xff]
    %v469 = vld [vmem:[#allocation9 + $0x80] sm:$0xff]
    %v470 = vld [vmem:[#allocation9 + $0x88] sm:$0xff]
    %v471 = vld [vmem:[#allocation9 + $0x90] sm:$0xff]
    %v472 = vld [vmem:[#allocation9 + $0x98] sm:$0xff]
    %v473 = vld [vmem:[#allocation9 + $0xa0] sm:$0xff]
    %v474 = vld [vmem:[#allocation9 + $0xa8] sm:$0xff]
    %v475 = vld [vmem:[#allocation9 + $0xb0] sm:$0xff]
    %v476 = vld [vmem:[#allocation9 + $0xb8] sm:$0xff]
    %v477 = vld [vmem:[#allocation9 + $0xc0] sm:$0xff]
    %v478 = vld [vmem:[#allocation9 + $0xc8] sm:$0xff]
    %v479 = vld [vmem:[#allocation9 + $0xd0] sm:$0xff]
    %v480 = vld [vmem:[#allocation9 + $0xd8] sm:$0xff]
    %v481 = vld [vmem:[#allocation9 + $0xe0] sm:$0xff]
    %v482 = vld [vmem:[#allocation9 + $0xe8] sm:$0xff]
    %v483 = vld [vmem:[#allocation9 + $0xf0] sm:$0xff]
    %v484 = vld [vmem:[#allocation9 + $0xf8] sm:$0xff]
    %v485 = vld [vmem:[#allocation9 + $0x100] sm:$0xff]
    %v486 = vld [vmem:[#allocation9 + $0x108] sm:$0xff]
    %v487 = vld [vmem:[#allocation9 + $0x110] sm:$0xff]
    %v488 = vld [vmem:[#allocation9 + $0x118] sm:$0xff]
    %v489 = vld [vmem:[#allocation9 + $0x120] sm:$0xff]
    %v490 = vld [vmem:[#allocation9 + $0x128] sm:$0xff]
    %v491 = vld [vmem:[#allocation9 + $0x130] sm:$0xff]
    %v492 = vld [vmem:[#allocation9 + $0x138] sm:$0xff]
    %v493 = vld [vmem:[#allocation9 + $0x140] sm:$0xff]
    %v494 = vld [vmem:[#allocation9 + $0x148] sm:$0xff]
    %v495 = vld [vmem:[#allocation9 + $0x150] sm:$0xff]
    %v496 = vld [vmem:[#allocation9 + $0x158] sm:$0xff]
    %v497 = vld [vmem:[#allocation9 + $0x160] sm:$0xff]
    %v498 = vld [vmem:[#allocation9 + $0x168] sm:$0xff]
    %v499 = vld [vmem:[#allocation9 + $0x170] sm:$0xff]
    %v500 = vld [vmem:[#allocation9 + $0x178] sm:$0xff]
    %v501 = vld [vmem:[#allocation9 + $0x180] sm:$0xff]
    %v502 = vld [vmem:[#allocation9 + $0x188] sm:$0xff]
    %v503 = vld [vmem:[#allocation9 + $0x190] sm:$0xff]
    %v504 = vld [vmem:[#allocation9 + $0x198] sm:$0xff]
    %v505 = vld [vmem:[#allocation9 + $0x1a0] sm:$0xff]
    %v506 = vld [vmem:[#allocation9 + $0x1a8] sm:$0xff]
    %v507 = vld [vmem:[#allocation9 + $0x1b0] sm:$0xff]
    %v508 = vld [vmem:[#allocation9 + $0x1b8] sm:$0xff]
    %v509 = vld [vmem:[#allocation9 + $0x1c0] sm:$0xff]
    %v510 = vld [vmem:[#allocation9 + $0x1c8] sm:$0xff]
    %v511 = vld [vmem:[#allocation9 + $0x1d0] sm:$0xff]
    %v512 = vld [vmem:[#allocation9 + $0x1d8] sm:$0xff]
    %v513 = vld [vmem:[#allocation9 + $0x1e0] sm:$0xff]
    %v514 = vld [vmem:[#allocation9 + $0x1e8] sm:$0xff]
    %v515 = vld [vmem:[#allocation9 + $0x1f0] sm:$0xff]
    %v516 = vld [vmem:[#allocation9 + $0x1f8] sm:$0xff]
    %v517 = vld [vmem:[#allocation9 + $0x200] sm:$0xff]
    %v518 = vld [vmem:[#allocation9 + $0x208] sm:$0xff]
    %v519 = vld [vmem:[#allocation9 + $0x210] sm:$0xff]
    %v520 = vld [vmem:[#allocation9 + $0x218] sm:$0xff]
    %v521 = vld [vmem:[#allocation9 + $0x220] sm:$0xff]
    %v522 = vld [vmem:[#allocation9 + $0x228] sm:$0xff]
    %v523 = vld [vmem:[#allocation9 + $0x230] sm:$0xff]
    %v524 = vld [vmem:[#allocation9 + $0x238] sm:$0xff]
    %v525 = vld [vmem:[#allocation9 + $0x240] sm:$0xff]
    %v526 = vld [vmem:[#allocation9 + $0x248] sm:$0xff]
    %v527 = vld [vmem:[#allocation9 + $0x250] sm:$0xff]
    %v528 = vld [vmem:[#allocation9 + $0x258] sm:$0xff]
    %v529 = vld [vmem:[#allocation9 + $0x260] sm:$0xff]
    %v530 = vld [vmem:[#allocation9 + $0x268] sm:$0xff]
    %v531 = vld [vmem:[#allocation9 + $0x270] sm:$0xff]
    %v532 = vld [vmem:[#allocation9 + $0x278] sm:$0xff]
    %v533 = vld [vmem:[#allocation10] sm:$0xff]
    %v534 = vld [vmem:[#allocation10 + $0x8] sm:$0xff]
    %v535 = vld [vmem:[#allocation10 + $0x10] sm:$0xff]
    %v536 = vld [vmem:[#allocation10 + $0x18] sm:$0xff]
    %v537 = vld [vmem:[#allocation10 + $0x20] sm:$0xff]
    %v538 = vld [vmem:[#allocation10 + $0x28] sm:$0xff]
    %v539 = vld [vmem:[#allocation10 + $0x30] sm:$0xff]
    %v540 = vld [vmem:[#allocation10 + $0x38] sm:$0xff]
    %v541 = vld [vmem:[#allocation10 + $0x40] sm:$0xff]
    %v542 = vld [vmem:[#allocation10 + $0x48] sm:$0xff]
    %v543 = vld [vmem:[#allocation10 + $0x50] sm:$0xff]
    %v544 = vld [vmem:[#allocation10 + $0x58] sm:$0xff]
    %v545 = vld [vmem:[#allocation10 + $0x60] sm:$0xff]
    %v546 = vld [vmem:[#allocation10 + $0x68] sm:$0xff]
    %v547 = vld [vmem:[#allocation10 + $0x70] sm:$0xff]
    %v548 = vld [vmem:[#allocation10 + $0x78] sm:$0xff]
    %v549 = vld [vmem:[%s7] sm:$0x1]
    %v550 = vld [vmem:[#allocation12] sm:$0xff]
    %v551 = vld [vmem:[#allocation12 + $0x8] sm:$0xff]
    %v552 = vld [vmem:[#allocation12 + $0x10] sm:$0xff]
    %v553 = vld [vmem:[#allocation12 + $0x18] sm:$0xff]
    %v554 = vld [vmem:[#allocation12 + $0x20] sm:$0xff]
    %v555 = vld [vmem:[#allocation12 + $0x28] sm:$0xff]
    %v556 = vld [vmem:[#allocation12 + $0x30] sm:$0xff]
    %v557 = vld [vmem:[#allocation12 + $0x38] sm:$0xff]
    %v558 = vld [vmem:[#allocation12 + $0x40] sm:$0xff]
    %v559 = vld [vmem:[#allocation12 + $0x48] sm:$0xff]
    %v560 = vld [vmem:[#allocation12 + $0x50] sm:$0xff]
    %v561 = vld [vmem:[#allocation12 + $0x58] sm:$0xff]
    %v562 = vld [vmem:[#allocation12 + $0x60] sm:$0xff]
    %v563 = vld [vmem:[#allocation12 + $0x68] sm:$0xff]
    %v564 = vld [vmem:[#allocation12 + $0x70] sm:$0xff]
    %v565 = vld [vmem:[#allocation12 + $0x78] sm:$0xff]
    %v566 = vld [vmem:[#allocation16] sm:$0x1]
    %v567 = vld [vmem:[#allocation18] sm:$0x1]
    %v568 = vld [vmem:[#allocation2] ss:$8 sm:$0xf]
    %v569 = vld [vmem:[#allocation2] ss:$8 sm:$0x10]
    %v570 = vor.u32 %v568, %v569
    %571 = vmatprep.subr.mxu0 %v529
    %572 = vmatpush1.msra.mxu0 %v528
    %573 = vmatprep.subr.mxu0 %v524
    %574 = vmatpush1.msra.mxu0 %v523
    %575 = vmatprep.subr.mxu0 %v519
    %576 = vmatpush1.msra.mxu0 %v518
    %577 = vmatprep.subr.mxu0 %v514
    %578 = vmatpush1.msra.mxu0 %v513
    %579 = vmatprep.subr.mxu0 %v509
    %580 = vmatpush1.msra.mxu0 %v508
    %581 = vmatprep.subr.mxu0 %v504
    %582 = vmatpush1.msra.mxu0 %v503
    %583 = vmatprep.subr.mxu0 %v499
    %584 = vmatpush1.msra.mxu0 %v498
    %585 = vmatprep.subr.mxu0 %v494
    %586 = vmatpush1.msra.mxu0 %v493
    %587 = vmatprep.subr.mxu0 %v489
    %588 = vmatpush1.msra.mxu0 %v488
    %589 = vmatprep.subr.mxu0 %v484
    %590 = vmatpush1.msra.mxu0 %v483
    %591 = vmatprep.subr.mxu0 %v479
    %592 = vmatpush1.msra.mxu0 %v478
    %593 = vmatprep.subr.mxu0 %v474
    %594 = vmatpush1.msra.mxu0 %v473
    %595 = vmatprep.subr.mxu0 %v469
    %596 = vmatpush1.msra.mxu0 %v468
    %597 = vmatprep.subr.mxu0 %v464
    %598 = vmatpush1.msra.mxu0 %v463
    %599 = vmatprep.subr.mxu0 %v459
    %600 = vmatpush1.msra.mxu0 %v458
    %601 = vmatprep.subr.mxu0 %v454
    %602 = vmatpush1.msra.mxu0 %v453
    %603 = vmatprep.subr.mxu0 0.0
    %604 = vmatpush2.msra.mxu0 0.0
    %605 = vmatprep.subr.mxu0 0.0
    %606 = vmatpush2.msra.mxu0 0.0
    %607 = vmatprep.subr.mxu0 0.0
    %608 = vmatpush2.msra.mxu0 0.0
    %609 = vmatprep.subr.mxu0 0.0
    %610 = vmatpush2.msra.mxu0 0.0
    %611 = vmatprep.subr.mxu0 0.0
    %612 = vmatpush2.msra.mxu0 0.0
    %613 = vmatprep.subr.mxu0 0.0
    %614 = vmatpush2.msra.mxu0 0.0
    %615 = vmatprep.subr.mxu0 0.0
    %616 = vmatpush2.msra.mxu0 0.0
    %617 = vmatprep.subr.mxu0 0.0
    %618 = vmatpush2.msra.mxu0 0.0
    %619 = vmatprep.subr.mxu0 0.0
    %620 = vmatpush2.msra.mxu0 0.0
    %621 = vmatprep.subr.mxu0 0.0
    %622 = vmatpush2.msra.mxu0 0.0
    %623 = vmatprep.subr.mxu0 0.0
    %624 = vmatpush2.msra.mxu0 0.0
    %625 = vmatprep.subr.mxu0 0.0
    %626 = vmatpush2.msra.mxu0 0.0
    %627 = vmatprep.subr.mxu0 0.0
    %628 = vmatpush2.msra.mxu0 0.0
    %629 = vmatprep.subr.mxu0 0.0
    %630 = vmatpush2.msra.mxu0 0.0
    %631 = vmatprep.subr.mxu0 0.0
    %632 = vmatpush2.msra.mxu0 0.0
    %633 = vmatprep.subr.mxu0 0.0
    %634 = vmatpush2.msra.mxu0 0.0
    %635 = vmatprep.mubr.f32.mxu0 0.0
    %636 = vmatmul.mubr.f32.gmra.mxu0 %v566
    %v637 = vpop.f32.mrf.mxu0
    %v638 = vadd.f32 0.0, %v637
    %v639 = vpop.f32.mrf.mxu0
    %v640 = vadd.f32 0.0, %v639
    %641 = vdwg.mxu0
    %642 = vmatprep.subr.mxu0 %v531
    %643 = vmatpush1.msra.mxu0 %v530
    %644 = vmatprep.subr.mxu0 %v526
    %645 = vmatpush1.msra.mxu0 %v525
    %646 = vmatprep.subr.mxu0 %v521
    %647 = vmatpush1.msra.mxu0 %v520
    %648 = vmatprep.subr.mxu0 %v516
    %649 = vmatpush1.msra.mxu0 %v515
    %650 = vmatprep.subr.mxu0 %v511
    %651 = vmatpush1.msra.mxu0 %v510
    %652 = vmatprep.subr.mxu0 %v506
    %653 = vmatpush1.msra.mxu0 %v505
    %654 = vmatprep.subr.mxu0 %v501
    %655 = vmatpush1.msra.mxu0 %v500
    %656 = vmatprep.subr.mxu0 %v496
    %657 = vmatpush1.msra.mxu0 %v495
    %658 = vmatprep.subr.mxu0 %v491
    %659 = vmatpush1.msra.mxu0 %v490
    %660 = vmatprep.subr.mxu0 %v486
    %661 = vmatpush1.msra.mxu0 %v485
    %662 = vmatprep.subr.mxu0 %v481
    %663 = vmatpush1.msra.mxu0 %v480
    %664 = vmatprep.subr.mxu0 %v476
    %665 = vmatpush1.msra.mxu0 %v475
    %666 = vmatprep.subr.mxu0 %v471
    %667 = vmatpush1.msra.mxu0 %v470
    %668 = vmatprep.subr.mxu0 %v466
    %669 = vmatpush1.msra.mxu0 %v465
    %670 = vmatprep.subr.mxu0 %v461
    %671 = vmatpush1.msra.mxu0 %v460
    %672 = vmatprep.subr.mxu0 %v456
    %673 = vmatpush1.msra.mxu0 %v455
    %674 = vmatprep.subr.mxu0 0.0
    %675 = vmatpush2.msra.mxu0 0.0
    %676 = vmatprep.subr.mxu0 0.0
    %677 = vmatpush2.msra.mxu0 0.0
    %678 = vmatprep.subr.mxu0 0.0
    %679 = vmatpush2.msra.mxu0 0.0
    %680 = vmatprep.subr.mxu0 0.0
    %681 = vmatpush2.msra.mxu0 0.0
    %682 = vmatprep.subr.mxu0 0.0
    %683 = vmatpush2.msra.mxu0 0.0
    %684 = vmatprep.subr.mxu0 0.0
    %685 = vmatpush2.msra.mxu0 0.0
    %686 = vmatprep.subr.mxu0 0.0
    %687 = vmatpush2.msra.mxu0 0.0
    %688 = vmatprep.subr.mxu0 0.0
    %689 = vmatpush2.msra.mxu0 0.0
    %690 = vmatprep.subr.mxu0 0.0
    %691 = vmatpush2.msra.mxu0 0.0
    %692 = vmatprep.subr.mxu0 0.0
    %693 = vmatpush2.msra.mxu0 0.0
    %694 = vmatprep.subr.mxu0 0.0
    %695 = vmatpush2.msra.mxu0 0.0
    %696 = vmatprep.subr.mxu0 0.0
    %697 = vmatpush2.msra.mxu0 0.0
    %698 = vmatprep.subr.mxu0 0.0
    %699 = vmatpush2.msra.mxu0 0.0
    %700 = vmatprep.subr.mxu0 0.0
    %701 = vmatpush2.msra.mxu0 0.0
    %702 = vmatprep.subr.mxu0 0.0
    %703 = vmatpush2.msra.mxu0 0.0
    %704 = vmatprep.subr.mxu0 0.0
    %705 = vmatpush2.msra.mxu0 0.0
    %706 = vmatprep.mubr.f32.mxu0 0.0
    %707 = vmatmul.mubr.f32.gmra.mxu0 %v566
    %v708 = vpop.f32.mrf.mxu0
    %v709 = vadd.f32 0.0, %v708
    %v710 = vpop.f32.mrf.mxu0
    %v711 = vadd.f32 0.0, %v710
    %712 = vdwg.mxu0
    %713 = vmatprep.subr.mxu0 0.0
    %714 = vmatpush1.msra.mxu0 %v532
    %715 = vmatprep.subr.mxu0 0.0
    %716 = vmatpush1.msra.mxu0 %v527
    %717 = vmatprep.subr.mxu0 0.0
    %718 = vmatpush1.msra.mxu0 %v522
    %719 = vmatprep.subr.mxu0 0.0
    %720 = vmatpush1.msra.mxu0 %v517
    %721 = vmatprep.subr.mxu0 0.0
    %722 = vmatpush1.msra.mxu0 %v512
    %723 = vmatprep.subr.mxu0 0.0
    %724 = vmatpush1.msra.mxu0 %v507
    %725 = vmatprep.subr.mxu0 0.0
    %726 = vmatpush1.msra.mxu0 %v502
    %727 = vmatprep.subr.mxu0 0.0
    %728 = vmatpush1.msra.mxu0 %v497
    %729 = vmatprep.subr.mxu0 0.0
    %730 = vmatpush1.msra.mxu0 %v492
    %731 = vmatprep.subr.mxu0 0.0
    %732 = vmatpush1.msra.mxu0 %v487
    %733 = vmatprep.subr.mxu0 0.0
    %734 = vmatpush1.msra.mxu0 %v482
    %735 = vmatprep.subr.mxu0 0.0
    %736 = vmatpush1.msra.mxu0 %v477
    %737 = vmatprep.subr.mxu0 0.0
    %738 = vmatpush1.msra.mxu0 %v472
    %739 = vmatprep.subr.mxu0 0.0
    %740 = vmatpush1.msra.mxu0 %v467
    %741 = vmatprep.subr.mxu0 0.0
    %742 = vmatpush1.msra.mxu0 %v462
    %743 = vmatprep.subr.mxu0 0.0
    %744 = vmatpush1.msra.mxu0 %v457
    %745 = vmatprep.subr.mxu0 0.0
    %746 = vmatpush2.msra.mxu0 0.0
    %747 = vmatprep.subr.mxu0 0.0
    %748 = vmatpush2.msra.mxu0 0.0
    %749 = vmatprep.subr.mxu0 0.0
    %750 = vmatpush2.msra.mxu0 0.0
    %751 = vmatprep.subr.mxu0 0.0
    %752 = vmatpush2.msra.mxu0 0.0
    %753 = vmatprep.subr.mxu0 0.0
    %754 = vmatpush2.msra.mxu0 0.0
    %755 = vmatprep.subr.mxu0 0.0
    %756 = vmatpush2.msra.mxu0 0.0
    %757 = vmatprep.subr.mxu0 0.0
    %758 = vmatpush2.msra.mxu0 0.0
    %759 = vmatprep.subr.mxu0 0.0
    %760 = vmatpush2.msra.mxu0 0.0
    %761 = vmatprep.subr.mxu0 0.0
    %762 = vmatpush2.msra.mxu0 0.0
    %763 = vmatprep.subr.mxu0 0.0
    %764 = vmatpush2.msra.mxu0 0.0
    %765 = vmatprep.subr.mxu0 0.0
    %766 = vmatpush2.msra.mxu0 0.0
    %767 = vmatprep.subr.mxu0 0.0
    %768 = vmatpush2.msra.mxu0 0.0
    %769 = vmatprep.subr.mxu0 0.0
    %770 = vmatpush2.msra.mxu0 0.0
    %771 = vmatprep.subr.mxu0 0.0
    %772 = vmatpush2.msra.mxu0 0.0
    %773 = vmatprep.subr.mxu0 0.0
    %774 = vmatpush2.msra.mxu0 0.0
    %775 = vmatprep.subr.mxu0 0.0
    %776 = vmatpush2.msra.mxu0 0.0
    %777 = vmatprep.mubr.f32.mxu0 0.0
    %778 = vmatmul.mubr.f32.gmra.mxu0 %v566
    %v779 = vpop.f32.mrf.mxu0
    %v780 = vadd.f32 0.0, %v779
    %v781 = vpop.f32.mrf.mxu0
    %782 = vdwg.mxu0
    %v788 = vcombine.low %v638, %v640
    %v789 = vcombine.low %v709, %v711
    %v791 = vunpack.c.l.s4 1966171168
    %v792 = vunpack.c.0.s8 %v791
    %v793 = vlaneseq
    %v794 = vshrl.u32 %v793, 7
    %v795 = vsub.s32 %v792, %v794
    %v796 = vrot.slane %v788, %v795
    %v798 = vunpack.c.l.s4 1966171168
    %v799 = vunpack.c.0.s8 %v798
    %v800 = vlaneseq
    %v801 = vshrl.u32 %v800, 7
    %v802 = vsub.s32 %v799, %v801
    %v803 = vrot.slane %v789, %v802
    %v805 = vunpack.c.l.s4 1966171168
    %v806 = vunpack.c.0.s8 %v805
    %v807 = vlaneseq
    %v808 = vshrl.u32 %v807, 7
    %v809 = vsub.s32 %v806, %v808
    %v810 = vrot.slane %v780, %v809
    %v811 = vcombine.low %v796, %v803
    %v813 = vunpack.c.l.s4 1966171168
    %v814 = vunpack.c.0.s8 %v813
    %v815 = vlaneseq
    %v816 = vshrl.u32 %v815, 7
    %v817 = vsub.s32 %v814, %v816
    %v818 = vrot.slane %v811, %v817
    %v820 = vunpack.c.l.s4 1966171168
    %v821 = vunpack.c.0.s8 %v820
    %v822 = vlaneseq
    %v823 = vshrl.u32 %v822, 7
    %v824 = vsub.s32 %v821, %v823
    %v825 = vrot.slane %v810, %v824
    %v826 = vcombine.low %v818, %v825
    %v828 = vadd.f32 %v570, %v826
    %v829 = vxor.u32 %v828, 2147483648
    %v830 = vmul.f32 %v829, 1.442695
    %v831 = vpow.pop %v830
    %v832 = vadd.f32 %v831, 1.0
    %v833 = vrcp.pop %v832
    %v834 = vmul.f32 1.0, %v833
    %v836 = vrot.slane %v828, 4
    %v838 = vtanh.pop %v836
    %v839 = vmul.f32 %v834, %v567
    %v841 = vrot.slane %v834, 1
    %v843 = vmul.f32 %v841, %v838
    %v844 = vadd.f32 %v839, %v843
    %845 = vmatprep.subr.mxu0 0.0
    %846 = vmatpush1.msra.mxu0 %v548
    %847 = vmatprep.subr.mxu0 0.0
    %848 = vmatpush1.msra.mxu0 %v547
    %849 = vmatprep.subr.mxu0 0.0
    %850 = vmatpush1.msra.mxu0 %v546
    %851 = vmatprep.subr.mxu0 0.0
    %852 = vmatpush1.msra.mxu0 %v545
    %853 = vmatprep.subr.mxu0 0.0
    %854 = vmatpush1.msra.mxu0 %v544
    %855 = vmatprep.subr.mxu0 0.0
    %856 = vmatpush1.msra.mxu0 %v543
    %857 = vmatprep.subr.mxu0 0.0
    %858 = vmatpush1.msra.mxu0 %v542
    %859 = vmatprep.subr.mxu0 0.0
    %860 = vmatpush1.msra.mxu0 %v541
    %861 = vmatprep.subr.mxu0 0.0
    %862 = vmatpush1.msra.mxu0 %v540
    %863 = vmatprep.subr.mxu0 0.0
    %864 = vmatpush1.msra.mxu0 %v539
    %865 = vmatprep.subr.mxu0 0.0
    %866 = vmatpush1.msra.mxu0 %v538
    %867 = vmatprep.subr.mxu0 0.0
    %868 = vmatpush1.msra.mxu0 %v537
    %869 = vmatprep.subr.mxu0 0.0
    %870 = vmatpush1.msra.mxu0 %v536
    %871 = vmatprep.subr.mxu0 0.0
    %872 = vmatpush1.msra.mxu0 %v535
    %873 = vmatprep.subr.mxu0 0.0
    %874 = vmatpush1.msra.mxu0 %v534
    %875 = vmatprep.subr.mxu0 0.0
    %876 = vmatpush1.msra.mxu0 %v533
    %877 = vmatprep.subr.mxu0 0.0
    %878 = vmatpush2.msra.mxu0 0.0
    %879 = vmatprep.subr.mxu0 0.0
    %880 = vmatpush2.msra.mxu0 0.0
    %881 = vmatprep.subr.mxu0 0.0
    %882 = vmatpush2.msra.mxu0 0.0
    %883 = vmatprep.subr.mxu0 0.0
    %884 = vmatpush2.msra.mxu0 0.0
    %885 = vmatprep.subr.mxu0 0.0
    %886 = vmatpush2.msra.mxu0 0.0
    %887 = vmatprep.subr.mxu0 0.0
    %888 = vmatpush2.msra.mxu0 0.0
    %889 = vmatprep.subr.mxu0 0.0
    %890 = vmatpush2.msra.mxu0 0.0
    %891 = vmatprep.subr.mxu0 0.0
    %892 = vmatpush2.msra.mxu0 0.0
    %893 = vmatprep.subr.mxu0 0.0
    %894 = vmatpush2.msra.mxu0 0.0
    %895 = vmatprep.subr.mxu0 0.0
    %896 = vmatpush2.msra.mxu0 0.0
    %897 = vmatprep.subr.mxu0 0.0
    %898 = vmatpush2.msra.mxu0 0.0
    %899 = vmatprep.subr.mxu0 0.0
    %900 = vmatpush2.msra.mxu0 0.0
    %901 = vmatprep.subr.mxu0 0.0
    %902 = vmatpush2.msra.mxu0 0.0
    %903 = vmatprep.subr.mxu0 0.0
    %904 = vmatpush2.msra.mxu0 0.0
    %905 = vmatprep.subr.mxu0 0.0
    %906 = vmatpush2.msra.mxu0 0.0
    %907 = vmatprep.subr.mxu0 0.0
    %908 = vmatpush2.msra.mxu0 0.0
    %909 = vmatprep.mubr.f32.mxu0 0.0
    %910 = vmatmul.mubr.f32.gmra.mxu0 %v844
    %v911 = vpop.f32.mrf.mxu0
    %v912 = vadd.f32 %v549, %v911
    %v913 = vpop.f32.mrf.mxu0
    %914 = vdwg.mxu0
    %vm915 = vcmask 1040384
    %v916 = vsel %vm915, %v912, -inf
    %917 = vmax.xlane.f32.xlu0 %v916
    %v918 = vpop.xlane.xlu0 %917
    %vm919 = vcmp.ge.f32.partialorder %v912, %v918
    %v920 = vsel %vm919, 1, 0
    %v921 = vcvt.s32.f32 %v920
    %v922 = vsel %vm915, %v921, 0.0
    %923 = vadd.xlane.f32.xlu0 %v922
    %v924 = vpop.xlane.xlu0 %923
    %925 = vmatprep.subr.mxu0 0.0
    %926 = vmatpush1.msra.mxu0 %v565
    %927 = vmatprep.subr.mxu0 0.0
    %928 = vmatpush1.msra.mxu0 %v564
    %929 = vmatprep.subr.mxu0 0.0
    %930 = vmatpush1.msra.mxu0 %v563
    %931 = vmatprep.subr.mxu0 0.0
    %932 = vmatpush1.msra.mxu0 %v562
    %933 = vmatprep.subr.mxu0 0.0
    %934 = vmatpush1.msra.mxu0 %v561
    %935 = vmatprep.subr.mxu0 0.0
    %936 = vmatpush1.msra.mxu0 %v560
    %937 = vmatprep.subr.mxu0 0.0
    %938 = vmatpush1.msra.mxu0 %v559
    %939 = vmatprep.subr.mxu0 0.0
    %940 = vmatpush1.msra.mxu0 %v558
    %941 = vmatprep.subr.mxu0 0.0
    %942 = vmatpush1.msra.mxu0 %v557
    %943 = vmatprep.subr.mxu0 0.0
    %944 = vmatpush1.msra.mxu0 %v556
    %945 = vmatprep.subr.mxu0 0.0
    %946 = vmatpush1.msra.mxu0 %v555
    %947 = vmatprep.subr.mxu0 0.0
    %948 = vmatpush1.msra.mxu0 %v554
    %949 = vmatprep.subr.mxu0 0.0
    %950 = vmatpush1.msra.mxu0 %v553
    %951 = vmatprep.subr.mxu0 0.0
    %952 = vmatpush1.msra.mxu0 %v552
    %953 = vmatprep.subr.mxu0 0.0
    %954 = vmatpush1.msra.mxu0 %v551
    %955 = vmatprep.subr.mxu0 0.0
    %956 = vmatpush1.msra.mxu0 %v550
    %957 = vmatprep.subr.mxu0 0.0
    %958 = vmatpush2.msra.mxu0 0.0
    %959 = vmatprep.subr.mxu0 0.0
    %960 = vmatpush2.msra.mxu0 0.0
    %961 = vmatprep.subr.mxu0 0.0
    %962 = vmatpush2.msra.mxu0 0.0
    %963 = vmatprep.subr.mxu0 0.0
    %964 = vmatpush2.msra.mxu0 0.0
    %965 = vmatprep.subr.mxu0 0.0
    %966 = vmatpush2.msra.mxu0 0.0
    %967 = vmatprep.subr.mxu0 0.0
    %968 = vmatpush2.msra.mxu0 0.0
    %969 = vmatprep.subr.mxu0 0.0
    %970 = vmatpush2.msra.mxu0 0.0
    %971 = vmatprep.subr.mxu0 0.0
    %972 = vmatpush2.msra.mxu0 0.0
    %973 = vmatprep.subr.mxu0 0.0
    %974 = vmatpush2.msra.mxu0 0.0
    %975 = vmatprep.subr.mxu0 0.0
    %976 = vmatpush2.msra.mxu0 0.0
    %977 = vmatprep.subr.mxu0 0.0
    %978 = vmatpush2.msra.mxu0 0.0
    %979 = vmatprep.subr.mxu0 0.0
    %980 = vmatpush2.msra.mxu0 0.0
    %981 = vmatprep.subr.mxu0 0.0
    %982 = vmatpush2.msra.mxu0 0.0
    %983 = vmatprep.subr.mxu0 0.0
    %984 = vmatpush2.msra.mxu0 0.0
    %985 = vmatprep.subr.mxu0 0.0
    %986 = vmatpush2.msra.mxu0 0.0
    %987 = vmatprep.subr.mxu0 0.0
    %988 = vmatpush2.msra.mxu0 0.0
    %989 = vmatprep.mubr.f32.mxu0 0.0
    %990 = vmatmul.mubr.f32.gmra.mxu0 %v921
    %v991 = vpop.f32.mrf.mxu0
    %v992 = vadd.f32 0.0, %v991
    %v993 = vpop.f32.mrf.mxu0
    %994 = vdwg.mxu0
    %v995 = vrcp.pop %v924
    %v996 = vmul.f32 %v992, %v995
    %v997 = vrot.slane %v834, 3
    %v999 = vmul.f32 %v997, %v996
    %v1000 = vadd.f32 %v844, %v999
    %v1001 = vtanh.pop %v1000
    %v1002 = vrot.slane %v834, 2
    %v1004 = vmul.f32 %v1002, %v1001
    %1005 = vst [vmem:[#allocation3] sm:$0x1] %v1004
    %s1006 = smul.u32 0, 8
    %p1007 = scmp.lt.s32.totalorder %s1006, 8
    %s1008 = scalar_select %p1007, 1, 0
    %v1009 = vstv %s1008
    %vm1010 = vcmp.eq.s32.totalorder %v1009, 1
    %v1011 = vsel %vm1010, %v1004, %v566
    %v1012 = vsel %vm1010, %v1000, %v567
    %s1013 = scalar_lea.vmem [#allocation2], 1
    %v1014 = vld [vmem:[%s1013] ss:$8 sm:$0xf]
    %v1015 = vld [vmem:[%s1013] ss:$8 sm:$0x10]
    %v1016 = vor.u32 %v1014, %v1015
    %1017 = vmatprep.subr.mxu0 %v529
    %1018 = vmatpush1.msra.mxu0 %v528
    %1019 = vmatprep.subr.mxu0 %v524
    %1020 = vmatpush1.msra.mxu0 %v523
    %1021 = vmatprep.subr.mxu0 %v519
    %1022 = vmatpush1.msra.mxu0 %v518
    %1023 = vmatprep.subr.mxu0 %v514
    %1024 = vmatpush1.msra.mxu0 %v513
    %1025 = vmatprep.subr.mxu0 %v509
    %1026 = vmatpush1.msra.mxu0 %v508
    %1027 = vmatprep.subr.mxu0 %v504
    %1028 = vmatpush1.msra.mxu0 %v503
    %1029 = vmatprep.subr.mxu0 %v499
    %1030 = vmatpush1.msra.mxu0 %v498
    %1031 = vmatprep.subr.mxu0 %v494
    %1032 = vmatpush1.msra.mxu0 %v493
    %1033 = vmatprep.subr.mxu0 %v489
    %1034 = vmatpush1.msra.mxu0 %v488
    %1035 = vmatprep.subr.mxu0 %v484
    %1036 = vmatpush1.msra.mxu0 %v483
    %1037 = vmatprep.subr.mxu0 %v479
    %1038 = vmatpush1.msra.mxu0 %v478
    %1039 = vmatprep.subr.mxu0 %v474
    %1040 = vmatpush1.msra.mxu0 %v473
    %1041 = vmatprep.subr.mxu0 %v469
    %1042 = vmatpush1.msra.mxu0 %v468
    %1043 = vmatprep.subr.mxu0 %v464
    %1044 = vmatpush1.msra.mxu0 %v463
    %1045 = vmatprep.subr.mxu0 %v459
    %1046 = vmatpush1.msra.mxu0 %v458
    %1047 = vmatprep.subr.mxu0 %v454
    %1048 = vmatpush1.msra.mxu0 %v453
    %1049 = vmatprep.subr.mxu0 0.0
    %1050 = vmatpush2.msra.mxu0 0.0
    %1051 = vmatprep.subr.mxu0 0.0
    %1052 = vmatpush2.msra.mxu0 0.0
    %1053 = vmatprep.subr.mxu0 0.0
    %1054 = vmatpush2.msra.mxu0 0.0
    %1055 = vmatprep.subr.mxu0 0.0
    %1056 = vmatpush2.msra.mxu0 0.0
    %1057 = vmatprep.subr.mxu0 0.0
    %1058 = vmatpush2.msra.mxu0 0.0
    %1059 = vmatprep.subr.mxu0 0.0
    %1060 = vmatpush2.msra.mxu0 0.0
    %1061 = vmatprep.subr.mxu0 0.0
    %1062 = vmatpush2.msra.mxu0 0.0
    %1063 = vmatprep.subr.mxu0 0.0
    %1064 = vmatpush2.msra.mxu0 0.0
    %1065 = vmatprep.subr.mxu0 0.0
    %1066 = vmatpush2.msra.mxu0 0.0
    %1067 = vmatprep.subr.mxu0 0.0
    %1068 = vmatpush2.msra.mxu0 0.0
    %1069 = vmatprep.subr.mxu0 0.0
    %1070 = vmatpush2.msra.mxu0 0.0
    %1071 = vmatprep.subr.mxu0 0.0
    %1072 = vmatpush2.msra.mxu0 0.0
    %1073 = vmatprep.subr.mxu0 0.0
    %1074 = vmatpush2.msra.mxu0 0.0
    %1075 = vmatprep.subr.mxu0 0.0
    %1076 = vmatpush2.msra.mxu0 0.0
    %1077 = vmatprep.subr.mxu0 0.0
    %1078 = vmatpush2.msra.mxu0 0.0
    %1079 = vmatprep.subr.mxu0 0.0
    %1080 = vmatpush2.msra.mxu0 0.0
    %1081 = vmatprep.mubr.f32.mxu0 0.0
    %1082 = vmatmul.mubr.f32.gmra.mxu0 %v1011
    %v1083 = vpop.f32.mrf.mxu0
    %v1084 = vadd.f32 0.0, %v1083
    %v1085 = vpop.f32.mrf.mxu0
    %v1086 = vadd.f32 0.0, %v1085
    %1087 = vdwg.mxu0
    %1088 = vmatprep.subr.mxu0 %v531
    %1089 = vmatpush1.msra.mxu0 %v530
    %1090 = vmatprep.subr.mxu0 %v526
    %1091 = vmatpush1.msra.mxu0 %v525
    %1092 = vmatprep.subr.mxu0 %v521
    %1093 = vmatpush1.msra.mxu0 %v520
    %1094 = vmatprep.subr.mxu0 %v516
    %1095 = vmatpush1.msra.mxu0 %v515
    %1096 = vmatprep.subr.mxu0 %v511
    %1097 = vmatpush1.msra.mxu0 %v510
    %1098 = vmatprep.subr.mxu0 %v506
    %1099 = vmatpush1.msra.mxu0 %v505
    %1100 = vmatprep.subr.mxu0 %v501
    %1101 = vmatpush1.msra.mxu0 %v500
    %1102 = vmatprep.subr.mxu0 %v496
    %1103 = vmatpush1.msra.mxu0 %v495
    %1104 = vmatprep.subr.mxu0 %v491
    %1105 = vmatpush1.msra.mxu0 %v490
    %1106 = vmatprep.subr.mxu0 %v486
    %1107 = vmatpush1.msra.mxu0 %v485
    %1108 = vmatprep.subr.mxu0 %v481
    %1109 = vmatpush1.msra.mxu0 %v480
    %1110 = vmatprep.subr.mxu0 %v476
    %1111 = vmatpush1.msra.mxu0 %v475
    %1112 = vmatprep.subr.mxu0 %v471
    %1113 = vmatpush1.msra.mxu0 %v470
    %1114 = vmatprep.subr.mxu0 %v466
    %1115 = vmatpush1.msra.mxu0 %v465
    %1116 = vmatprep.subr.mxu0 %v461
    %1117 = vmatpush1.msra.mxu0 %v460
    %1118 = vmatprep.subr.mxu0 %v456
    %1119 = vmatpush1.msra.mxu0 %v455
    %1120 = vmatprep.subr.mxu0 0.0
    %1121 = vmatpush2.msra.mxu0 0.0
    %1122 = vmatprep.subr.mxu0 0.0
    %1123 = vmatpush2.msra.mxu0 0.0
    %1124 = vmatprep.subr.mxu0 0.0
    %1125 = vmatpush2.msra.mxu0 0.0
    %1126 = vmatprep.subr.mxu0 0.0
    %1127 = vmatpush2.msra.mxu0 0.0
    %1128 = vmatprep.subr.mxu0 0.0
    %1129 = vmatpush2.msra.mxu0 0.0
    %1130 = vmatprep.subr.mxu0 0.0
    %1131 = vmatpush2.msra.mxu0 0.0
    %1132 = vmatprep.subr.mxu0 0.0
    %1133 = vmatpush2.msra.mxu0 0.0
    %1134 = vmatprep.subr.mxu0 0.0
    %1135 = vmatpush2.msra.mxu0 0.0
    %1136 = vmatprep.subr.mxu0 0.0
    %1137 = vmatpush2.msra.mxu0 0.0
    %1138 = vmatprep.subr.mxu0 0.0
    %1139 = vmatpush2.msra.mxu0 0.0
    %1140 = vmatprep.subr.mxu0 0.0
    %1141 = vmatpush2.msra.mxu0 0.0
    %1142 = vmatprep.subr.mxu0 0.0
    %1143 = vmatpush2.msra.mxu0 0.0
    %1144 = vmatprep.subr.mxu0 0.0
    %1145 = vmatpush2.msra.mxu0 0.0
    %1146 = vmatprep.subr.mxu0 0.0
    %1147 = vmatpush2.msra.mxu0 0.0
    %1148 = vmatprep.subr.mxu0 0.0
    %1149 = vmatpush2.msra.mxu0 0.0
    %1150 = vmatprep.subr.mxu0 0.0
    %1151 = vmatpush2.msra.mxu0 0.0
    %1152 = vmatprep.mubr.f32.mxu0 0.0
    %1153 = vmatmul.mubr.f32.gmra.mxu0 %v1011
    %v1154 = vpop.f32.mrf.mxu0
    %v1155 = vadd.f32 0.0, %v1154
    %v1156 = vpop.f32.mrf.mxu0
    %v1157 = vadd.f32 0.0, %v1156
    %1158 = vdwg.mxu0
    %1159 = vmatprep.subr.mxu0 0.0
    %1160 = vmatpush1.msra.mxu0 %v532
    %1161 = vmatprep.subr.mxu0 0.0
    %1162 = vmatpush1.msra.mxu0 %v527
    %1163 = vmatprep.subr.mxu0 0.0
    %1164 = vmatpush1.msra.mxu0 %v522
    %1165 = vmatprep.subr.mxu0 0.0
    %1166 = vmatpush1.msra.mxu0 %v517
    %1167 = vmatprep.subr.mxu0 0.0
    %1168 = vmatpush1.msra.mxu0 %v512
    %1169 = vmatprep.subr.mxu0 0.0
    %1170 = vmatpush1.msra.mxu0 %v507
    %1171 = vmatprep.subr.mxu0 0.0
    %1172 = vmatpush1.msra.mxu0 %v502
    %1173 = vmatprep.subr.mxu0 0.0
    %1174 = vmatpush1.msra.mxu0 %v497
    %1175 = vmatprep.subr.mxu0 0.0
    %1176 = vmatpush1.msra.mxu0 %v492
    %1177 = vmatprep.subr.mxu0 0.0
    %1178 = vmatpush1.msra.mxu0 %v487
    %1179 = vmatprep.subr.mxu0 0.0
    %1180 = vmatpush1.msra.mxu0 %v482
    %1181 = vmatprep.subr.mxu0 0.0
    %1182 = vmatpush1.msra.mxu0 %v477
    %1183 = vmatprep.subr.mxu0 0.0
    %1184 = vmatpush1.msra.mxu0 %v472
    %1185 = vmatprep.subr.mxu0 0.0
    %1186 = vmatpush1.msra.mxu0 %v467
    %1187 = vmatprep.subr.mxu0 0.0
    %1188 = vmatpush1.msra.mxu0 %v462
    %1189 = vmatprep.subr.mxu0 0.0
    %1190 = vmatpush1.msra.mxu0 %v457
    %1191 = vmatprep.subr.mxu0 0.0
    %1192 = vmatpush2.msra.mxu0 0.0
    %1193 = vmatprep.subr.mxu0 0.0
    %1194 = vmatpush2.msra.mxu0 0.0
    %1195 = vmatprep.subr.mxu0 0.0
    %1196 = vmatpush2.msra.mxu0 0.0
    %1197 = vmatprep.subr.mxu0 0.0
    %1198 = vmatpush2.msra.mxu0 0.0
    %1199 = vmatprep.subr.mxu0 0.0
    %1200 = vmatpush2.msra.mxu0 0.0
    %1201 = vmatprep.subr.mxu0 0.0
    %1202 = vmatpush2.msra.mxu0 0.0
    %1203 = vmatprep.subr.mxu0 0.0
    %1204 = vmatpush2.msra.mxu0 0.0
    %1205 = vmatprep.subr.mxu0 0.0
    %1206 = vmatpush2.msra.mxu0 0.0
    %1207 = vmatprep.subr.mxu0 0.0
    %1208 = vmatpush2.msra.mxu0 0.0
    %1209 = vmatprep.subr.mxu0 0.0
    %1210 = vmatpush2.msra.mxu0 0.0
    %1211 = vmatprep.subr.mxu0 0.0
    %1212 = vmatpush2.msra.mxu0 0.0
    %1213 = vmatprep.subr.mxu0 0.0
    %1214 = vmatpush2.msra.mxu0 0.0
    %1215 = vmatprep.subr.mxu0 0.0
    %1216 = vmatpush2.msra.mxu0 0.0
    %1217 = vmatprep.subr.mxu0 0.0
    %1218 = vmatpush2.msra.mxu0 0.0
    %1219 = vmatprep.subr.mxu0 0.0
    %1220 = vmatpush2.msra.mxu0 0.0
    %1221 = vmatprep.subr.mxu0 0.0
    %1222 = vmatpush2.msra.mxu0 0.0
    %1223 = vmatprep.mubr.f32.mxu0 0.0
    %1224 = vmatmul.mubr.f32.gmra.mxu0 %v1011
    %v1225 = vpop.f32.mrf.mxu0
    %v1226 = vadd.f32 0.0, %v1225
    %v1227 = vpop.f32.mrf.mxu0
    %1228 = vdwg.mxu0
    %v1234 = vcombine.low %v1084, %v1086
    %v1235 = vcombine.low %v1155, %v1157
    %v1237 = vunpack.c.l.s4 1966171168
    %v1238 = vunpack.c.0.s8 %v1237
    %v1239 = vlaneseq
    %v1240 = vshrl.u32 %v1239, 7
    %v1241 = vsub.s32 %v1238, %v1240
    %v1242 = vrot.slane %v1234, %v1241
    %v1244 = vunpack.c.l.s4 1966171168
    %v1245 = vunpack.c.0.s8 %v1244
    %v1246 = vlaneseq
    %v1247 = vshrl.u32 %v1246, 7
    %v1248 = vsub.s32 %v1245, %v1247
    %v1249 = vrot.slane %v1235, %v1248
    %v1251 = vunpack.c.l.s4 1966171168
    %v1252 = vunpack.c.0.s8 %v1251
    %v1253 = vlaneseq
    %v1254 = vshrl.u32 %v1253, 7
    %v1255 = vsub.s32 %v1252, %v1254
    %v1256 = vrot.slane %v1226, %v1255
    %v1257 = vcombine.low %v1242, %v1249
    %v1259 = vunpack.c.l.s4 1966171168
    %v1260 = vunpack.c.0.s8 %v1259
    %v1261 = vlaneseq
    %v1262 = vshrl.u32 %v1261, 7
    %v1263 = vsub.s32 %v1260, %v1262
    %v1264 = vrot.slane %v1257, %v1263
    %v1266 = vunpack.c.l.s4 1966171168
    %v1267 = vunpack.c.0.s8 %v1266
    %v1268 = vlaneseq
    %v1269 = vshrl.u32 %v1268, 7
    %v1270 = vsub.s32 %v1267, %v1269
    %v1271 = vrot.slane %v1256, %v1270
    %v1272 = vcombine.low %v1264, %v1271
    %v1274 = vadd.f32 %v1016, %v1272
    %v1275 = vxor.u32 %v1274, 2147483648
    %v1276 = vmul.f32 %v1275, 1.442695
    %v1277 = vpow.pop %v1276
    %v1278 = vadd.f32 %v1277, 1.0
    %v1279 = vrcp.pop %v1278
    %v1280 = vmul.f32 1.0, %v1279
    %v1282 = vrot.slane %v1274, 4
    %v1284 = vtanh.pop %v1282
    %v1285 = vmul.f32 %v1280, %v1012
    %v1287 = vrot.slane %v1280, 1
    %v1289 = vmul.f32 %v1287, %v1284
    %v1290 = vadd.f32 %v1285, %v1289
    %1291 = vmatprep.subr.mxu0 0.0
    %1292 = vmatpush1.msra.mxu0 %v548
    %1293 = vmatprep.subr.mxu0 0.0
    %1294 = vmatpush1.msra.mxu0 %v547
    %1295 = vmatprep.subr.mxu0 0.0
    %1296 = vmatpush1.msra.mxu0 %v546
    %1297 = vmatprep.subr.mxu0 0.0
    %1298 = vmatpush1.msra.mxu0 %v545
    %1299 = vmatprep.subr.mxu0 0.0
    %1300 = vmatpush1.msra.mxu0 %v544
    %1301 = vmatprep.subr.mxu0 0.0
    %1302 = vmatpush1.msra.mxu0 %v543
    %1303 = vmatprep.subr.mxu0 0.0
    %1304 = vmatpush1.msra.mxu0 %v542
    %1305 = vmatprep.subr.mxu0 0.0
    %1306 = vmatpush1.msra.mxu0 %v541
    %1307 = vmatprep.subr.mxu0 0.0
    %1308 = vmatpush1.msra.mxu0 %v540
    %1309 = vmatprep.subr.mxu0 0.0
    %1310 = vmatpush1.msra.mxu0 %v539
    %1311 = vmatprep.subr.mxu0 0.0
    %1312 = vmatpush1.msra.mxu0 %v538
    %1313 = vmatprep.subr.mxu0 0.0
    %1314 = vmatpush1.msra.mxu0 %v537
    %1315 = vmatprep.subr.mxu0 0.0
    %1316 = vmatpush1.msra.mxu0 %v536
    %1317 = vmatprep.subr.mxu0 0.0
    %1318 = vmatpush1.msra.mxu0 %v535
    %1319 = vmatprep.subr.mxu0 0.0
    %1320 = vmatpush1.msra.mxu0 %v534
    %1321 = vmatprep.subr.mxu0 0.0
    %1322 = vmatpush1.msra.mxu0 %v533
    %1323 = vmatprep.subr.mxu0 0.0
    %1324 = vmatpush2.msra.mxu0 0.0
    %1325 = vmatprep.subr.mxu0 0.0
    %1326 = vmatpush2.msra.mxu0 0.0
    %1327 = vmatprep.subr.mxu0 0.0
    %1328 = vmatpush2.msra.mxu0 0.0
    %1329 = vmatprep.subr.mxu0 0.0
    %1330 = vmatpush2.msra.mxu0 0.0
    %1331 = vmatprep.subr.mxu0 0.0
    %1332 = vmatpush2.msra.mxu0 0.0
    %1333 = vmatprep.subr.mxu0 0.0
    %1334 = vmatpush2.msra.mxu0 0.0
    %1335 = vmatprep.subr.mxu0 0.0
    %1336 = vmatpush2.msra.mxu0 0.0
    %1337 = vmatprep.subr.mxu0 0.0
    %1338 = vmatpush2.msra.mxu0 0.0
    %1339 = vmatprep.subr.mxu0 0.0
    %1340 = vmatpush2.msra.mxu0 0.0
    %1341 = vmatprep.subr.mxu0 0.0
    %1342 = vmatpush2.msra.mxu0 0.0
    %1343 = vmatprep.subr.mxu0 0.0
    %1344 = vmatpush2.msra.mxu0 0.0
    %1345 = vmatprep.subr.mxu0 0.0
    %1346 = vmatpush2.msra.mxu0 0.0
    %1347 = vmatprep.subr.mxu0 0.0
    %1348 = vmatpush2.msra.mxu0 0.0
    %1349 = vmatprep.subr.mxu0 0.0
    %1350 = vmatpush2.msra.mxu0 0.0
    %1351 = vmatprep.subr.mxu0 0.0
    %1352 = vmatpush2.msra.mxu0 0.0
    %1353 = vmatprep.subr.mxu0 0.0
    %1354 = vmatpush2.msra.mxu0 0.0
    %1355 = vmatprep.mubr.f32.mxu0 0.0
    %1356 = vmatmul.mubr.f32.gmra.mxu0 %v1290
    %v1357 = vpop.f32.mrf.mxu0
    %v1358 = vadd.f32 %v549, %v1357
    %v1359 = vpop.f32.mrf.mxu0
    %1360 = vdwg.mxu0
    %v1361 = vsel %vm915, %v1358, -inf
    %1362 = vmax.xlane.f32.xlu0 %v1361
    %v1363 = vpop.xlane.xlu0 %1362
    %vm1364 = vcmp.ge.f32.partialorder %v1358, %v1363
    %v1365 = vsel %vm1364, 1, 0
    %v1366 = vcvt.s32.f32 %v1365
    %v1367 = vsel %vm915, %v1366, 0.0
    %1368 = vadd.xlane.f32.xlu0 %v1367
    %v1369 = vpop.xlane.xlu0 %1368
    %1370 = vmatprep.subr.mxu0 0.0
    %1371 = vmatpush1.msra.mxu0 %v565
    %1372 = vmatprep.subr.mxu0 0.0
    %1373 = vmatpush1.msra.mxu0 %v564
    %1374 = vmatprep.subr.mxu0 0.0
    %1375 = vmatpush1.msra.mxu0 %v563
    %1376 = vmatprep.subr.mxu0 0.0
    %1377 = vmatpush1.msra.mxu0 %v562
    %1378 = vmatprep.subr.mxu0 0.0
    %1379 = vmatpush1.msra.mxu0 %v561
    %1380 = vmatprep.subr.mxu0 0.0
    %1381 = vmatpush1.msra.mxu0 %v560
    %1382 = vmatprep.subr.mxu0 0.0
    %1383 = vmatpush1.msra.mxu0 %v559
    %1384 = vmatprep.subr.mxu0 0.0
    %1385 = vmatpush1.msra.mxu0 %v558
    %1386 = vmatprep.subr.mxu0 0.0
    %1387 = vmatpush1.msra.mxu0 %v557
    %1388 = vmatprep.subr.mxu0 0.0
    %1389 = vmatpush1.msra.mxu0 %v556
    %1390 = vmatprep.subr.mxu0 0.0
    %1391 = vmatpush1.msra.mxu0 %v555
    %1392 = vmatprep.subr.mxu0 0.0
    %1393 = vmatpush1.msra.mxu0 %v554
    %1394 = vmatprep.subr.mxu0 0.0
    %1395 = vmatpush1.msra.mxu0 %v553
    %1396 = vmatprep.subr.mxu0 0.0
    %1397 = vmatpush1.msra.mxu0 %v552
    %1398 = vmatprep.subr.mxu0 0.0
    %1399 = vmatpush1.msra.mxu0 %v551
    %1400 = vmatprep.subr.mxu0 0.0
    %1401 = vmatpush1.msra.mxu0 %v550
    %1402 = vmatprep.subr.mxu0 0.0
    %1403 = vmatpush2.msra.mxu0 0.0
    %1404 = vmatprep.subr.mxu0 0.0
    %1405 = vmatpush2.msra.mxu0 0.0
    %1406 = vmatprep.subr.mxu0 0.0
    %1407 = vmatpush2.msra.mxu0 0.0
    %1408 = vmatprep.subr.mxu0 0.0
    %1409 = vmatpush2.msra.mxu0 0.0
    %1410 = vmatprep.subr.mxu0 0.0
    %1411 = vmatpush2.msra.mxu0 0.0
    %1412 = vmatprep.subr.mxu0 0.0
    %1413 = vmatpush2.msra.mxu0 0.0
    %1414 = vmatprep.subr.mxu0 0.0
    %1415 = vmatpush2.msra.mxu0 0.0
    %1416 = vmatprep.subr.mxu0 0.0
    %1417 = vmatpush2.msra.mxu0 0.0
    %1418 = vmatprep.subr.mxu0 0.0
    %1419 = vmatpush2.msra.mxu0 0.0
    %1420 = vmatprep.subr.mxu0 0.0
    %1421 = vmatpush2.msra.mxu0 0.0
    %1422 = vmatprep.subr.mxu0 0.0
    %1423 = vmatpush2.msra.mxu0 0.0
    %1424 = vmatprep.subr.mxu0 0.0
    %1425 = vmatpush2.msra.mxu0 0.0
    %1426 = vmatprep.subr.mxu0 0.0
    %1427 = vmatpush2.msra.mxu0 0.0
    %1428 = vmatprep.subr.mxu0 0.0
    %1429 = vmatpush2.msra.mxu0 0.0
    %1430 = vmatprep.subr.mxu0 0.0
    %1431 = vmatpush2.msra.mxu0 0.0
    %1432 = vmatprep.subr.mxu0 0.0
    %1433 = vmatpush2.msra.mxu0 0.0
    %1434 = vmatprep.mubr.f32.mxu0 0.0
    %1435 = vmatmul.mubr.f32.gmra.mxu0 %v1366
    %v1436 = vpop.f32.mrf.mxu0
    %v1437 = vadd.f32 0.0, %v1436
    %v1438 = vpop.f32.mrf.mxu0
    %1439 = vdwg.mxu0
    %v1440 = vrcp.pop %v1369
    %v1441 = vmul.f32 %v1437, %v1440
    %v1442 = vrot.slane %v1280, 3
    %v1444 = vmul.f32 %v1442, %v1441
    %v1445 = vadd.f32 %v1290, %v1444
    %v1446 = vtanh.pop %v1445
    %v1447 = vrot.slane %v1280, 2
    %v1449 = vmul.f32 %v1447, %v1446
    %1450 = vst [vmem:[#allocation3 + $0x1] sm:$0x1] %v1449
    %s1451 = sadd.s32 %s1006, 1
    %p1452 = scmp.lt.s32.totalorder %s1451, 8
    %s1453 = scalar_select %p1452, 1, 0
    %v1454 = vstv %s1453
    %vm1455 = vcmp.eq.s32.totalorder %v1454, 1
    %v1456 = vsel %vm1455, %v1449, %v1011
    %v1457 = vsel %vm1455, %v1445, %v1012
    %s1458 = scalar_lea.vmem [#allocation2], 2
    %v1459 = vld [vmem:[%s1458] ss:$8 sm:$0xf]
    %v1460 = vld [vmem:[%s1458] ss:$8 sm:$0x10]
    %v1461 = vor.u32 %v1459, %v1460
    %1462 = vmatprep.subr.mxu0 %v529
    %1463 = vmatpush1.msra.mxu0 %v528
    %1464 = vmatprep.subr.mxu0 %v524
    %1465 = vmatpush1.msra.mxu0 %v523
    %1466 = vmatprep.subr.mxu0 %v519
    %1467 = vmatpush1.msra.mxu0 %v518
    %1468 = vmatprep.subr.mxu0 %v514
    %1469 = vmatpush1.msra.mxu0 %v513
    %1470 = vmatprep.subr.mxu0 %v509
    %1471 = vmatpush1.msra.mxu0 %v508
    %1472 = vmatprep.subr.mxu0 %v504
    %1473 = vmatpush1.msra.mxu0 %v503
    %1474 = vmatprep.subr.mxu0 %v499
    %1475 = vmatpush1.msra.mxu0 %v498
    %1476 = vmatprep.subr.mxu0 %v494
    %1477 = vmatpush1.msra.mxu0 %v493
    %1478 = vmatprep.subr.mxu0 %v489
    %1479 = vmatpush1.msra.mxu0 %v488
    %1480 = vmatprep.subr.mxu0 %v484
    %1481 = vmatpush1.msra.mxu0 %v483
    %1482 = vmatprep.subr.mxu0 %v479
    %1483 = vmatpush1.msra.mxu0 %v478
    %1484 = vmatprep.subr.mxu0 %v474
    %1485 = vmatpush1.msra.mxu0 %v473
    %1486 = vmatprep.subr.mxu0 %v469
    %1487 = vmatpush1.msra.mxu0 %v468
    %1488 = vmatprep.subr.mxu0 %v464
    %1489 = vmatpush1.msra.mxu0 %v463
    %1490 = vmatprep.subr.mxu0 %v459
    %1491 = vmatpush1.msra.mxu0 %v458
    %1492 = vmatprep.subr.mxu0 %v454
    %1493 = vmatpush1.msra.mxu0 %v453
    %1494 = vmatprep.subr.mxu0 0.0
    %1495 = vmatpush2.msra.mxu0 0.0
    %1496 = vmatprep.subr.mxu0 0.0
    %1497 = vmatpush2.msra.mxu0 0.0
    %1498 = vmatprep.subr.mxu0 0.0
    %1499 = vmatpush2.msra.mxu0 0.0
    %1500 = vmatprep.subr.mxu0 0.0
    %1501 = vmatpush2.msra.mxu0 0.0
    %1502 = vmatprep.subr.mxu0 0.0
    %1503 = vmatpush2.msra.mxu0 0.0
    %1504 = vmatprep.subr.mxu0 0.0
    %1505 = vmatpush2.msra.mxu0 0.0
    %1506 = vmatprep.subr.mxu0 0.0
    %1507 = vmatpush2.msra.mxu0 0.0
    %1508 = vmatprep.subr.mxu0 0.0
    %1509 = vmatpush2.msra.mxu0 0.0
    %1510 = vmatprep.subr.mxu0 0.0
    %1511 = vmatpush2.msra.mxu0 0.0
    %1512 = vmatprep.subr.mxu0 0.0
    %1513 = vmatpush2.msra.mxu0 0.0
    %1514 = vmatprep.subr.mxu0 0.0
    %1515 = vmatpush2.msra.mxu0 0.0
    %1516 = vmatprep.subr.mxu0 0.0
    %1517 = vmatpush2.msra.mxu0 0.0
    %1518 = vmatprep.subr.mxu0 0.0
    %1519 = vmatpush2.msra.mxu0 0.0
    %1520 = vmatprep.subr.mxu0 0.0
    %1521 = vmatpush2.msra.mxu0 0.0
    %1522 = vmatprep.subr.mxu0 0.0
    %1523 = vmatpush2.msra.mxu0 0.0
    %1524 = vmatprep.subr.mxu0 0.0
    %1525 = vmatpush2.msra.mxu0 0.0
    %1526 = vmatprep.mubr.f32.mxu0 0.0
    %1527 = vmatmul.mubr.f32.gmra.mxu0 %v1456
    %v1528 = vpop.f32.mrf.mxu0
    %v1529 = vadd.f32 0.0, %v1528
    %v1530 = vpop.f32.mrf.mxu0
    %v1531 = vadd.f32 0.0, %v1530
    %1532 = vdwg.mxu0
    %1533 = vmatprep.subr.mxu0 %v531
    %1534 = vmatpush1.msra.mxu0 %v530
    %1535 = vmatprep.subr.mxu0 %v526
    %1536 = vmatpush1.msra.mxu0 %v525
    %1537 = vmatprep.subr.mxu0 %v521
    %1538 = vmatpush1.msra.mxu0 %v520
    %1539 = vmatprep.subr.mxu0 %v516
    %1540 = vmatpush1.msra.mxu0 %v515
    %1541 = vmatprep.subr.mxu0 %v511
    %1542 = vmatpush1.msra.mxu0 %v510
    %1543 = vmatprep.subr.mxu0 %v506
    %1544 = vmatpush1.msra.mxu0 %v505
    %1545 = vmatprep.subr.mxu0 %v501
    %1546 = vmatpush1.msra.mxu0 %v500
    %1547 = vmatprep.subr.mxu0 %v496
    %1548 = vmatpush1.msra.mxu0 %v495
    %1549 = vmatprep.subr.mxu0 %v491
    %1550 = vmatpush1.msra.mxu0 %v490
    %1551 = vmatprep.subr.mxu0 %v486
    %1552 = vmatpush1.msra.mxu0 %v485
    %1553 = vmatprep.subr.mxu0 %v481
    %1554 = vmatpush1.msra.mxu0 %v480
    %1555 = vmatprep.subr.mxu0 %v476
    %1556 = vmatpush1.msra.mxu0 %v475
    %1557 = vmatprep.subr.mxu0 %v471
    %1558 = vmatpush1.msra.mxu0 %v470
    %1559 = vmatprep.subr.mxu0 %v466
    %1560 = vmatpush1.msra.mxu0 %v465
    %1561 = vmatprep.subr.mxu0 %v461
    %1562 = vmatpush1.msra.mxu0 %v460
    %1563 = vmatprep.subr.mxu0 %v456
    %1564 = vmatpush1.msra.mxu0 %v455
    %1565 = vmatprep.subr.mxu0 0.0
    %1566 = vmatpush2.msra.mxu0 0.0
    %1567 = vmatprep.subr.mxu0 0.0
    %1568 = vmatpush2.msra.mxu0 0.0
    %1569 = vmatprep.subr.mxu0 0.0
    %1570 = vmatpush2.msra.mxu0 0.0
    %1571 = vmatprep.subr.mxu0 0.0
    %1572 = vmatpush2.msra.mxu0 0.0
    %1573 = vmatprep.subr.mxu0 0.0
    %1574 = vmatpush2.msra.mxu0 0.0
    %1575 = vmatprep.subr.mxu0 0.0
    %1576 = vmatpush2.msra.mxu0 0.0
    %1577 = vmatprep.subr.mxu0 0.0
    %1578 = vmatpush2.msra.mxu0 0.0
    %1579 = vmatprep.subr.mxu0 0.0
    %1580 = vmatpush2.msra.mxu0 0.0
    %1581 = vmatprep.subr.mxu0 0.0
    %1582 = vmatpush2.msra.mxu0 0.0
    %1583 = vmatprep.subr.mxu0 0.0
    %1584 = vmatpush2.msra.mxu0 0.0
    %1585 = vmatprep.subr.mxu0 0.0
    %1586 = vmatpush2.msra.mxu0 0.0
    %1587 = vmatprep.subr.mxu0 0.0
    %1588 = vmatpush2.msra.mxu0 0.0
    %1589 = vmatprep.subr.mxu0 0.0
    %1590 = vmatpush2.msra.mxu0 0.0
    %1591 = vmatprep.subr.mxu0 0.0
    %1592 = vmatpush2.msra.mxu0 0.0
    %1593 = vmatprep.subr.mxu0 0.0
    %1594 = vmatpush2.msra.mxu0 0.0
    %1595 = vmatprep.subr.mxu0 0.0
    %1596 = vmatpush2.msra.mxu0 0.0
    %1597 = vmatprep.mubr.f32.mxu0 0.0
    %1598 = vmatmul.mubr.f32.gmra.mxu0 %v1456
    %v1599 = vpop.f32.mrf.mxu0
    %v1600 = vadd.f32 0.0, %v1599
    %v1601 = vpop.f32.mrf.mxu0
    %v1602 = vadd.f32 0.0, %v1601
    %1603 = vdwg.mxu0
    %1604 = vmatprep.subr.mxu0 0.0
    %1605 = vmatpush1.msra.mxu0 %v532
    %1606 = vmatprep.subr.mxu0 0.0
    %1607 = vmatpush1.msra.mxu0 %v527
    %1608 = vmatprep.subr.mxu0 0.0
    %1609 = vmatpush1.msra.mxu0 %v522
    %1610 = vmatprep.subr.mxu0 0.0
    %1611 = vmatpush1.msra.mxu0 %v517
    %1612 = vmatprep.subr.mxu0 0.0
    %1613 = vmatpush1.msra.mxu0 %v512
    %1614 = vmatprep.subr.mxu0 0.0
    %1615 = vmatpush1.msra.mxu0 %v507
    %1616 = vmatprep.subr.mxu0 0.0
    %1617 = vmatpush1.msra.mxu0 %v502
    %1618 = vmatprep.subr.mxu0 0.0
    %1619 = vmatpush1.msra.mxu0 %v497
    %1620 = vmatprep.subr.mxu0 0.0
    %1621 = vmatpush1.msra.mxu0 %v492
    %1622 = vmatprep.subr.mxu0 0.0
    %1623 = vmatpush1.msra.mxu0 %v487
    %1624 = vmatprep.subr.mxu0 0.0
    %1625 = vmatpush1.msra.mxu0 %v482
    %1626 = vmatprep.subr.mxu0 0.0
    %1627 = vmatpush1.msra.mxu0 %v477
    %1628 = vmatprep.subr.mxu0 0.0
    %1629 = vmatpush1.msra.mxu0 %v472
    %1630 = vmatprep.subr.mxu0 0.0
    %1631 = vmatpush1.msra.mxu0 %v467
    %1632 = vmatprep.subr.mxu0 0.0
    %1633 = vmatpush1.msra.mxu0 %v462
    %1634 = vmatprep.subr.mxu0 0.0
    %1635 = vmatpush1.msra.mxu0 %v457
    %1636 = vmatprep.subr.mxu0 0.0
    %1637 = vmatpush2.msra.mxu0 0.0
    %1638 = vmatprep.subr.mxu0 0.0
    %1639 = vmatpush2.msra.mxu0 0.0
    %1640 = vmatprep.subr.mxu0 0.0
    %1641 = vmatpush2.msra.mxu0 0.0
    %1642 = vmatprep.subr.mxu0 0.0
    %1643 = vmatpush2.msra.mxu0 0.0
    %1644 = vmatprep.subr.mxu0 0.0
    %1645 = vmatpush2.msra.mxu0 0.0
    %1646 = vmatprep.subr.mxu0 0.0
    %1647 = vmatpush2.msra.mxu0 0.0
    %1648 = vmatprep.subr.mxu0 0.0
    %1649 = vmatpush2.msra.mxu0 0.0
    %1650 = vmatprep.subr.mxu0 0.0
    %1651 = vmatpush2.msra.mxu0 0.0
    %1652 = vmatprep.subr.mxu0 0.0
    %1653 = vmatpush2.msra.mxu0 0.0
    %1654 = vmatprep.subr.mxu0 0.0
    %1655 = vmatpush2.msra.mxu0 0.0
    %1656 = vmatprep.subr.mxu0 0.0
    %1657 = vmatpush2.msra.mxu0 0.0
    %1658 = vmatprep.subr.mxu0 0.0
    %1659 = vmatpush2.msra.mxu0 0.0
    %1660 = vmatprep.subr.mxu0 0.0
    %1661 = vmatpush2.msra.mxu0 0.0
    %1662 = vmatprep.subr.mxu0 0.0
    %1663 = vmatpush2.msra.mxu0 0.0
    %1664 = vmatprep.subr.mxu0 0.0
    %1665 = vmatpush2.msra.mxu0 0.0
    %1666 = vmatprep.subr.mxu0 0.0
    %1667 = vmatpush2.msra.mxu0 0.0
    %1668 = vmatprep.mubr.f32.mxu0 0.0
    %1669 = vmatmul.mubr.f32.gmra.mxu0 %v1456
    %v1670 = vpop.f32.mrf.mxu0
    %v1671 = vadd.f32 0.0, %v1670
    %v1672 = vpop.f32.mrf.mxu0
    %1673 = vdwg.mxu0
    %v1679 = vcombine.low %v1529, %v1531
    %v1680 = vcombine.low %v1600, %v1602
    %v1682 = vunpack.c.l.s4 1966171168
    %v1683 = vunpack.c.0.s8 %v1682
    %v1684 = vlaneseq
    %v1685 = vshrl.u32 %v1684, 7
    %v1686 = vsub.s32 %v1683, %v1685
    %v1687 = vrot.slane %v1679, %v1686
    %v1689 = vunpack.c.l.s4 1966171168
    %v1690 = vunpack.c.0.s8 %v1689
    %v1691 = vlaneseq
    %v1692 = vshrl.u32 %v1691, 7
    %v1693 = vsub.s32 %v1690, %v1692
    %v1694 = vrot.slane %v1680, %v1693
    %v1696 = vunpack.c.l.s4 1966171168
    %v1697 = vunpack.c.0.s8 %v1696
    %v1698 = vlaneseq
    %v1699 = vshrl.u32 %v1698, 7
    %v1700 = vsub.s32 %v1697, %v1699
    %v1701 = vrot.slane %v1671, %v1700
    %v1702 = vcombine.low %v1687, %v1694
    %v1704 = vunpack.c.l.s4 1966171168
    %v1705 = vunpack.c.0.s8 %v1704
    %v1706 = vlaneseq
    %v1707 = vshrl.u32 %v1706, 7
    %v1708 = vsub.s32 %v1705, %v1707
    %v1709 = vrot.slane %v1702, %v1708
    %v1711 = vunpack.c.l.s4 1966171168
    %v1712 = vunpack.c.0.s8 %v1711
    %v1713 = vlaneseq
    %v1714 = vshrl.u32 %v1713, 7
    %v1715 = vsub.s32 %v1712, %v1714
    %v1716 = vrot.slane %v1701, %v1715
    %v1717 = vcombine.low %v1709, %v1716
    %v1719 = vadd.f32 %v1461, %v1717
    %v1720 = vxor.u32 %v1719, 2147483648
    %v1721 = vmul.f32 %v1720, 1.442695
    %v1722 = vpow.pop %v1721
    %v1723 = vadd.f32 %v1722, 1.0
    %v1724 = vrcp.pop %v1723
    %v1725 = vmul.f32 1.0, %v1724
    %v1727 = vrot.slane %v1719, 4
    %v1729 = vtanh.pop %v1727
    %v1730 = vmul.f32 %v1725, %v1457
    %v1732 = vrot.slane %v1725, 1
    %v1734 = vmul.f32 %v1732, %v1729
    %v1735 = vadd.f32 %v1730, %v1734
    %1736 = vmatprep.subr.mxu0 0.0
    %1737 = vmatpush1.msra.mxu0 %v548
    %1738 = vmatprep.subr.mxu0 0.0
    %1739 = vmatpush1.msra.mxu0 %v547
    %1740 = vmatprep.subr.mxu0 0.0
    %1741 = vmatpush1.msra.mxu0 %v546
    %1742 = vmatprep.subr.mxu0 0.0
    %1743 = vmatpush1.msra.mxu0 %v545
    %1744 = vmatprep.subr.mxu0 0.0
    %1745 = vmatpush1.msra.mxu0 %v544
    %1746 = vmatprep.subr.mxu0 0.0
    %1747 = vmatpush1.msra.mxu0 %v543
    %1748 = vmatprep.subr.mxu0 0.0
    %1749 = vmatpush1.msra.mxu0 %v542
    %1750 = vmatprep.subr.mxu0 0.0
    %1751 = vmatpush1.msra.mxu0 %v541
    %1752 = vmatprep.subr.mxu0 0.0
    %1753 = vmatpush1.msra.mxu0 %v540
    %1754 = vmatprep.subr.mxu0 0.0
    %1755 = vmatpush1.msra.mxu0 %v539
    %1756 = vmatprep.subr.mxu0 0.0
    %1757 = vmatpush1.msra.mxu0 %v538
    %1758 = vmatprep.subr.mxu0 0.0
    %1759 = vmatpush1.msra.mxu0 %v537
    %1760 = vmatprep.subr.mxu0 0.0
    %1761 = vmatpush1.msra.mxu0 %v536
    %1762 = vmatprep.subr.mxu0 0.0
    %1763 = vmatpush1.msra.mxu0 %v535
    %1764 = vmatprep.subr.mxu0 0.0
    %1765 = vmatpush1.msra.mxu0 %v534
    %1766 = vmatprep.subr.mxu0 0.0
    %1767 = vmatpush1.msra.mxu0 %v533
    %1768 = vmatprep.subr.mxu0 0.0
    %1769 = vmatpush2.msra.mxu0 0.0
    %1770 = vmatprep.subr.mxu0 0.0
    %1771 = vmatpush2.msra.mxu0 0.0
    %1772 = vmatprep.subr.mxu0 0.0
    %1773 = vmatpush2.msra.mxu0 0.0
    %1774 = vmatprep.subr.mxu0 0.0
    %1775 = vmatpush2.msra.mxu0 0.0
    %1776 = vmatprep.subr.mxu0 0.0
    %1777 = vmatpush2.msra.mxu0 0.0
    %1778 = vmatprep.subr.mxu0 0.0
    %1779 = vmatpush2.msra.mxu0 0.0
    %1780 = vmatprep.subr.mxu0 0.0
    %1781 = vmatpush2.msra.mxu0 0.0
    %1782 = vmatprep.subr.mxu0 0.0
    %1783 = vmatpush2.msra.mxu0 0.0
    %1784 = vmatprep.subr.mxu0 0.0
    %1785 = vmatpush2.msra.mxu0 0.0
    %1786 = vmatprep.subr.mxu0 0.0
    %1787 = vmatpush2.msra.mxu0 0.0
    %1788 = vmatprep.subr.mxu0 0.0
    %1789 = vmatpush2.msra.mxu0 0.0
    %1790 = vmatprep.subr.mxu0 0.0
    %1791 = vmatpush2.msra.mxu0 0.0
    %1792 = vmatprep.subr.mxu0 0.0
    %1793 = vmatpush2.msra.mxu0 0.0
    %1794 = vmatprep.subr.mxu0 0.0
    %1795 = vmatpush2.msra.mxu0 0.0
    %1796 = vmatprep.subr.mxu0 0.0
    %1797 = vmatpush2.msra.mxu0 0.0
    %1798 = vmatprep.subr.mxu0 0.0
    %1799 = vmatpush2.msra.mxu0 0.0
    %1800 = vmatprep.mubr.f32.mxu0 0.0
    %1801 = vmatmul.mubr.f32.gmra.mxu0 %v1735
    %v1802 = vpop.f32.mrf.mxu0
    %v1803 = vadd.f32 %v549, %v1802
    %v1804 = vpop.f32.mrf.mxu0
    %1805 = vdwg.mxu0
    %v1806 = vsel %vm915, %v1803, -inf
    %1807 = vmax.xlane.f32.xlu0 %v1806
    %v1808 = vpop.xlane.xlu0 %1807
    %vm1809 = vcmp.ge.f32.partialorder %v1803, %v1808
    %v1810 = vsel %vm1809, 1, 0
    %v1811 = vcvt.s32.f32 %v1810
    %v1812 = vsel %vm915, %v1811, 0.0
    %1813 = vadd.xlane.f32.xlu0 %v1812
    %v1814 = vpop.xlane.xlu0 %1813
    %1815 = vmatprep.subr.mxu0 0.0
    %1816 = vmatpush1.msra.mxu0 %v565
    %1817 = vmatprep.subr.mxu0 0.0
    %1818 = vmatpush1.msra.mxu0 %v564
    %1819 = vmatprep.subr.mxu0 0.0
    %1820 = vmatpush1.msra.mxu0 %v563
    %1821 = vmatprep.subr.mxu0 0.0
    %1822 = vmatpush1.msra.mxu0 %v562
    %1823 = vmatprep.subr.mxu0 0.0
    %1824 = vmatpush1.msra.mxu0 %v561
    %1825 = vmatprep.subr.mxu0 0.0
    %1826 = vmatpush1.msra.mxu0 %v560
    %1827 = vmatprep.subr.mxu0 0.0
    %1828 = vmatpush1.msra.mxu0 %v559
    %1829 = vmatprep.subr.mxu0 0.0
    %1830 = vmatpush1.msra.mxu0 %v558
    %1831 = vmatprep.subr.mxu0 0.0
    %1832 = vmatpush1.msra.mxu0 %v557
    %1833 = vmatprep.subr.mxu0 0.0
    %1834 = vmatpush1.msra.mxu0 %v556
    %1835 = vmatprep.subr.mxu0 0.0
    %1836 = vmatpush1.msra.mxu0 %v555
    %1837 = vmatprep.subr.mxu0 0.0
    %1838 = vmatpush1.msra.mxu0 %v554
    %1839 = vmatprep.subr.mxu0 0.0
    %1840 = vmatpush1.msra.mxu0 %v553
    %1841 = vmatprep.subr.mxu0 0.0
    %1842 = vmatpush1.msra.mxu0 %v552
    %1843 = vmatprep.subr.mxu0 0.0
    %1844 = vmatpush1.msra.mxu0 %v551
    %1845 = vmatprep.subr.mxu0 0.0
    %1846 = vmatpush1.msra.mxu0 %v550
    %1847 = vmatprep.subr.mxu0 0.0
    %1848 = vmatpush2.msra.mxu0 0.0
    %1849 = vmatprep.subr.mxu0 0.0
    %1850 = vmatpush2.msra.mxu0 0.0
    %1851 = vmatprep.subr.mxu0 0.0
    %1852 = vmatpush2.msra.mxu0 0.0
    %1853 = vmatprep.subr.mxu0 0.0
    %1854 = vmatpush2.msra.mxu0 0.0
    %1855 = vmatprep.subr.mxu0 0.0
    %1856 = vmatpush2.msra.mxu0 0.0
    %1857 = vmatprep.subr.mxu0 0.0
    %1858 = vmatpush2.msra.mxu0 0.0
    %1859 = vmatprep.subr.mxu0 0.0
    %1860 = vmatpush2.msra.mxu0 0.0
    %1861 = vmatprep.subr.mxu0 0.0
    %1862 = vmatpush2.msra.mxu0 0.0
    %1863 = vmatprep.subr.mxu0 0.0
    %1864 = vmatpush2.msra.mxu0 0.0
    %1865 = vmatprep.subr.mxu0 0.0
    %1866 = vmatpush2.msra.mxu0 0.0
    %1867 = vmatprep.subr.mxu0 0.0
    %1868 = vmatpush2.msra.mxu0 0.0
    %1869 = vmatprep.subr.mxu0 0.0
    %1870 = vmatpush2.msra.mxu0 0.0
    %1871 = vmatprep.subr.mxu0 0.0
    %1872 = vmatpush2.msra.mxu0 0.0
    %1873 = vmatprep.subr.mxu0 0.0
    %1874 = vmatpush2.msra.mxu0 0.0
    %1875 = vmatprep.subr.mxu0 0.0
    %1876 = vmatpush2.msra.mxu0 0.0
    %1877 = vmatprep.subr.mxu0 0.0
    %1878 = vmatpush2.msra.mxu0 0.0
    %1879 = vmatprep.mubr.f32.mxu0 0.0
    %1880 = vmatmul.mubr.f32.gmra.mxu0 %v1811
    %v1881 = vpop.f32.mrf.mxu0
    %v1882 = vadd.f32 0.0, %v1881
    %v1883 = vpop.f32.mrf.mxu0
    %1884 = vdwg.mxu0
    %v1885 = vrcp.pop %v1814
    %v1886 = vmul.f32 %v1882, %v1885
    %v1887 = vrot.slane %v1725, 3
    %v1889 = vmul.f32 %v1887, %v1886
    %v1890 = vadd.f32 %v1735, %v1889
    %v1891 = vtanh.pop %v1890
    %v1892 = vrot.slane %v1725, 2
    %v1894 = vmul.f32 %v1892, %v1891
    %1895 = vst [vmem:[#allocation3 + $0x2] sm:$0x1] %v1894
    %s1896 = sadd.s32 %s1006, 2
    %p1897 = scmp.lt.s32.totalorder %s1896, 8
    %s1898 = scalar_select %p1897, 1, 0
    %v1899 = vstv %s1898
    %vm1900 = vcmp.eq.s32.totalorder %v1899, 1
    %v1901 = vsel %vm1900, %v1894, %v1456
    %v1902 = vsel %vm1900, %v1890, %v1457
    %s1903 = scalar_lea.vmem [#allocation2], 3
    %v1904 = vld [vmem:[%s1903] ss:$8 sm:$0xf]
    %v1905 = vld [vmem:[%s1903] ss:$8 sm:$0x10]
    %v1906 = vor.u32 %v1904, %v1905
    %1907 = vmatprep.subr.mxu0 %v529
    %1908 = vmatpush1.msra.mxu0 %v528
    %1909 = vmatprep.subr.mxu0 %v524
    %1910 = vmatpush1.msra.mxu0 %v523
    %1911 = vmatprep.subr.mxu0 %v519
    %1912 = vmatpush1.msra.mxu0 %v518
    %1913 = vmatprep.subr.mxu0 %v514
    %1914 = vmatpush1.msra.mxu0 %v513
    %1915 = vmatprep.subr.mxu0 %v509
    %1916 = vmatpush1.msra.mxu0 %v508
    %1917 = vmatprep.subr.mxu0 %v504
    %1918 = vmatpush1.msra.mxu0 %v503
    %1919 = vmatprep.subr.mxu0 %v499
    %1920 = vmatpush1.msra.mxu0 %v498
    %1921 = vmatprep.subr.mxu0 %v494
    %1922 = vmatpush1.msra.mxu0 %v493
    %1923 = vmatprep.subr.mxu0 %v489
    %1924 = vmatpush1.msra.mxu0 %v488
    %1925 = vmatprep.subr.mxu0 %v484
    %1926 = vmatpush1.msra.mxu0 %v483
    %1927 = vmatprep.subr.mxu0 %v479
    %1928 = vmatpush1.msra.mxu0 %v478
    %1929 = vmatprep.subr.mxu0 %v474
    %1930 = vmatpush1.msra.mxu0 %v473
    %1931 = vmatprep.subr.mxu0 %v469
    %1932 = vmatpush1.msra.mxu0 %v468
    %1933 = vmatprep.subr.mxu0 %v464
    %1934 = vmatpush1.msra.mxu0 %v463
    %1935 = vmatprep.subr.mxu0 %v459
    %1936 = vmatpush1.msra.mxu0 %v458
    %1937 = vmatprep.subr.mxu0 %v454
    %1938 = vmatpush1.msra.mxu0 %v453
    %1939 = vmatprep.subr.mxu0 0.0
    %1940 = vmatpush2.msra.mxu0 0.0
    %1941 = vmatprep.subr.mxu0 0.0
    %1942 = vmatpush2.msra.mxu0 0.0
    %1943 = vmatprep.subr.mxu0 0.0
    %1944 = vmatpush2.msra.mxu0 0.0
    %1945 = vmatprep.subr.mxu0 0.0
    %1946 = vmatpush2.msra.mxu0 0.0
    %1947 = vmatprep.subr.mxu0 0.0
    %1948 = vmatpush2.msra.mxu0 0.0
    %1949 = vmatprep.subr.mxu0 0.0
    %1950 = vmatpush2.msra.mxu0 0.0
    %1951 = vmatprep.subr.mxu0 0.0
    %1952 = vmatpush2.msra.mxu0 0.0
    %1953 = vmatprep.subr.mxu0 0.0
    %1954 = vmatpush2.msra.mxu0 0.0
    %1955 = vmatprep.subr.mxu0 0.0
    %1956 = vmatpush2.msra.mxu0 0.0
    %1957 = vmatprep.subr.mxu0 0.0
    %1958 = vmatpush2.msra.mxu0 0.0
    %1959 = vmatprep.subr.mxu0 0.0
    %1960 = vmatpush2.msra.mxu0 0.0
    %1961 = vmatprep.subr.mxu0 0.0
    %1962 = vmatpush2.msra.mxu0 0.0
    %1963 = vmatprep.subr.mxu0 0.0
    %1964 = vmatpush2.msra.mxu0 0.0
    %1965 = vmatprep.subr.mxu0 0.0
    %1966 = vmatpush2.msra.mxu0 0.0
    %1967 = vmatprep.subr.mxu0 0.0
    %1968 = vmatpush2.msra.mxu0 0.0
    %1969 = vmatprep.subr.mxu0 0.0
    %1970 = vmatpush2.msra.mxu0 0.0
    %1971 = vmatprep.mubr.f32.mxu0 0.0
    %1972 = vmatmul.mubr.f32.gmra.mxu0 %v1901
    %v1973 = vpop.f32.mrf.mxu0
    %v1974 = vadd.f32 0.0, %v1973
    %v1975 = vpop.f32.mrf.mxu0
    %v1976 = vadd.f32 0.0, %v1975
    %1977 = vdwg.mxu0
    %1978 = vmatprep.subr.mxu0 %v531
    %1979 = vmatpush1.msra.mxu0 %v530
    %1980 = vmatprep.subr.mxu0 %v526
    %1981 = vmatpush1.msra.mxu0 %v525
    %1982 = vmatprep.subr.mxu0 %v521
    %1983 = vmatpush1.msra.mxu0 %v520
    %1984 = vmatprep.subr.mxu0 %v516
    %1985 = vmatpush1.msra.mxu0 %v515
    %1986 = vmatprep.subr.mxu0 %v511
    %1987 = vmatpush1.msra.mxu0 %v510
    %1988 = vmatprep.subr.mxu0 %v506
    %1989 = vmatpush1.msra.mxu0 %v505
    %1990 = vmatprep.subr.mxu0 %v501
    %1991 = vmatpush1.msra.mxu0 %v500
    %1992 = vmatprep.subr.mxu0 %v496
    %1993 = vmatpush1.msra.mxu0 %v495
    %1994 = vmatprep.subr.mxu0 %v491
    %1995 = vmatpush1.msra.mxu0 %v490
    %1996 = vmatprep.subr.mxu0 %v486
    %1997 = vmatpush1.msra.mxu0 %v485
    %1998 = vmatprep.subr.mxu0 %v481
    %1999 = vmatpush1.msra.mxu0 %v480
    %2000 = vmatprep.subr.mxu0 %v476
    %2001 = vmatpush1.msra.mxu0 %v475
    %2002 = vmatprep.subr.mxu0 %v471
    %2003 = vmatpush1.msra.mxu0 %v470
    %2004 = vmatprep.subr.mxu0 %v466
    %2005 = vmatpush1.msra.mxu0 %v465
    %2006 = vmatprep.subr.mxu0 %v461
    %2007 = vmatpush1.msra.mxu0 %v460
    %2008 = vmatprep.subr.mxu0 %v456
    %2009 = vmatpush1.msra.mxu0 %v455
    %2010 = vmatprep.subr.mxu0 0.0
    %2011 = vmatpush2.msra.mxu0 0.0
    %2012 = vmatprep.subr.mxu0 0.0
    %2013 = vmatpush2.msra.mxu0 0.0
    %2014 = vmatprep.subr.mxu0 0.0
    %2015 = vmatpush2.msra.mxu0 0.0
    %2016 = vmatprep.subr.mxu0 0.0
    %2017 = vmatpush2.msra.mxu0 0.0
    %2018 = vmatprep.subr.mxu0 0.0
    %2019 = vmatpush2.msra.mxu0 0.0
    %2020 = vmatprep.subr.mxu0 0.0
    %2021 = vmatpush2.msra.mxu0 0.0
    %2022 = vmatprep.subr.mxu0 0.0
    %2023 = vmatpush2.msra.mxu0 0.0
    %2024 = vmatprep.subr.mxu0 0.0
    %2025 = vmatpush2.msra.mxu0 0.0
    %2026 = vmatprep.subr.mxu0 0.0
    %2027 = vmatpush2.msra.mxu0 0.0
    %2028 = vmatprep.subr.mxu0 0.0
    %2029 = vmatpush2.msra.mxu0 0.0
    %2030 = vmatprep.subr.mxu0 0.0
    %2031 = vmatpush2.msra.mxu0 0.0
    %2032 = vmatprep.subr.mxu0 0.0
    %2033 = vmatpush2.msra.mxu0 0.0
    %2034 = vmatprep.subr.mxu0 0.0
    %2035 = vmatpush2.msra.mxu0 0.0
    %2036 = vmatprep.subr.mxu0 0.0
    %2037 = vmatpush2.msra.mxu0 0.0
    %2038 = vmatprep.subr.mxu0 0.0
    %2039 = vmatpush2.msra.mxu0 0.0
    %2040 = vmatprep.subr.mxu0 0.0
    %2041 = vmatpush2.msra.mxu0 0.0
    %2042 = vmatprep.mubr.f32.mxu0 0.0
    %2043 = vmatmul.mubr.f32.gmra.mxu0 %v1901
    %v2044 = vpop.f32.mrf.mxu0
    %v2045 = vadd.f32 0.0, %v2044
    %v2046 = vpop.f32.mrf.mxu0
    %v2047 = vadd.f32 0.0, %v2046
    %2048 = vdwg.mxu0
    %2049 = vmatprep.subr.mxu0 0.0
    %2050 = vmatpush1.msra.mxu0 %v532
    %2051 = vmatprep.subr.mxu0 0.0
    %2052 = vmatpush1.msra.mxu0 %v527
    %2053 = vmatprep.subr.mxu0 0.0
    %2054 = vmatpush1.msra.mxu0 %v522
    %2055 = vmatprep.subr.mxu0 0.0
    %2056 = vmatpush1.msra.mxu0 %v517
    %2057 = vmatprep.subr.mxu0 0.0
    %2058 = vmatpush1.msra.mxu0 %v512
    %2059 = vmatprep.subr.mxu0 0.0
    %2060 = vmatpush1.msra.mxu0 %v507
    %2061 = vmatprep.subr.mxu0 0.0
    %2062 = vmatpush1.msra.mxu0 %v502
    %2063 = vmatprep.subr.mxu0 0.0
    %2064 = vmatpush1.msra.mxu0 %v497
    %2065 = vmatprep.subr.mxu0 0.0
    %2066 = vmatpush1.msra.mxu0 %v492
    %2067 = vmatprep.subr.mxu0 0.0
    %2068 = vmatpush1.msra.mxu0 %v487
    %2069 = vmatprep.subr.mxu0 0.0
    %2070 = vmatpush1.msra.mxu0 %v482
    %2071 = vmatprep.subr.mxu0 0.0
    %2072 = vmatpush1.msra.mxu0 %v477
    %2073 = vmatprep.subr.mxu0 0.0
    %2074 = vmatpush1.msra.mxu0 %v472
    %2075 = vmatprep.subr.mxu0 0.0
    %2076 = vmatpush1.msra.mxu0 %v467
    %2077 = vmatprep.subr.mxu0 0.0
    %2078 = vmatpush1.msra.mxu0 %v462
    %2079 = vmatprep.subr.mxu0 0.0
    %2080 = vmatpush1.msra.mxu0 %v457
    %2081 = vmatprep.subr.mxu0 0.0
    %2082 = vmatpush2.msra.mxu0 0.0
    %2083 = vmatprep.subr.mxu0 0.0
    %2084 = vmatpush2.msra.mxu0 0.0
    %2085 = vmatprep.subr.mxu0 0.0
    %2086 = vmatpush2.msra.mxu0 0.0
    %2087 = vmatprep.subr.mxu0 0.0
    %2088 = vmatpush2.msra.mxu0 0.0
    %2089 = vmatprep.subr.mxu0 0.0
    %2090 = vmatpush2.msra.mxu0 0.0
    %2091 = vmatprep.subr.mxu0 0.0
    %2092 = vmatpush2.msra.mxu0 0.0
    %2093 = vmatprep.subr.mxu0 0.0
    %2094 = vmatpush2.msra.mxu0 0.0
    %2095 = vmatprep.subr.mxu0 0.0
    %2096 = vmatpush2.msra.mxu0 0.0
    %2097 = vmatprep.subr.mxu0 0.0
    %2098 = vmatpush2.msra.mxu0 0.0
    %2099 = vmatprep.subr.mxu0 0.0
    %2100 = vmatpush2.msra.mxu0 0.0
    %2101 = vmatprep.subr.mxu0 0.0
    %2102 = vmatpush2.msra.mxu0 0.0
    %2103 = vmatprep.subr.mxu0 0.0
    %2104 = vmatpush2.msra.mxu0 0.0
    %2105 = vmatprep.subr.mxu0 0.0
    %2106 = vmatpush2.msra.mxu0 0.0
    %2107 = vmatprep.subr.mxu0 0.0
    %2108 = vmatpush2.msra.mxu0 0.0
    %2109 = vmatprep.subr.mxu0 0.0
    %2110 = vmatpush2.msra.mxu0 0.0
    %2111 = vmatprep.subr.mxu0 0.0
    %2112 = vmatpush2.msra.mxu0 0.0
    %2113 = vmatprep.mubr.f32.mxu0 0.0
    %2114 = vmatmul.mubr.f32.gmra.mxu0 %v1901
    %v2115 = vpop.f32.mrf.mxu0
    %v2116 = vadd.f32 0.0, %v2115
    %v2117 = vpop.f32.mrf.mxu0
    %2118 = vdwg.mxu0
    %v2124 = vcombine.low %v1974, %v1976
    %v2125 = vcombine.low %v2045, %v2047
    %v2127 = vunpack.c.l.s4 1966171168
    %v2128 = vunpack.c.0.s8 %v2127
    %v2129 = vlaneseq
    %v2130 = vshrl.u32 %v2129, 7
    %v2131 = vsub.s32 %v2128, %v2130
    %v2132 = vrot.slane %v2124, %v2131
    %v2134 = vunpack.c.l.s4 1966171168
    %v2135 = vunpack.c.0.s8 %v2134
    %v2136 = vlaneseq
    %v2137 = vshrl.u32 %v2136, 7
    %v2138 = vsub.s32 %v2135, %v2137
    %v2139 = vrot.slane %v2125, %v2138
    %v2141 = vunpack.c.l.s4 1966171168
    %v2142 = vunpack.c.0.s8 %v2141
    %v2143 = vlaneseq
    %v2144 = vshrl.u32 %v2143, 7
    %v2145 = vsub.s32 %v2142, %v2144
    %v2146 = vrot.slane %v2116, %v2145
    %v2147 = vcombine.low %v2132, %v2139
    %v2149 = vunpack.c.l.s4 1966171168
    %v2150 = vunpack.c.0.s8 %v2149
    %v2151 = vlaneseq
    %v2152 = vshrl.u32 %v2151, 7
    %v2153 = vsub.s32 %v2150, %v2152
    %v2154 = vrot.slane %v2147, %v2153
    %v2156 = vunpack.c.l.s4 1966171168
    %v2157 = vunpack.c.0.s8 %v2156
    %v2158 = vlaneseq
    %v2159 = vshrl.u32 %v2158, 7
    %v2160 = vsub.s32 %v2157, %v2159
    %v2161 = vrot.slane %v2146, %v2160
    %v2162 = vcombine.low %v2154, %v2161
    %v2164 = vadd.f32 %v1906, %v2162
    %v2165 = vxor.u32 %v2164, 2147483648
    %v2166 = vmul.f32 %v2165, 1.442695
    %v2167 = vpow.pop %v2166
    %v2168 = vadd.f32 %v2167, 1.0
    %v2169 = vrcp.pop %v2168
    %v2170 = vmul.f32 1.0, %v2169
    %v2172 = vrot.slane %v2164, 4
    %v2174 = vtanh.pop %v2172
    %v2175 = vmul.f32 %v2170, %v1902
    %v2177 = vrot.slane %v2170, 1
    %v2179 = vmul.f32 %v2177, %v2174
    %v2180 = vadd.f32 %v2175, %v2179
    %2181 = vmatprep.subr.mxu0 0.0
    %2182 = vmatpush1.msra.mxu0 %v548
    %2183 = vmatprep.subr.mxu0 0.0
    %2184 = vmatpush1.msra.mxu0 %v547
    %2185 = vmatprep.subr.mxu0 0.0
    %2186 = vmatpush1.msra.mxu0 %v546
    %2187 = vmatprep.subr.mxu0 0.0
    %2188 = vmatpush1.msra.mxu0 %v545
    %2189 = vmatprep.subr.mxu0 0.0
    %2190 = vmatpush1.msra.mxu0 %v544
    %2191 = vmatprep.subr.mxu0 0.0
    %2192 = vmatpush1.msra.mxu0 %v543
    %2193 = vmatprep.subr.mxu0 0.0
    %2194 = vmatpush1.msra.mxu0 %v542
    %2195 = vmatprep.subr.mxu0 0.0
    %2196 = vmatpush1.msra.mxu0 %v541
    %2197 = vmatprep.subr.mxu0 0.0
    %2198 = vmatpush1.msra.mxu0 %v540
    %2199 = vmatprep.subr.mxu0 0.0
    %2200 = vmatpush1.msra.mxu0 %v539
    %2201 = vmatprep.subr.mxu0 0.0
    %2202 = vmatpush1.msra.mxu0 %v538
    %2203 = vmatprep.subr.mxu0 0.0
    %2204 = vmatpush1.msra.mxu0 %v537
    %2205 = vmatprep.subr.mxu0 0.0
    %2206 = vmatpush1.msra.mxu0 %v536
    %2207 = vmatprep.subr.mxu0 0.0
    %2208 = vmatpush1.msra.mxu0 %v535
    %2209 = vmatprep.subr.mxu0 0.0
    %2210 = vmatpush1.msra.mxu0 %v534
    %2211 = vmatprep.subr.mxu0 0.0
    %2212 = vmatpush1.msra.mxu0 %v533
    %2213 = vmatprep.subr.mxu0 0.0
    %2214 = vmatpush2.msra.mxu0 0.0
    %2215 = vmatprep.subr.mxu0 0.0
    %2216 = vmatpush2.msra.mxu0 0.0
    %2217 = vmatprep.subr.mxu0 0.0
    %2218 = vmatpush2.msra.mxu0 0.0
    %2219 = vmatprep.subr.mxu0 0.0
    %2220 = vmatpush2.msra.mxu0 0.0
    %2221 = vmatprep.subr.mxu0 0.0
    %2222 = vmatpush2.msra.mxu0 0.0
    %2223 = vmatprep.subr.mxu0 0.0
    %2224 = vmatpush2.msra.mxu0 0.0
    %2225 = vmatprep.subr.mxu0 0.0
    %2226 = vmatpush2.msra.mxu0 0.0
    %2227 = vmatprep.subr.mxu0 0.0
    %2228 = vmatpush2.msra.mxu0 0.0
    %2229 = vmatprep.subr.mxu0 0.0
    %2230 = vmatpush2.msra.mxu0 0.0
    %2231 = vmatprep.subr.mxu0 0.0
    %2232 = vmatpush2.msra.mxu0 0.0
    %2233 = vmatprep.subr.mxu0 0.0
    %2234 = vmatpush2.msra.mxu0 0.0
    %2235 = vmatprep.subr.mxu0 0.0
    %2236 = vmatpush2.msra.mxu0 0.0
    %2237 = vmatprep.subr.mxu0 0.0
    %2238 = vmatpush2.msra.mxu0 0.0
    %2239 = vmatprep.subr.mxu0 0.0
    %2240 = vmatpush2.msra.mxu0 0.0
    %2241 = vmatprep.subr.mxu0 0.0
    %2242 = vmatpush2.msra.mxu0 0.0
    %2243 = vmatprep.subr.mxu0 0.0
    %2244 = vmatpush2.msra.mxu0 0.0
    %2245 = vmatprep.mubr.f32.mxu0 0.0
    %2246 = vmatmul.mubr.f32.gmra.mxu0 %v2180
    %v2247 = vpop.f32.mrf.mxu0
    %v2248 = vadd.f32 %v549, %v2247
    %v2249 = vpop.f32.mrf.mxu0
    %2250 = vdwg.mxu0
    %v2251 = vsel %vm915, %v2248, -inf
    %2252 = vmax.xlane.f32.xlu0 %v2251
    %v2253 = vpop.xlane.xlu0 %2252
    %vm2254 = vcmp.ge.f32.partialorder %v2248, %v2253
    %v2255 = vsel %vm2254, 1, 0
    %v2256 = vcvt.s32.f32 %v2255
    %v2257 = vsel %vm915, %v2256, 0.0
    %2258 = vadd.xlane.f32.xlu0 %v2257
    %v2259 = vpop.xlane.xlu0 %2258
    %2260 = vmatprep.subr.mxu0 0.0
    %2261 = vmatpush1.msra.mxu0 %v565
    %2262 = vmatprep.subr.mxu0 0.0
    %2263 = vmatpush1.msra.mxu0 %v564
    %2264 = vmatprep.subr.mxu0 0.0
    %2265 = vmatpush1.msra.mxu0 %v563
    %2266 = vmatprep.subr.mxu0 0.0
    %2267 = vmatpush1.msra.mxu0 %v562
    %2268 = vmatprep.subr.mxu0 0.0
    %2269 = vmatpush1.msra.mxu0 %v561
    %2270 = vmatprep.subr.mxu0 0.0
    %2271 = vmatpush1.msra.mxu0 %v560
    %2272 = vmatprep.subr.mxu0 0.0
    %2273 = vmatpush1.msra.mxu0 %v559
    %2274 = vmatprep.subr.mxu0 0.0
    %2275 = vmatpush1.msra.mxu0 %v558
    %2276 = vmatprep.subr.mxu0 0.0
    %2277 = vmatpush1.msra.mxu0 %v557
    %2278 = vmatprep.subr.mxu0 0.0
    %2279 = vmatpush1.msra.mxu0 %v556
    %2280 = vmatprep.subr.mxu0 0.0
    %2281 = vmatpush1.msra.mxu0 %v555
    %2282 = vmatprep.subr.mxu0 0.0
    %2283 = vmatpush1.msra.mxu0 %v554
    %2284 = vmatprep.subr.mxu0 0.0
    %2285 = vmatpush1.msra.mxu0 %v553
    %2286 = vmatprep.subr.mxu0 0.0
    %2287 = vmatpush1.msra.mxu0 %v552
    %2288 = vmatprep.subr.mxu0 0.0
    %2289 = vmatpush1.msra.mxu0 %v551
    %2290 = vmatprep.subr.mxu0 0.0
    %2291 = vmatpush1.msra.mxu0 %v550
    %2292 = vmatprep.subr.mxu0 0.0
    %2293 = vmatpush2.msra.mxu0 0.0
    %2294 = vmatprep.subr.mxu0 0.0
    %2295 = vmatpush2.msra.mxu0 0.0
    %2296 = vmatprep.subr.mxu0 0.0
    %2297 = vmatpush2.msra.mxu0 0.0
    %2298 = vmatprep.subr.mxu0 0.0
    %2299 = vmatpush2.msra.mxu0 0.0
    %2300 = vmatprep.subr.mxu0 0.0
    %2301 = vmatpush2.msra.mxu0 0.0
    %2302 = vmatprep.subr.mxu0 0.0
    %2303 = vmatpush2.msra.mxu0 0.0
    %2304 = vmatprep.subr.mxu0 0.0
    %2305 = vmatpush2.msra.mxu0 0.0
    %2306 = vmatprep.subr.mxu0 0.0
    %2307 = vmatpush2.msra.mxu0 0.0
    %2308 = vmatprep.subr.mxu0 0.0
    %2309 = vmatpush2.msra.mxu0 0.0
    %2310 = vmatprep.subr.mxu0 0.0
    %2311 = vmatpush2.msra.mxu0 0.0
    %2312 = vmatprep.subr.mxu0 0.0
    %2313 = vmatpush2.msra.mxu0 0.0
    %2314 = vmatprep.subr.mxu0 0.0
    %2315 = vmatpush2.msra.mxu0 0.0
    %2316 = vmatprep.subr.mxu0 0.0
    %2317 = vmatpush2.msra.mxu0 0.0
    %2318 = vmatprep.subr.mxu0 0.0
    %2319 = vmatpush2.msra.mxu0 0.0
    %2320 = vmatprep.subr.mxu0 0.0
    %2321 = vmatpush2.msra.mxu0 0.0
    %2322 = vmatprep.subr.mxu0 0.0
    %2323 = vmatpush2.msra.mxu0 0.0
    %2324 = vmatprep.mubr.f32.mxu0 0.0
    %2325 = vmatmul.mubr.f32.gmra.mxu0 %v2256
    %v2326 = vpop.f32.mrf.mxu0
    %v2327 = vadd.f32 0.0, %v2326
    %v2328 = vpop.f32.mrf.mxu0
    %2329 = vdwg.mxu0
    %v2330 = vrcp.pop %v2259
    %v2331 = vmul.f32 %v2327, %v2330
    %v2332 = vrot.slane %v2170, 3
    %v2334 = vmul.f32 %v2332, %v2331
    %v2335 = vadd.f32 %v2180, %v2334
    %v2336 = vtanh.pop %v2335
    %v2337 = vrot.slane %v2170, 2
    %v2339 = vmul.f32 %v2337, %v2336
    %2340 = vst [vmem:[#allocation3 + $0x3] sm:$0x1] %v2339
    %s2341 = sadd.s32 %s1006, 3
    %p2342 = scmp.lt.s32.totalorder %s2341, 8
    %s2343 = scalar_select %p2342, 1, 0
    %v2344 = vstv %s2343
    %vm2345 = vcmp.eq.s32.totalorder %v2344, 1
    %v2346 = vsel %vm2345, %v2339, %v1901
    %v2347 = vsel %vm2345, %v2335, %v1902
    %s2348 = scalar_lea.vmem [#allocation2], 4
    %v2349 = vld [vmem:[%s2348] ss:$8 sm:$0xf]
    %v2350 = vld [vmem:[%s2348] ss:$8 sm:$0x10]
    %v2351 = vor.u32 %v2349, %v2350
    %2352 = vmatprep.subr.mxu0 %v529
    %2353 = vmatpush1.msra.mxu0 %v528
    %2354 = vmatprep.subr.mxu0 %v524
    %2355 = vmatpush1.msra.mxu0 %v523
    %2356 = vmatprep.subr.mxu0 %v519
    %2357 = vmatpush1.msra.mxu0 %v518
    %2358 = vmatprep.subr.mxu0 %v514
    %2359 = vmatpush1.msra.mxu0 %v513
    %2360 = vmatprep.subr.mxu0 %v509
    %2361 = vmatpush1.msra.mxu0 %v508
    %2362 = vmatprep.subr.mxu0 %v504
    %2363 = vmatpush1.msra.mxu0 %v503
    %2364 = vmatprep.subr.mxu0 %v499
    %2365 = vmatpush1.msra.mxu0 %v498
    %2366 = vmatprep.subr.mxu0 %v494
    %2367 = vmatpush1.msra.mxu0 %v493
    %2368 = vmatprep.subr.mxu0 %v489
    %2369 = vmatpush1.msra.mxu0 %v488
    %2370 = vmatprep.subr.mxu0 %v484
    %2371 = vmatpush1.msra.mxu0 %v483
    %2372 = vmatprep.subr.mxu0 %v479
    %2373 = vmatpush1.msra.mxu0 %v478
    %2374 = vmatprep.subr.mxu0 %v474
    %2375 = vmatpush1.msra.mxu0 %v473
    %2376 = vmatprep.subr.mxu0 %v469
    %2377 = vmatpush1.msra.mxu0 %v468
    %2378 = vmatprep.subr.mxu0 %v464
    %2379 = vmatpush1.msra.mxu0 %v463
    %2380 = vmatprep.subr.mxu0 %v459
    %2381 = vmatpush1.msra.mxu0 %v458
    %2382 = vmatprep.subr.mxu0 %v454
    %2383 = vmatpush1.msra.mxu0 %v453
    %2384 = vmatprep.subr.mxu0 0.0
    %2385 = vmatpush2.msra.mxu0 0.0
    %2386 = vmatprep.subr.mxu0 0.0
    %2387 = vmatpush2.msra.mxu0 0.0
    %2388 = vmatprep.subr.mxu0 0.0
    %2389 = vmatpush2.msra.mxu0 0.0
    %2390 = vmatprep.subr.mxu0 0.0
    %2391 = vmatpush2.msra.mxu0 0.0
    %2392 = vmatprep.subr.mxu0 0.0
    %2393 = vmatpush2.msra.mxu0 0.0
    %2394 = vmatprep.subr.mxu0 0.0
    %2395 = vmatpush2.msra.mxu0 0.0
    %2396 = vmatprep.subr.mxu0 0.0
    %2397 = vmatpush2.msra.mxu0 0.0
    %2398 = vmatprep.subr.mxu0 0.0
    %2399 = vmatpush2.msra.mxu0 0.0
    %2400 = vmatprep.subr.mxu0 0.0
    %2401 = vmatpush2.msra.mxu0 0.0
    %2402 = vmatprep.subr.mxu0 0.0
    %2403 = vmatpush2.msra.mxu0 0.0
    %2404 = vmatprep.subr.mxu0 0.0
    %2405 = vmatpush2.msra.mxu0 0.0
    %2406 = vmatprep.subr.mxu0 0.0
    %2407 = vmatpush2.msra.mxu0 0.0
    %2408 = vmatprep.subr.mxu0 0.0
    %2409 = vmatpush2.msra.mxu0 0.0
    %2410 = vmatprep.subr.mxu0 0.0
    %2411 = vmatpush2.msra.mxu0 0.0
    %2412 = vmatprep.subr.mxu0 0.0
    %2413 = vmatpush2.msra.mxu0 0.0
    %2414 = vmatprep.subr.mxu0 0.0
    %2415 = vmatpush2.msra.mxu0 0.0
    %2416 = vmatprep.mubr.f32.mxu0 0.0
    %2417 = vmatmul.mubr.f32.gmra.mxu0 %v2346
    %v2418 = vpop.f32.mrf.mxu0
    %v2419 = vadd.f32 0.0, %v2418
    %v2420 = vpop.f32.mrf.mxu0
    %v2421 = vadd.f32 0.0, %v2420
    %2422 = vdwg.mxu0
    %2423 = vmatprep.subr.mxu0 %v531
    %2424 = vmatpush1.msra.mxu0 %v530
    %2425 = vmatprep.subr.mxu0 %v526
    %2426 = vmatpush1.msra.mxu0 %v525
    %2427 = vmatprep.subr.mxu0 %v521
    %2428 = vmatpush1.msra.mxu0 %v520
    %2429 = vmatprep.subr.mxu0 %v516
    %2430 = vmatpush1.msra.mxu0 %v515
    %2431 = vmatprep.subr.mxu0 %v511
    %2432 = vmatpush1.msra.mxu0 %v510
    %2433 = vmatprep.subr.mxu0 %v506
    %2434 = vmatpush1.msra.mxu0 %v505
    %2435 = vmatprep.subr.mxu0 %v501
    %2436 = vmatpush1.msra.mxu0 %v500
    %2437 = vmatprep.subr.mxu0 %v496
    %2438 = vmatpush1.msra.mxu0 %v495
    %2439 = vmatprep.subr.mxu0 %v491
    %2440 = vmatpush1.msra.mxu0 %v490
    %2441 = vmatprep.subr.mxu0 %v486
    %2442 = vmatpush1.msra.mxu0 %v485
    %2443 = vmatprep.subr.mxu0 %v481
    %2444 = vmatpush1.msra.mxu0 %v480
    %2445 = vmatprep.subr.mxu0 %v476
    %2446 = vmatpush1.msra.mxu0 %v475
    %2447 = vmatprep.subr.mxu0 %v471
    %2448 = vmatpush1.msra.mxu0 %v470
    %2449 = vmatprep.subr.mxu0 %v466
    %2450 = vmatpush1.msra.mxu0 %v465
    %2451 = vmatprep.subr.mxu0 %v461
    %2452 = vmatpush1.msra.mxu0 %v460
    %2453 = vmatprep.subr.mxu0 %v456
    %2454 = vmatpush1.msra.mxu0 %v455
    %2455 = vmatprep.subr.mxu0 0.0
    %2456 = vmatpush2.msra.mxu0 0.0
    %2457 = vmatprep.subr.mxu0 0.0
    %2458 = vmatpush2.msra.mxu0 0.0
    %2459 = vmatprep.subr.mxu0 0.0
    %2460 = vmatpush2.msra.mxu0 0.0
    %2461 = vmatprep.subr.mxu0 0.0
    %2462 = vmatpush2.msra.mxu0 0.0
    %2463 = vmatprep.subr.mxu0 0.0
    %2464 = vmatpush2.msra.mxu0 0.0
    %2465 = vmatprep.subr.mxu0 0.0
    %2466 = vmatpush2.msra.mxu0 0.0
    %2467 = vmatprep.subr.mxu0 0.0
    %2468 = vmatpush2.msra.mxu0 0.0
    %2469 = vmatprep.subr.mxu0 0.0
    %2470 = vmatpush2.msra.mxu0 0.0
    %2471 = vmatprep.subr.mxu0 0.0
    %2472 = vmatpush2.msra.mxu0 0.0
    %2473 = vmatprep.subr.mxu0 0.0
    %2474 = vmatpush2.msra.mxu0 0.0
    %2475 = vmatprep.subr.mxu0 0.0
    %2476 = vmatpush2.msra.mxu0 0.0
    %2477 = vmatprep.subr.mxu0 0.0
    %2478 = vmatpush2.msra.mxu0 0.0
    %2479 = vmatprep.subr.mxu0 0.0
    %2480 = vmatpush2.msra.mxu0 0.0
    %2481 = vmatprep.subr.mxu0 0.0
    %2482 = vmatpush2.msra.mxu0 0.0
    %2483 = vmatprep.subr.mxu0 0.0
    %2484 = vmatpush2.msra.mxu0 0.0
    %2485 = vmatprep.subr.mxu0 0.0
    %2486 = vmatpush2.msra.mxu0 0.0
    %2487 = vmatprep.mubr.f32.mxu0 0.0
    %2488 = vmatmul.mubr.f32.gmra.mxu0 %v2346
    %v2489 = vpop.f32.mrf.mxu0
    %v2490 = vadd.f32 0.0, %v2489
    %v2491 = vpop.f32.mrf.mxu0
    %v2492 = vadd.f32 0.0, %v2491
    %2493 = vdwg.mxu0
    %2494 = vmatprep.subr.mxu0 0.0
    %2495 = vmatpush1.msra.mxu0 %v532
    %2496 = vmatprep.subr.mxu0 0.0
    %2497 = vmatpush1.msra.mxu0 %v527
    %2498 = vmatprep.subr.mxu0 0.0
    %2499 = vmatpush1.msra.mxu0 %v522
    %2500 = vmatprep.subr.mxu0 0.0
    %2501 = vmatpush1.msra.mxu0 %v517
    %2502 = vmatprep.subr.mxu0 0.0
    %2503 = vmatpush1.msra.mxu0 %v512
    %2504 = vmatprep.subr.mxu0 0.0
    %2505 = vmatpush1.msra.mxu0 %v507
    %2506 = vmatprep.subr.mxu0 0.0
    %2507 = vmatpush1.msra.mxu0 %v502
    %2508 = vmatprep.subr.mxu0 0.0
    %2509 = vmatpush1.msra.mxu0 %v497
    %2510 = vmatprep.subr.mxu0 0.0
    %2511 = vmatpush1.msra.mxu0 %v492
    %2512 = vmatprep.subr.mxu0 0.0
    %2513 = vmatpush1.msra.mxu0 %v487
    %2514 = vmatprep.subr.mxu0 0.0
    %2515 = vmatpush1.msra.mxu0 %v482
    %2516 = vmatprep.subr.mxu0 0.0
    %2517 = vmatpush1.msra.mxu0 %v477
    %2518 = vmatprep.subr.mxu0 0.0
    %2519 = vmatpush1.msra.mxu0 %v472
    %2520 = vmatprep.subr.mxu0 0.0
    %2521 = vmatpush1.msra.mxu0 %v467
    %2522 = vmatprep.subr.mxu0 0.0
    %2523 = vmatpush1.msra.mxu0 %v462
    %2524 = vmatprep.subr.mxu0 0.0
    %2525 = vmatpush1.msra.mxu0 %v457
    %2526 = vmatprep.subr.mxu0 0.0
    %2527 = vmatpush2.msra.mxu0 0.0
    %2528 = vmatprep.subr.mxu0 0.0
    %2529 = vmatpush2.msra.mxu0 0.0
    %2530 = vmatprep.subr.mxu0 0.0
    %2531 = vmatpush2.msra.mxu0 0.0
    %2532 = vmatprep.subr.mxu0 0.0
    %2533 = vmatpush2.msra.mxu0 0.0
    %2534 = vmatprep.subr.mxu0 0.0
    %2535 = vmatpush2.msra.mxu0 0.0
    %2536 = vmatprep.subr.mxu0 0.0
    %2537 = vmatpush2.msra.mxu0 0.0
    %2538 = vmatprep.subr.mxu0 0.0
    %2539 = vmatpush2.msra.mxu0 0.0
    %2540 = vmatprep.subr.mxu0 0.0
    %2541 = vmatpush2.msra.mxu0 0.0
    %2542 = vmatprep.subr.mxu0 0.0
    %2543 = vmatpush2.msra.mxu0 0.0
    %2544 = vmatprep.subr.mxu0 0.0
    %2545 = vmatpush2.msra.mxu0 0.0
    %2546 = vmatprep.subr.mxu0 0.0
    %2547 = vmatpush2.msra.mxu0 0.0
    %2548 = vmatprep.subr.mxu0 0.0
    %2549 = vmatpush2.msra.mxu0 0.0
    %2550 = vmatprep.subr.mxu0 0.0
    %2551 = vmatpush2.msra.mxu0 0.0
    %2552 = vmatprep.subr.mxu0 0.0
    %2553 = vmatpush2.msra.mxu0 0.0
    %2554 = vmatprep.subr.mxu0 0.0
    %2555 = vmatpush2.msra.mxu0 0.0
    %2556 = vmatprep.subr.mxu0 0.0
    %2557 = vmatpush2.msra.mxu0 0.0
    %2558 = vmatprep.mubr.f32.mxu0 0.0
    %2559 = vmatmul.mubr.f32.gmra.mxu0 %v2346
    %v2560 = vpop.f32.mrf.mxu0
    %v2561 = vadd.f32 0.0, %v2560
    %v2562 = vpop.f32.mrf.mxu0
    %2563 = vdwg.mxu0
    %v2569 = vcombine.low %v2419, %v2421
    %v2570 = vcombine.low %v2490, %v2492
    %v2572 = vunpack.c.l.s4 1966171168
    %v2573 = vunpack.c.0.s8 %v2572
    %v2574 = vlaneseq
    %v2575 = vshrl.u32 %v2574, 7
    %v2576 = vsub.s32 %v2573, %v2575
    %v2577 = vrot.slane %v2569, %v2576
    %v2579 = vunpack.c.l.s4 1966171168
    %v2580 = vunpack.c.0.s8 %v2579
    %v2581 = vlaneseq
    %v2582 = vshrl.u32 %v2581, 7
    %v2583 = vsub.s32 %v2580, %v2582
    %v2584 = vrot.slane %v2570, %v2583
    %v2586 = vunpack.c.l.s4 1966171168
    %v2587 = vunpack.c.0.s8 %v2586
    %v2588 = vlaneseq
    %v2589 = vshrl.u32 %v2588, 7
    %v2590 = vsub.s32 %v2587, %v2589
    %v2591 = vrot.slane %v2561, %v2590
    %v2592 = vcombine.low %v2577, %v2584
    %v2594 = vunpack.c.l.s4 1966171168
    %v2595 = vunpack.c.0.s8 %v2594
    %v2596 = vlaneseq
    %v2597 = vshrl.u32 %v2596, 7
    %v2598 = vsub.s32 %v2595, %v2597
    %v2599 = vrot.slane %v2592, %v2598
    %v2601 = vunpack.c.l.s4 1966171168
    %v2602 = vunpack.c.0.s8 %v2601
    %v2603 = vlaneseq
    %v2604 = vshrl.u32 %v2603, 7
    %v2605 = vsub.s32 %v2602, %v2604
    %v2606 = vrot.slane %v2591, %v2605
    %v2607 = vcombine.low %v2599, %v2606
    %v2609 = vadd.f32 %v2351, %v2607
    %v2610 = vxor.u32 %v2609, 2147483648
    %v2611 = vmul.f32 %v2610, 1.442695
    %v2612 = vpow.pop %v2611
    %v2613 = vadd.f32 %v2612, 1.0
    %v2614 = vrcp.pop %v2613
    %v2615 = vmul.f32 1.0, %v2614
    %v2617 = vrot.slane %v2609, 4
    %v2619 = vtanh.pop %v2617
    %v2620 = vmul.f32 %v2615, %v2347
    %v2622 = vrot.slane %v2615, 1
    %v2624 = vmul.f32 %v2622, %v2619
    %v2625 = vadd.f32 %v2620, %v2624
    %2626 = vmatprep.subr.mxu0 0.0
    %2627 = vmatpush1.msra.mxu0 %v548
    %2628 = vmatprep.subr.mxu0 0.0
    %2629 = vmatpush1.msra.mxu0 %v547
    %2630 = vmatprep.subr.mxu0 0.0
    %2631 = vmatpush1.msra.mxu0 %v546
    %2632 = vmatprep.subr.mxu0 0.0
    %2633 = vmatpush1.msra.mxu0 %v545
    %2634 = vmatprep.subr.mxu0 0.0
    %2635 = vmatpush1.msra.mxu0 %v544
    %2636 = vmatprep.subr.mxu0 0.0
    %2637 = vmatpush1.msra.mxu0 %v543
    %2638 = vmatprep.subr.mxu0 0.0
    %2639 = vmatpush1.msra.mxu0 %v542
    %2640 = vmatprep.subr.mxu0 0.0
    %2641 = vmatpush1.msra.mxu0 %v541
    %2642 = vmatprep.subr.mxu0 0.0
    %2643 = vmatpush1.msra.mxu0 %v540
    %2644 = vmatprep.subr.mxu0 0.0
    %2645 = vmatpush1.msra.mxu0 %v539
    %2646 = vmatprep.subr.mxu0 0.0
    %2647 = vmatpush1.msra.mxu0 %v538
    %2648 = vmatprep.subr.mxu0 0.0
    %2649 = vmatpush1.msra.mxu0 %v537
    %2650 = vmatprep.subr.mxu0 0.0
    %2651 = vmatpush1.msra.mxu0 %v536
    %2652 = vmatprep.subr.mxu0 0.0
    %2653 = vmatpush1.msra.mxu0 %v535
    %2654 = vmatprep.subr.mxu0 0.0
    %2655 = vmatpush1.msra.mxu0 %v534
    %2656 = vmatprep.subr.mxu0 0.0
    %2657 = vmatpush1.msra.mxu0 %v533
    %2658 = vmatprep.subr.mxu0 0.0
    %2659 = vmatpush2.msra.mxu0 0.0
    %2660 = vmatprep.subr.mxu0 0.0
    %2661 = vmatpush2.msra.mxu0 0.0
    %2662 = vmatprep.subr.mxu0 0.0
    %2663 = vmatpush2.msra.mxu0 0.0
    %2664 = vmatprep.subr.mxu0 0.0
    %2665 = vmatpush2.msra.mxu0 0.0
    %2666 = vmatprep.subr.mxu0 0.0
    %2667 = vmatpush2.msra.mxu0 0.0
    %2668 = vmatprep.subr.mxu0 0.0
    %2669 = vmatpush2.msra.mxu0 0.0
    %2670 = vmatprep.subr.mxu0 0.0
    %2671 = vmatpush2.msra.mxu0 0.0
    %2672 = vmatprep.subr.mxu0 0.0
    %2673 = vmatpush2.msra.mxu0 0.0
    %2674 = vmatprep.subr.mxu0 0.0
    %2675 = vmatpush2.msra.mxu0 0.0
    %2676 = vmatprep.subr.mxu0 0.0
    %2677 = vmatpush2.msra.mxu0 0.0
    %2678 = vmatprep.subr.mxu0 0.0
    %2679 = vmatpush2.msra.mxu0 0.0
    %2680 = vmatprep.subr.mxu0 0.0
    %2681 = vmatpush2.msra.mxu0 0.0
    %2682 = vmatprep.subr.mxu0 0.0
    %2683 = vmatpush2.msra.mxu0 0.0
    %2684 = vmatprep.subr.mxu0 0.0
    %2685 = vmatpush2.msra.mxu0 0.0
    %2686 = vmatprep.subr.mxu0 0.0
    %2687 = vmatpush2.msra.mxu0 0.0
    %2688 = vmatprep.subr.mxu0 0.0
    %2689 = vmatpush2.msra.mxu0 0.0
    %2690 = vmatprep.mubr.f32.mxu0 0.0
    %2691 = vmatmul.mubr.f32.gmra.mxu0 %v2625
    %v2692 = vpop.f32.mrf.mxu0
    %v2693 = vadd.f32 %v549, %v2692
    %v2694 = vpop.f32.mrf.mxu0
    %2695 = vdwg.mxu0
    %v2696 = vsel %vm915, %v2693, -inf
    %2697 = vmax.xlane.f32.xlu0 %v2696
    %v2698 = vpop.xlane.xlu0 %2697
    %vm2699 = vcmp.ge.f32.partialorder %v2693, %v2698
    %v2700 = vsel %vm2699, 1, 0
    %v2701 = vcvt.s32.f32 %v2700
    %v2702 = vsel %vm915, %v2701, 0.0
    %2703 = vadd.xlane.f32.xlu0 %v2702
    %v2704 = vpop.xlane.xlu0 %2703
    %2705 = vmatprep.subr.mxu0 0.0
    %2706 = vmatpush1.msra.mxu0 %v565
    %2707 = vmatprep.subr.mxu0 0.0
    %2708 = vmatpush1.msra.mxu0 %v564
    %2709 = vmatprep.subr.mxu0 0.0
    %2710 = vmatpush1.msra.mxu0 %v563
    %2711 = vmatprep.subr.mxu0 0.0
    %2712 = vmatpush1.msra.mxu0 %v562
    %2713 = vmatprep.subr.mxu0 0.0
    %2714 = vmatpush1.msra.mxu0 %v561
    %2715 = vmatprep.subr.mxu0 0.0
    %2716 = vmatpush1.msra.mxu0 %v560
    %2717 = vmatprep.subr.mxu0 0.0
    %2718 = vmatpush1.msra.mxu0 %v559
    %2719 = vmatprep.subr.mxu0 0.0
    %2720 = vmatpush1.msra.mxu0 %v558
    %2721 = vmatprep.subr.mxu0 0.0
    %2722 = vmatpush1.msra.mxu0 %v557
    %2723 = vmatprep.subr.mxu0 0.0
    %2724 = vmatpush1.msra.mxu0 %v556
    %2725 = vmatprep.subr.mxu0 0.0
    %2726 = vmatpush1.msra.mxu0 %v555
    %2727 = vmatprep.subr.mxu0 0.0
    %2728 = vmatpush1.msra.mxu0 %v554
    %2729 = vmatprep.subr.mxu0 0.0
    %2730 = vmatpush1.msra.mxu0 %v553
    %2731 = vmatprep.subr.mxu0 0.0
    %2732 = vmatpush1.msra.mxu0 %v552
    %2733 = vmatprep.subr.mxu0 0.0
    %2734 = vmatpush1.msra.mxu0 %v551
    %2735 = vmatprep.subr.mxu0 0.0
    %2736 = vmatpush1.msra.mxu0 %v550
    %2737 = vmatprep.subr.mxu0 0.0
    %2738 = vmatpush2.msra.mxu0 0.0
    %2739 = vmatprep.subr.mxu0 0.0
    %2740 = vmatpush2.msra.mxu0 0.0
    %2741 = vmatprep.subr.mxu0 0.0
    %2742 = vmatpush2.msra.mxu0 0.0
    %2743 = vmatprep.subr.mxu0 0.0
    %2744 = vmatpush2.msra.mxu0 0.0
    %2745 = vmatprep.subr.mxu0 0.0
    %2746 = vmatpush2.msra.mxu0 0.0
    %2747 = vmatprep.subr.mxu0 0.0
    %2748 = vmatpush2.msra.mxu0 0.0
    %2749 = vmatprep.subr.mxu0 0.0
    %2750 = vmatpush2.msra.mxu0 0.0
    %2751 = vmatprep.subr.mxu0 0.0
    %2752 = vmatpush2.msra.mxu0 0.0
    %2753 = vmatprep.subr.mxu0 0.0
    %2754 = vmatpush2.msra.mxu0 0.0
    %2755 = vmatprep.subr.mxu0 0.0
    %2756 = vmatpush2.msra.mxu0 0.0
    %2757 = vmatprep.subr.mxu0 0.0
    %2758 = vmatpush2.msra.mxu0 0.0
    %2759 = vmatprep.subr.mxu0 0.0
    %2760 = vmatpush2.msra.mxu0 0.0
    %2761 = vmatprep.subr.mxu0 0.0
    %2762 = vmatpush2.msra.mxu0 0.0
    %2763 = vmatprep.subr.mxu0 0.0
    %2764 = vmatpush2.msra.mxu0 0.0
    %2765 = vmatprep.subr.mxu0 0.0
    %2766 = vmatpush2.msra.mxu0 0.0
    %2767 = vmatprep.subr.mxu0 0.0
    %2768 = vmatpush2.msra.mxu0 0.0
    %2769 = vmatprep.mubr.f32.mxu0 0.0
    %2770 = vmatmul.mubr.f32.gmra.mxu0 %v2701
    %v2771 = vpop.f32.mrf.mxu0
    %v2772 = vadd.f32 0.0, %v2771
    %v2773 = vpop.f32.mrf.mxu0
    %2774 = vdwg.mxu0
    %v2775 = vrcp.pop %v2704
    %v2776 = vmul.f32 %v2772, %v2775
    %v2777 = vrot.slane %v2615, 3
    %v2779 = vmul.f32 %v2777, %v2776
    %v2780 = vadd.f32 %v2625, %v2779
    %v2781 = vtanh.pop %v2780
    %v2782 = vrot.slane %v2615, 2
    %v2784 = vmul.f32 %v2782, %v2781
    %2785 = vst [vmem:[#allocation3 + $0x4] sm:$0x1] %v2784
    %s2786 = sadd.s32 %s1006, 4
    %p2787 = scmp.lt.s32.totalorder %s2786, 8
    %s2788 = scalar_select %p2787, 1, 0
    %v2789 = vstv %s2788
    %vm2790 = vcmp.eq.s32.totalorder %v2789, 1
    %v2791 = vsel %vm2790, %v2784, %v2346
    %v2792 = vsel %vm2790, %v2780, %v2347
    %s2793 = scalar_lea.vmem [#allocation2], 5
    %v2794 = vld [vmem:[%s2793] ss:$8 sm:$0xf]
    %v2795 = vld [vmem:[%s2793] ss:$8 sm:$0x10]
    %v2796 = vor.u32 %v2794, %v2795
    %2797 = vmatprep.subr.mxu0 %v529
    %2798 = vmatpush1.msra.mxu0 %v528
    %2799 = vmatprep.subr.mxu0 %v524
    %2800 = vmatpush1.msra.mxu0 %v523
    %2801 = vmatprep.subr.mxu0 %v519
    %2802 = vmatpush1.msra.mxu0 %v518
    %2803 = vmatprep.subr.mxu0 %v514
    %2804 = vmatpush1.msra.mxu0 %v513
    %2805 = vmatprep.subr.mxu0 %v509
    %2806 = vmatpush1.msra.mxu0 %v508
    %2807 = vmatprep.subr.mxu0 %v504
    %2808 = vmatpush1.msra.mxu0 %v503
    %2809 = vmatprep.subr.mxu0 %v499
    %2810 = vmatpush1.msra.mxu0 %v498
    %2811 = vmatprep.subr.mxu0 %v494
    %2812 = vmatpush1.msra.mxu0 %v493
    %2813 = vmatprep.subr.mxu0 %v489
    %2814 = vmatpush1.msra.mxu0 %v488
    %2815 = vmatprep.subr.mxu0 %v484
    %2816 = vmatpush1.msra.mxu0 %v483
    %2817 = vmatprep.subr.mxu0 %v479
    %2818 = vmatpush1.msra.mxu0 %v478
    %2819 = vmatprep.subr.mxu0 %v474
    %2820 = vmatpush1.msra.mxu0 %v473
    %2821 = vmatprep.subr.mxu0 %v469
    %2822 = vmatpush1.msra.mxu0 %v468
    %2823 = vmatprep.subr.mxu0 %v464
    %2824 = vmatpush1.msra.mxu0 %v463
    %2825 = vmatprep.subr.mxu0 %v459
    %2826 = vmatpush1.msra.mxu0 %v458
    %2827 = vmatprep.subr.mxu0 %v454
    %2828 = vmatpush1.msra.mxu0 %v453
    %2829 = vmatprep.subr.mxu0 0.0
    %2830 = vmatpush2.msra.mxu0 0.0
    %2831 = vmatprep.subr.mxu0 0.0
    %2832 = vmatpush2.msra.mxu0 0.0
    %2833 = vmatprep.subr.mxu0 0.0
    %2834 = vmatpush2.msra.mxu0 0.0
    %2835 = vmatprep.subr.mxu0 0.0
    %2836 = vmatpush2.msra.mxu0 0.0
    %2837 = vmatprep.subr.mxu0 0.0
    %2838 = vmatpush2.msra.mxu0 0.0
    %2839 = vmatprep.subr.mxu0 0.0
    %2840 = vmatpush2.msra.mxu0 0.0
    %2841 = vmatprep.subr.mxu0 0.0
    %2842 = vmatpush2.msra.mxu0 0.0
    %2843 = vmatprep.subr.mxu0 0.0
    %2844 = vmatpush2.msra.mxu0 0.0
    %2845 = vmatprep.subr.mxu0 0.0
    %2846 = vmatpush2.msra.mxu0 0.0
    %2847 = vmatprep.subr.mxu0 0.0
    %2848 = vmatpush2.msra.mxu0 0.0
    %2849 = vmatprep.subr.mxu0 0.0
    %2850 = vmatpush2.msra.mxu0 0.0
    %2851 = vmatprep.subr.mxu0 0.0
    %2852 = vmatpush2.msra.mxu0 0.0
    %2853 = vmatprep.subr.mxu0 0.0
    %2854 = vmatpush2.msra.mxu0 0.0
    %2855 = vmatprep.subr.mxu0 0.0
    %2856 = vmatpush2.msra.mxu0 0.0
    %2857 = vmatprep.subr.mxu0 0.0
    %2858 = vmatpush2.msra.mxu0 0.0
    %2859 = vmatprep.subr.mxu0 0.0
    %2860 = vmatpush2.msra.mxu0 0.0
    %2861 = vmatprep.mubr.f32.mxu0 0.0
    %2862 = vmatmul.mubr.f32.gmra.mxu0 %v2791
    %v2863 = vpop.f32.mrf.mxu0
    %v2864 = vadd.f32 0.0, %v2863
    %v2865 = vpop.f32.mrf.mxu0
    %v2866 = vadd.f32 0.0, %v2865
    %2867 = vdwg.mxu0
    %2868 = vmatprep.subr.mxu0 %v531
    %2869 = vmatpush1.msra.mxu0 %v530
    %2870 = vmatprep.subr.mxu0 %v526
    %2871 = vmatpush1.msra.mxu0 %v525
    %2872 = vmatprep.subr.mxu0 %v521
    %2873 = vmatpush1.msra.mxu0 %v520
    %2874 = vmatprep.subr.mxu0 %v516
    %2875 = vmatpush1.msra.mxu0 %v515
    %2876 = vmatprep.subr.mxu0 %v511
    %2877 = vmatpush1.msra.mxu0 %v510
    %2878 = vmatprep.subr.mxu0 %v506
    %2879 = vmatpush1.msra.mxu0 %v505
    %2880 = vmatprep.subr.mxu0 %v501
    %2881 = vmatpush1.msra.mxu0 %v500
    %2882 = vmatprep.subr.mxu0 %v496
    %2883 = vmatpush1.msra.mxu0 %v495
    %2884 = vmatprep.subr.mxu0 %v491
    %2885 = vmatpush1.msra.mxu0 %v490
    %2886 = vmatprep.subr.mxu0 %v486
    %2887 = vmatpush1.msra.mxu0 %v485
    %2888 = vmatprep.subr.mxu0 %v481
    %2889 = vmatpush1.msra.mxu0 %v480
    %2890 = vmatprep.subr.mxu0 %v476
    %2891 = vmatpush1.msra.mxu0 %v475
    %2892 = vmatprep.subr.mxu0 %v471
    %2893 = vmatpush1.msra.mxu0 %v470
    %2894 = vmatprep.subr.mxu0 %v466
    %2895 = vmatpush1.msra.mxu0 %v465
    %2896 = vmatprep.subr.mxu0 %v461
    %2897 = vmatpush1.msra.mxu0 %v460
    %2898 = vmatprep.subr.mxu0 %v456
    %2899 = vmatpush1.msra.mxu0 %v455
    %2900 = vmatprep.subr.mxu0 0.0
    %2901 = vmatpush2.msra.mxu0 0.0
    %2902 = vmatprep.subr.mxu0 0.0
    %2903 = vmatpush2.msra.mxu0 0.0
    %2904 = vmatprep.subr.mxu0 0.0
    %2905 = vmatpush2.msra.mxu0 0.0
    %2906 = vmatprep.subr.mxu0 0.0
    %2907 = vmatpush2.msra.mxu0 0.0
    %2908 = vmatprep.subr.mxu0 0.0
    %2909 = vmatpush2.msra.mxu0 0.0
    %2910 = vmatprep.subr.mxu0 0.0
    %2911 = vmatpush2.msra.mxu0 0.0
    %2912 = vmatprep.subr.mxu0 0.0
    %2913 = vmatpush2.msra.mxu0 0.0
    %2914 = vmatprep.subr.mxu0 0.0
    %2915 = vmatpush2.msra.mxu0 0.0
    %2916 = vmatprep.subr.mxu0 0.0
    %2917 = vmatpush2.msra.mxu0 0.0
    %2918 = vmatprep.subr.mxu0 0.0
    %2919 = vmatpush2.msra.mxu0 0.0
    %2920 = vmatprep.subr.mxu0 0.0
    %2921 = vmatpush2.msra.mxu0 0.0
    %2922 = vmatprep.subr.mxu0 0.0
    %2923 = vmatpush2.msra.mxu0 0.0
    %2924 = vmatprep.subr.mxu0 0.0
    %2925 = vmatpush2.msra.mxu0 0.0
    %2926 = vmatprep.subr.mxu0 0.0
    %2927 = vmatpush2.msra.mxu0 0.0
    %2928 = vmatprep.subr.mxu0 0.0
    %2929 = vmatpush2.msra.mxu0 0.0
    %2930 = vmatprep.subr.mxu0 0.0
    %2931 = vmatpush2.msra.mxu0 0.0
    %2932 = vmatprep.mubr.f32.mxu0 0.0
    %2933 = vmatmul.mubr.f32.gmra.mxu0 %v2791
    %v2934 = vpop.f32.mrf.mxu0
    %v2935 = vadd.f32 0.0, %v2934
    %v2936 = vpop.f32.mrf.mxu0
    %v2937 = vadd.f32 0.0, %v2936
    %2938 = vdwg.mxu0
    %2939 = vmatprep.subr.mxu0 0.0
    %2940 = vmatpush1.msra.mxu0 %v532
    %2941 = vmatprep.subr.mxu0 0.0
    %2942 = vmatpush1.msra.mxu0 %v527
    %2943 = vmatprep.subr.mxu0 0.0
    %2944 = vmatpush1.msra.mxu0 %v522
    %2945 = vmatprep.subr.mxu0 0.0
    %2946 = vmatpush1.msra.mxu0 %v517
    %2947 = vmatprep.subr.mxu0 0.0
    %2948 = vmatpush1.msra.mxu0 %v512
    %2949 = vmatprep.subr.mxu0 0.0
    %2950 = vmatpush1.msra.mxu0 %v507
    %2951 = vmatprep.subr.mxu0 0.0
    %2952 = vmatpush1.msra.mxu0 %v502
    %2953 = vmatprep.subr.mxu0 0.0
    %2954 = vmatpush1.msra.mxu0 %v497
    %2955 = vmatprep.subr.mxu0 0.0
    %2956 = vmatpush1.msra.mxu0 %v492
    %2957 = vmatprep.subr.mxu0 0.0
    %2958 = vmatpush1.msra.mxu0 %v487
    %2959 = vmatprep.subr.mxu0 0.0
    %2960 = vmatpush1.msra.mxu0 %v482
    %2961 = vmatprep.subr.mxu0 0.0
    %2962 = vmatpush1.msra.mxu0 %v477
    %2963 = vmatprep.subr.mxu0 0.0
    %2964 = vmatpush1.msra.mxu0 %v472
    %2965 = vmatprep.subr.mxu0 0.0
    %2966 = vmatpush1.msra.mxu0 %v467
    %2967 = vmatprep.subr.mxu0 0.0
    %2968 = vmatpush1.msra.mxu0 %v462
    %2969 = vmatprep.subr.mxu0 0.0
    %2970 = vmatpush1.msra.mxu0 %v457
    %2971 = vmatprep.subr.mxu0 0.0
    %2972 = vmatpush2.msra.mxu0 0.0
    %2973 = vmatprep.subr.mxu0 0.0
    %2974 = vmatpush2.msra.mxu0 0.0
    %2975 = vmatprep.subr.mxu0 0.0
    %2976 = vmatpush2.msra.mxu0 0.0
    %2977 = vmatprep.subr.mxu0 0.0
    %2978 = vmatpush2.msra.mxu0 0.0
    %2979 = vmatprep.subr.mxu0 0.0
    %2980 = vmatpush2.msra.mxu0 0.0
    %2981 = vmatprep.subr.mxu0 0.0
    %2982 = vmatpush2.msra.mxu0 0.0
    %2983 = vmatprep.subr.mxu0 0.0
    %2984 = vmatpush2.msra.mxu0 0.0
    %2985 = vmatprep.subr.mxu0 0.0
    %2986 = vmatpush2.msra.mxu0 0.0
    %2987 = vmatprep.subr.mxu0 0.0
    %2988 = vmatpush2.msra.mxu0 0.0
    %2989 = vmatprep.subr.mxu0 0.0
    %2990 = vmatpush2.msra.mxu0 0.0
    %2991 = vmatprep.subr.mxu0 0.0
    %2992 = vmatpush2.msra.mxu0 0.0
    %2993 = vmatprep.subr.mxu0 0.0
    %2994 = vmatpush2.msra.mxu0 0.0
    %2995 = vmatprep.subr.mxu0 0.0
    %2996 = vmatpush2.msra.mxu0 0.0
    %2997 = vmatprep.subr.mxu0 0.0
    %2998 = vmatpush2.msra.mxu0 0.0
    %2999 = vmatprep.subr.mxu0 0.0
    %3000 = vmatpush2.msra.mxu0 0.0
    %3001 = vmatprep.subr.mxu0 0.0
    %3002 = vmatpush2.msra.mxu0 0.0
    %3003 = vmatprep.mubr.f32.mxu0 0.0
    %3004 = vmatmul.mubr.f32.gmra.mxu0 %v2791
    %v3005 = vpop.f32.mrf.mxu0
    %v3006 = vadd.f32 0.0, %v3005
    %v3007 = vpop.f32.mrf.mxu0
    %3008 = vdwg.mxu0
    %v3014 = vcombine.low %v2864, %v2866
    %v3015 = vcombine.low %v2935, %v2937
    %v3017 = vunpack.c.l.s4 1966171168
    %v3018 = vunpack.c.0.s8 %v3017
    %v3019 = vlaneseq
    %v3020 = vshrl.u32 %v3019, 7
    %v3021 = vsub.s32 %v3018, %v3020
    %v3022 = vrot.slane %v3014, %v3021
    %v3024 = vunpack.c.l.s4 1966171168
    %v3025 = vunpack.c.0.s8 %v3024
    %v3026 = vlaneseq
    %v3027 = vshrl.u32 %v3026, 7
    %v3028 = vsub.s32 %v3025, %v3027
    %v3029 = vrot.slane %v3015, %v3028
    %v3031 = vunpack.c.l.s4 1966171168
    %v3032 = vunpack.c.0.s8 %v3031
    %v3033 = vlaneseq
    %v3034 = vshrl.u32 %v3033, 7
    %v3035 = vsub.s32 %v3032, %v3034
    %v3036 = vrot.slane %v3006, %v3035
    %v3037 = vcombine.low %v3022, %v3029
    %v3039 = vunpack.c.l.s4 1966171168
    %v3040 = vunpack.c.0.s8 %v3039
    %v3041 = vlaneseq
    %v3042 = vshrl.u32 %v3041, 7
    %v3043 = vsub.s32 %v3040, %v3042
    %v3044 = vrot.slane %v3037, %v3043
    %v3046 = vunpack.c.l.s4 1966171168
    %v3047 = vunpack.c.0.s8 %v3046
    %v3048 = vlaneseq
    %v3049 = vshrl.u32 %v3048, 7
    %v3050 = vsub.s32 %v3047, %v3049
    %v3051 = vrot.slane %v3036, %v3050
    %v3052 = vcombine.low %v3044, %v3051
    %v3054 = vadd.f32 %v2796, %v3052
    %v3055 = vxor.u32 %v3054, 2147483648
    %v3056 = vmul.f32 %v3055, 1.442695
    %v3057 = vpow.pop %v3056
    %v3058 = vadd.f32 %v3057, 1.0
    %v3059 = vrcp.pop %v3058
    %v3060 = vmul.f32 1.0, %v3059
    %v3062 = vrot.slane %v3054, 4
    %v3064 = vtanh.pop %v3062
    %v3065 = vmul.f32 %v3060, %v2792
    %v3067 = vrot.slane %v3060, 1
    %v3069 = vmul.f32 %v3067, %v3064
    %v3070 = vadd.f32 %v3065, %v3069
    %3071 = vmatprep.subr.mxu0 0.0
    %3072 = vmatpush1.msra.mxu0 %v548
    %3073 = vmatprep.subr.mxu0 0.0
    %3074 = vmatpush1.msra.mxu0 %v547
    %3075 = vmatprep.subr.mxu0 0.0
    %3076 = vmatpush1.msra.mxu0 %v546
    %3077 = vmatprep.subr.mxu0 0.0
    %3078 = vmatpush1.msra.mxu0 %v545
    %3079 = vmatprep.subr.mxu0 0.0
    %3080 = vmatpush1.msra.mxu0 %v544
    %3081 = vmatprep.subr.mxu0 0.0
    %3082 = vmatpush1.msra.mxu0 %v543
    %3083 = vmatprep.subr.mxu0 0.0
    %3084 = vmatpush1.msra.mxu0 %v542
    %3085 = vmatprep.subr.mxu0 0.0
    %3086 = vmatpush1.msra.mxu0 %v541
    %3087 = vmatprep.subr.mxu0 0.0
    %3088 = vmatpush1.msra.mxu0 %v540
    %3089 = vmatprep.subr.mxu0 0.0
    %3090 = vmatpush1.msra.mxu0 %v539
    %3091 = vmatprep.subr.mxu0 0.0
    %3092 = vmatpush1.msra.mxu0 %v538
    %3093 = vmatprep.subr.mxu0 0.0
    %3094 = vmatpush1.msra.mxu0 %v537
    %3095 = vmatprep.subr.mxu0 0.0
    %3096 = vmatpush1.msra.mxu0 %v536
    %3097 = vmatprep.subr.mxu0 0.0
    %3098 = vmatpush1.msra.mxu0 %v535
    %3099 = vmatprep.subr.mxu0 0.0
    %3100 = vmatpush1.msra.mxu0 %v534
    %3101 = vmatprep.subr.mxu0 0.0
    %3102 = vmatpush1.msra.mxu0 %v533
    %3103 = vmatprep.subr.mxu0 0.0
    %3104 = vmatpush2.msra.mxu0 0.0
    %3105 = vmatprep.subr.mxu0 0.0
    %3106 = vmatpush2.msra.mxu0 0.0
    %3107 = vmatprep.subr.mxu0 0.0
    %3108 = vmatpush2.msra.mxu0 0.0
    %3109 = vmatprep.subr.mxu0 0.0
    %3110 = vmatpush2.msra.mxu0 0.0
    %3111 = vmatprep.subr.mxu0 0.0
    %3112 = vmatpush2.msra.mxu0 0.0
    %3113 = vmatprep.subr.mxu0 0.0
    %3114 = vmatpush2.msra.mxu0 0.0
    %3115 = vmatprep.subr.mxu0 0.0
    %3116 = vmatpush2.msra.mxu0 0.0
    %3117 = vmatprep.subr.mxu0 0.0
    %3118 = vmatpush2.msra.mxu0 0.0
    %3119 = vmatprep.subr.mxu0 0.0
    %3120 = vmatpush2.msra.mxu0 0.0
    %3121 = vmatprep.subr.mxu0 0.0
    %3122 = vmatpush2.msra.mxu0 0.0
    %3123 = vmatprep.subr.mxu0 0.0
    %3124 = vmatpush2.msra.mxu0 0.0
    %3125 = vmatprep.subr.mxu0 0.0
    %3126 = vmatpush2.msra.mxu0 0.0
    %3127 = vmatprep.subr.mxu0 0.0
    %3128 = vmatpush2.msra.mxu0 0.0
    %3129 = vmatprep.subr.mxu0 0.0
    %3130 = vmatpush2.msra.mxu0 0.0
    %3131 = vmatprep.subr.mxu0 0.0
    %3132 = vmatpush2.msra.mxu0 0.0
    %3133 = vmatprep.subr.mxu0 0.0
    %3134 = vmatpush2.msra.mxu0 0.0
    %3135 = vmatprep.mubr.f32.mxu0 0.0
    %3136 = vmatmul.mubr.f32.gmra.mxu0 %v3070
    %v3137 = vpop.f32.mrf.mxu0
    %v3138 = vadd.f32 %v549, %v3137
    %v3139 = vpop.f32.mrf.mxu0
    %3140 = vdwg.mxu0
    %v3141 = vsel %vm915, %v3138, -inf
    %3142 = vmax.xlane.f32.xlu0 %v3141
    %v3143 = vpop.xlane.xlu0 %3142
    %vm3144 = vcmp.ge.f32.partialorder %v3138, %v3143
    %v3145 = vsel %vm3144, 1, 0
    %v3146 = vcvt.s32.f32 %v3145
    %v3147 = vsel %vm915, %v3146, 0.0
    %3148 = vadd.xlane.f32.xlu0 %v3147
    %v3149 = vpop.xlane.xlu0 %3148
    %3150 = vmatprep.subr.mxu0 0.0
    %3151 = vmatpush1.msra.mxu0 %v565
    %3152 = vmatprep.subr.mxu0 0.0
    %3153 = vmatpush1.msra.mxu0 %v564
    %3154 = vmatprep.subr.mxu0 0.0
    %3155 = vmatpush1.msra.mxu0 %v563
    %3156 = vmatprep.subr.mxu0 0.0
    %3157 = vmatpush1.msra.mxu0 %v562
    %3158 = vmatprep.subr.mxu0 0.0
    %3159 = vmatpush1.msra.mxu0 %v561
    %3160 = vmatprep.subr.mxu0 0.0
    %3161 = vmatpush1.msra.mxu0 %v560
    %3162 = vmatprep.subr.mxu0 0.0
    %3163 = vmatpush1.msra.mxu0 %v559
    %3164 = vmatprep.subr.mxu0 0.0
    %3165 = vmatpush1.msra.mxu0 %v558
    %3166 = vmatprep.subr.mxu0 0.0
    %3167 = vmatpush1.msra.mxu0 %v557
    %3168 = vmatprep.subr.mxu0 0.0
    %3169 = vmatpush1.msra.mxu0 %v556
    %3170 = vmatprep.subr.mxu0 0.0
    %3171 = vmatpush1.msra.mxu0 %v555
    %3172 = vmatprep.subr.mxu0 0.0
    %3173 = vmatpush1.msra.mxu0 %v554
    %3174 = vmatprep.subr.mxu0 0.0
    %3175 = vmatpush1.msra.mxu0 %v553
    %3176 = vmatprep.subr.mxu0 0.0
    %3177 = vmatpush1.msra.mxu0 %v552
    %3178 = vmatprep.subr.mxu0 0.0
    %3179 = vmatpush1.msra.mxu0 %v551
    %3180 = vmatprep.subr.mxu0 0.0
    %3181 = vmatpush1.msra.mxu0 %v550
    %3182 = vmatprep.subr.mxu0 0.0
    %3183 = vmatpush2.msra.mxu0 0.0
    %3184 = vmatprep.subr.mxu0 0.0
    %3185 = vmatpush2.msra.mxu0 0.0
    %3186 = vmatprep.subr.mxu0 0.0
    %3187 = vmatpush2.msra.mxu0 0.0
    %3188 = vmatprep.subr.mxu0 0.0
    %3189 = vmatpush2.msra.mxu0 0.0
    %3190 = vmatprep.subr.mxu0 0.0
    %3191 = vmatpush2.msra.mxu0 0.0
    %3192 = vmatprep.subr.mxu0 0.0
    %3193 = vmatpush2.msra.mxu0 0.0
    %3194 = vmatprep.subr.mxu0 0.0
    %3195 = vmatpush2.msra.mxu0 0.0
    %3196 = vmatprep.subr.mxu0 0.0
    %3197 = vmatpush2.msra.mxu0 0.0
    %3198 = vmatprep.subr.mxu0 0.0
    %3199 = vmatpush2.msra.mxu0 0.0
    %3200 = vmatprep.subr.mxu0 0.0
    %3201 = vmatpush2.msra.mxu0 0.0
    %3202 = vmatprep.subr.mxu0 0.0
    %3203 = vmatpush2.msra.mxu0 0.0
    %3204 = vmatprep.subr.mxu0 0.0
    %3205 = vmatpush2.msra.mxu0 0.0
    %3206 = vmatprep.subr.mxu0 0.0
    %3207 = vmatpush2.msra.mxu0 0.0
    %3208 = vmatprep.subr.mxu0 0.0
    %3209 = vmatpush2.msra.mxu0 0.0
    %3210 = vmatprep.subr.mxu0 0.0
    %3211 = vmatpush2.msra.mxu0 0.0
    %3212 = vmatprep.subr.mxu0 0.0
    %3213 = vmatpush2.msra.mxu0 0.0
    %3214 = vmatprep.mubr.f32.mxu0 0.0
    %3215 = vmatmul.mubr.f32.gmra.mxu0 %v3146
    %v3216 = vpop.f32.mrf.mxu0
    %v3217 = vadd.f32 0.0, %v3216
    %v3218 = vpop.f32.mrf.mxu0
    %3219 = vdwg.mxu0
    %v3220 = vrcp.pop %v3149
    %v3221 = vmul.f32 %v3217, %v3220
    %v3222 = vrot.slane %v3060, 3
    %v3224 = vmul.f32 %v3222, %v3221
    %v3225 = vadd.f32 %v3070, %v3224
    %v3226 = vtanh.pop %v3225
    %v3227 = vrot.slane %v3060, 2
    %v3229 = vmul.f32 %v3227, %v3226
    %3230 = vst [vmem:[#allocation3 + $0x5] sm:$0x1] %v3229
    %s3231 = sadd.s32 %s1006, 5
    %p3232 = scmp.lt.s32.totalorder %s3231, 8
    %s3233 = scalar_select %p3232, 1, 0
    %v3234 = vstv %s3233
    %vm3235 = vcmp.eq.s32.totalorder %v3234, 1
    %v3236 = vsel %vm3235, %v3229, %v2791
    %v3237 = vsel %vm3235, %v3225, %v2792
    %s3238 = scalar_lea.vmem [#allocation2], 6
    %v3239 = vld [vmem:[%s3238] ss:$8 sm:$0xf]
    %v3240 = vld [vmem:[%s3238] ss:$8 sm:$0x10]
    %v3241 = vor.u32 %v3239, %v3240
    %3242 = vmatprep.subr.mxu0 %v529
    %3243 = vmatpush1.msra.mxu0 %v528
    %3244 = vmatprep.subr.mxu0 %v524
    %3245 = vmatpush1.msra.mxu0 %v523
    %3246 = vmatprep.subr.mxu0 %v519
    %3247 = vmatpush1.msra.mxu0 %v518
    %3248 = vmatprep.subr.mxu0 %v514
    %3249 = vmatpush1.msra.mxu0 %v513
    %3250 = vmatprep.subr.mxu0 %v509
    %3251 = vmatpush1.msra.mxu0 %v508
    %3252 = vmatprep.subr.mxu0 %v504
    %3253 = vmatpush1.msra.mxu0 %v503
    %3254 = vmatprep.subr.mxu0 %v499
    %3255 = vmatpush1.msra.mxu0 %v498
    %3256 = vmatprep.subr.mxu0 %v494
    %3257 = vmatpush1.msra.mxu0 %v493
    %3258 = vmatprep.subr.mxu0 %v489
    %3259 = vmatpush1.msra.mxu0 %v488
    %3260 = vmatprep.subr.mxu0 %v484
    %3261 = vmatpush1.msra.mxu0 %v483
    %3262 = vmatprep.subr.mxu0 %v479
    %3263 = vmatpush1.msra.mxu0 %v478
    %3264 = vmatprep.subr.mxu0 %v474
    %3265 = vmatpush1.msra.mxu0 %v473
    %3266 = vmatprep.subr.mxu0 %v469
    %3267 = vmatpush1.msra.mxu0 %v468
    %3268 = vmatprep.subr.mxu0 %v464
    %3269 = vmatpush1.msra.mxu0 %v463
    %3270 = vmatprep.subr.mxu0 %v459
    %3271 = vmatpush1.msra.mxu0 %v458
    %3272 = vmatprep.subr.mxu0 %v454
    %3273 = vmatpush1.msra.mxu0 %v453
    %3274 = vmatprep.subr.mxu0 0.0
    %3275 = vmatpush2.msra.mxu0 0.0
    %3276 = vmatprep.subr.mxu0 0.0
    %3277 = vmatpush2.msra.mxu0 0.0
    %3278 = vmatprep.subr.mxu0 0.0
    %3279 = vmatpush2.msra.mxu0 0.0
    %3280 = vmatprep.subr.mxu0 0.0
    %3281 = vmatpush2.msra.mxu0 0.0
    %3282 = vmatprep.subr.mxu0 0.0
    %3283 = vmatpush2.msra.mxu0 0.0
    %3284 = vmatprep.subr.mxu0 0.0
    %3285 = vmatpush2.msra.mxu0 0.0
    %3286 = vmatprep.subr.mxu0 0.0
    %3287 = vmatpush2.msra.mxu0 0.0
    %3288 = vmatprep.subr.mxu0 0.0
    %3289 = vmatpush2.msra.mxu0 0.0
    %3290 = vmatprep.subr.mxu0 0.0
    %3291 = vmatpush2.msra.mxu0 0.0
    %3292 = vmatprep.subr.mxu0 0.0
    %3293 = vmatpush2.msra.mxu0 0.0
    %3294 = vmatprep.subr.mxu0 0.0
    %3295 = vmatpush2.msra.mxu0 0.0
    %3296 = vmatprep.subr.mxu0 0.0
    %3297 = vmatpush2.msra.mxu0 0.0
    %3298 = vmatprep.subr.mxu0 0.0
    %3299 = vmatpush2.msra.mxu0 0.0
    %3300 = vmatprep.subr.mxu0 0.0
    %3301 = vmatpush2.msra.mxu0 0.0
    %3302 = vmatprep.subr.mxu0 0.0
    %3303 = vmatpush2.msra.mxu0 0.0
    %3304 = vmatprep.subr.mxu0 0.0
    %3305 = vmatpush2.msra.mxu0 0.0
    %3306 = vmatprep.mubr.f32.mxu0 0.0
    %3307 = vmatmul.mubr.f32.gmra.mxu0 %v3236
    %v3308 = vpop.f32.mrf.mxu0
    %v3309 = vadd.f32 0.0, %v3308
    %v3310 = vpop.f32.mrf.mxu0
    %v3311 = vadd.f32 0.0, %v3310
    %3312 = vdwg.mxu0
    %3313 = vmatprep.subr.mxu0 %v531
    %3314 = vmatpush1.msra.mxu0 %v530
    %3315 = vmatprep.subr.mxu0 %v526
    %3316 = vmatpush1.msra.mxu0 %v525
    %3317 = vmatprep.subr.mxu0 %v521
    %3318 = vmatpush1.msra.mxu0 %v520
    %3319 = vmatprep.subr.mxu0 %v516
    %3320 = vmatpush1.msra.mxu0 %v515
    %3321 = vmatprep.subr.mxu0 %v511
    %3322 = vmatpush1.msra.mxu0 %v510
    %3323 = vmatprep.subr.mxu0 %v506
    %3324 = vmatpush1.msra.mxu0 %v505
    %3325 = vmatprep.subr.mxu0 %v501
    %3326 = vmatpush1.msra.mxu0 %v500
    %3327 = vmatprep.subr.mxu0 %v496
    %3328 = vmatpush1.msra.mxu0 %v495
    %3329 = vmatprep.subr.mxu0 %v491
    %3330 = vmatpush1.msra.mxu0 %v490
    %3331 = vmatprep.subr.mxu0 %v486
    %3332 = vmatpush1.msra.mxu0 %v485
    %3333 = vmatprep.subr.mxu0 %v481
    %3334 = vmatpush1.msra.mxu0 %v480
    %3335 = vmatprep.subr.mxu0 %v476
    %3336 = vmatpush1.msra.mxu0 %v475
    %3337 = vmatprep.subr.mxu0 %v471
    %3338 = vmatpush1.msra.mxu0 %v470
    %3339 = vmatprep.subr.mxu0 %v466
    %3340 = vmatpush1.msra.mxu0 %v465
    %3341 = vmatprep.subr.mxu0 %v461
    %3342 = vmatpush1.msra.mxu0 %v460
    %3343 = vmatprep.subr.mxu0 %v456
    %3344 = vmatpush1.msra.mxu0 %v455
    %3345 = vmatprep.subr.mxu0 0.0
    %3346 = vmatpush2.msra.mxu0 0.0
    %3347 = vmatprep.subr.mxu0 0.0
    %3348 = vmatpush2.msra.mxu0 0.0
    %3349 = vmatprep.subr.mxu0 0.0
    %3350 = vmatpush2.msra.mxu0 0.0
    %3351 = vmatprep.subr.mxu0 0.0
    %3352 = vmatpush2.msra.mxu0 0.0
    %3353 = vmatprep.subr.mxu0 0.0
    %3354 = vmatpush2.msra.mxu0 0.0
    %3355 = vmatprep.subr.mxu0 0.0
    %3356 = vmatpush2.msra.mxu0 0.0
    %3357 = vmatprep.subr.mxu0 0.0
    %3358 = vmatpush2.msra.mxu0 0.0
    %3359 = vmatprep.subr.mxu0 0.0
    %3360 = vmatpush2.msra.mxu0 0.0
    %3361 = vmatprep.subr.mxu0 0.0
    %3362 = vmatpush2.msra.mxu0 0.0
    %3363 = vmatprep.subr.mxu0 0.0
    %3364 = vmatpush2.msra.mxu0 0.0
    %3365 = vmatprep.subr.mxu0 0.0
    %3366 = vmatpush2.msra.mxu0 0.0
    %3367 = vmatprep.subr.mxu0 0.0
    %3368 = vmatpush2.msra.mxu0 0.0
    %3369 = vmatprep.subr.mxu0 0.0
    %3370 = vmatpush2.msra.mxu0 0.0
    %3371 = vmatprep.subr.mxu0 0.0
    %3372 = vmatpush2.msra.mxu0 0.0
    %3373 = vmatprep.subr.mxu0 0.0
    %3374 = vmatpush2.msra.mxu0 0.0
    %3375 = vmatprep.subr.mxu0 0.0
    %3376 = vmatpush2.msra.mxu0 0.0
    %3377 = vmatprep.mubr.f32.mxu0 0.0
    %3378 = vmatmul.mubr.f32.gmra.mxu0 %v3236
    %v3379 = vpop.f32.mrf.mxu0
    %v3380 = vadd.f32 0.0, %v3379
    %v3381 = vpop.f32.mrf.mxu0
    %v3382 = vadd.f32 0.0, %v3381
    %3383 = vdwg.mxu0
    %3384 = vmatprep.subr.mxu0 0.0
    %3385 = vmatpush1.msra.mxu0 %v532
    %3386 = vmatprep.subr.mxu0 0.0
    %3387 = vmatpush1.msra.mxu0 %v527
    %3388 = vmatprep.subr.mxu0 0.0
    %3389 = vmatpush1.msra.mxu0 %v522
    %3390 = vmatprep.subr.mxu0 0.0
    %3391 = vmatpush1.msra.mxu0 %v517
    %3392 = vmatprep.subr.mxu0 0.0
    %3393 = vmatpush1.msra.mxu0 %v512
    %3394 = vmatprep.subr.mxu0 0.0
    %3395 = vmatpush1.msra.mxu0 %v507
    %3396 = vmatprep.subr.mxu0 0.0
    %3397 = vmatpush1.msra.mxu0 %v502
    %3398 = vmatprep.subr.mxu0 0.0
    %3399 = vmatpush1.msra.mxu0 %v497
    %3400 = vmatprep.subr.mxu0 0.0
    %3401 = vmatpush1.msra.mxu0 %v492
    %3402 = vmatprep.subr.mxu0 0.0
    %3403 = vmatpush1.msra.mxu0 %v487
    %3404 = vmatprep.subr.mxu0 0.0
    %3405 = vmatpush1.msra.mxu0 %v482
    %3406 = vmatprep.subr.mxu0 0.0
    %3407 = vmatpush1.msra.mxu0 %v477
    %3408 = vmatprep.subr.mxu0 0.0
    %3409 = vmatpush1.msra.mxu0 %v472
    %3410 = vmatprep.subr.mxu0 0.0
    %3411 = vmatpush1.msra.mxu0 %v467
    %3412 = vmatprep.subr.mxu0 0.0
    %3413 = vmatpush1.msra.mxu0 %v462
    %3414 = vmatprep.subr.mxu0 0.0
    %3415 = vmatpush1.msra.mxu0 %v457
    %3416 = vmatprep.subr.mxu0 0.0
    %3417 = vmatpush2.msra.mxu0 0.0
    %3418 = vmatprep.subr.mxu0 0.0
    %3419 = vmatpush2.msra.mxu0 0.0
    %3420 = vmatprep.subr.mxu0 0.0
    %3421 = vmatpush2.msra.mxu0 0.0
    %3422 = vmatprep.subr.mxu0 0.0
    %3423 = vmatpush2.msra.mxu0 0.0
    %3424 = vmatprep.subr.mxu0 0.0
    %3425 = vmatpush2.msra.mxu0 0.0
    %3426 = vmatprep.subr.mxu0 0.0
    %3427 = vmatpush2.msra.mxu0 0.0
    %3428 = vmatprep.subr.mxu0 0.0
    %3429 = vmatpush2.msra.mxu0 0.0
    %3430 = vmatprep.subr.mxu0 0.0
    %3431 = vmatpush2.msra.mxu0 0.0
    %3432 = vmatprep.subr.mxu0 0.0
    %3433 = vmatpush2.msra.mxu0 0.0
    %3434 = vmatprep.subr.mxu0 0.0
    %3435 = vmatpush2.msra.mxu0 0.0
    %3436 = vmatprep.subr.mxu0 0.0
    %3437 = vmatpush2.msra.mxu0 0.0
    %3438 = vmatprep.subr.mxu0 0.0
    %3439 = vmatpush2.msra.mxu0 0.0
    %3440 = vmatprep.subr.mxu0 0.0
    %3441 = vmatpush2.msra.mxu0 0.0
    %3442 = vmatprep.subr.mxu0 0.0
    %3443 = vmatpush2.msra.mxu0 0.0
    %3444 = vmatprep.subr.mxu0 0.0
    %3445 = vmatpush2.msra.mxu0 0.0
    %3446 = vmatprep.subr.mxu0 0.0
    %3447 = vmatpush2.msra.mxu0 0.0
    %3448 = vmatprep.mubr.f32.mxu0 0.0
    %3449 = vmatmul.mubr.f32.gmra.mxu0 %v3236
    %v3450 = vpop.f32.mrf.mxu0
    %v3451 = vadd.f32 0.0, %v3450
    %v3452 = vpop.f32.mrf.mxu0
    %3453 = vdwg.mxu0
    %v3459 = vcombine.low %v3309, %v3311
    %v3460 = vcombine.low %v3380, %v3382
    %v3462 = vunpack.c.l.s4 1966171168
    %v3463 = vunpack.c.0.s8 %v3462
    %v3464 = vlaneseq
    %v3465 = vshrl.u32 %v3464, 7
    %v3466 = vsub.s32 %v3463, %v3465
    %v3467 = vrot.slane %v3459, %v3466
    %v3469 = vunpack.c.l.s4 1966171168
    %v3470 = vunpack.c.0.s8 %v3469
    %v3471 = vlaneseq
    %v3472 = vshrl.u32 %v3471, 7
    %v3473 = vsub.s32 %v3470, %v3472
    %v3474 = vrot.slane %v3460, %v3473
    %v3476 = vunpack.c.l.s4 1966171168
    %v3477 = vunpack.c.0.s8 %v3476
    %v3478 = vlaneseq
    %v3479 = vshrl.u32 %v3478, 7
    %v3480 = vsub.s32 %v3477, %v3479
    %v3481 = vrot.slane %v3451, %v3480
    %v3482 = vcombine.low %v3467, %v3474
    %v3484 = vunpack.c.l.s4 1966171168
    %v3485 = vunpack.c.0.s8 %v3484
    %v3486 = vlaneseq
    %v3487 = vshrl.u32 %v3486, 7
    %v3488 = vsub.s32 %v3485, %v3487
    %v3489 = vrot.slane %v3482, %v3488
    %v3491 = vunpack.c.l.s4 1966171168
    %v3492 = vunpack.c.0.s8 %v3491
    %v3493 = vlaneseq
    %v3494 = vshrl.u32 %v3493, 7
    %v3495 = vsub.s32 %v3492, %v3494
    %v3496 = vrot.slane %v3481, %v3495
    %v3497 = vcombine.low %v3489, %v3496
    %v3499 = vadd.f32 %v3241, %v3497
    %v3500 = vxor.u32 %v3499, 2147483648
    %v3501 = vmul.f32 %v3500, 1.442695
    %v3502 = vpow.pop %v3501
    %v3503 = vadd.f32 %v3502, 1.0
    %v3504 = vrcp.pop %v3503
    %v3505 = vmul.f32 1.0, %v3504
    %v3507 = vrot.slane %v3499, 4
    %v3509 = vtanh.pop %v3507
    %v3510 = vmul.f32 %v3505, %v3237
    %v3512 = vrot.slane %v3505, 1
    %v3514 = vmul.f32 %v3512, %v3509
    %v3515 = vadd.f32 %v3510, %v3514
    %3516 = vmatprep.subr.mxu0 0.0
    %3517 = vmatpush1.msra.mxu0 %v548
    %3518 = vmatprep.subr.mxu0 0.0
    %3519 = vmatpush1.msra.mxu0 %v547
    %3520 = vmatprep.subr.mxu0 0.0
    %3521 = vmatpush1.msra.mxu0 %v546
    %3522 = vmatprep.subr.mxu0 0.0
    %3523 = vmatpush1.msra.mxu0 %v545
    %3524 = vmatprep.subr.mxu0 0.0
    %3525 = vmatpush1.msra.mxu0 %v544
    %3526 = vmatprep.subr.mxu0 0.0
    %3527 = vmatpush1.msra.mxu0 %v543
    %3528 = vmatprep.subr.mxu0 0.0
    %3529 = vmatpush1.msra.mxu0 %v542
    %3530 = vmatprep.subr.mxu0 0.0
    %3531 = vmatpush1.msra.mxu0 %v541
    %3532 = vmatprep.subr.mxu0 0.0
    %3533 = vmatpush1.msra.mxu0 %v540
    %3534 = vmatprep.subr.mxu0 0.0
    %3535 = vmatpush1.msra.mxu0 %v539
    %3536 = vmatprep.subr.mxu0 0.0
    %3537 = vmatpush1.msra.mxu0 %v538
    %3538 = vmatprep.subr.mxu0 0.0
    %3539 = vmatpush1.msra.mxu0 %v537
    %3540 = vmatprep.subr.mxu0 0.0
    %3541 = vmatpush1.msra.mxu0 %v536
    %3542 = vmatprep.subr.mxu0 0.0
    %3543 = vmatpush1.msra.mxu0 %v535
    %3544 = vmatprep.subr.mxu0 0.0
    %3545 = vmatpush1.msra.mxu0 %v534
    %3546 = vmatprep.subr.mxu0 0.0
    %3547 = vmatpush1.msra.mxu0 %v533
    %3548 = vmatprep.subr.mxu0 0.0
    %3549 = vmatpush2.msra.mxu0 0.0
    %3550 = vmatprep.subr.mxu0 0.0
    %3551 = vmatpush2.msra.mxu0 0.0
    %3552 = vmatprep.subr.mxu0 0.0
    %3553 = vmatpush2.msra.mxu0 0.0
    %3554 = vmatprep.subr.mxu0 0.0
    %3555 = vmatpush2.msra.mxu0 0.0
    %3556 = vmatprep.subr.mxu0 0.0
    %3557 = vmatpush2.msra.mxu0 0.0
    %3558 = vmatprep.subr.mxu0 0.0
    %3559 = vmatpush2.msra.mxu0 0.0
    %3560 = vmatprep.subr.mxu0 0.0
    %3561 = vmatpush2.msra.mxu0 0.0
    %3562 = vmatprep.subr.mxu0 0.0
    %3563 = vmatpush2.msra.mxu0 0.0
    %3564 = vmatprep.subr.mxu0 0.0
    %3565 = vmatpush2.msra.mxu0 0.0
    %3566 = vmatprep.subr.mxu0 0.0
    %3567 = vmatpush2.msra.mxu0 0.0
    %3568 = vmatprep.subr.mxu0 0.0
    %3569 = vmatpush2.msra.mxu0 0.0
    %3570 = vmatprep.subr.mxu0 0.0
    %3571 = vmatpush2.msra.mxu0 0.0
    %3572 = vmatprep.subr.mxu0 0.0
    %3573 = vmatpush2.msra.mxu0 0.0
    %3574 = vmatprep.subr.mxu0 0.0
    %3575 = vmatpush2.msra.mxu0 0.0
    %3576 = vmatprep.subr.mxu0 0.0
    %3577 = vmatpush2.msra.mxu0 0.0
    %3578 = vmatprep.subr.mxu0 0.0
    %3579 = vmatpush2.msra.mxu0 0.0
    %3580 = vmatprep.mubr.f32.mxu0 0.0
    %3581 = vmatmul.mubr.f32.gmra.mxu0 %v3515
    %v3582 = vpop.f32.mrf.mxu0
    %v3583 = vadd.f32 %v549, %v3582
    %v3584 = vpop.f32.mrf.mxu0
    %3585 = vdwg.mxu0
    %v3586 = vsel %vm915, %v3583, -inf
    %3587 = vmax.xlane.f32.xlu0 %v3586
    %v3588 = vpop.xlane.xlu0 %3587
    %vm3589 = vcmp.ge.f32.partialorder %v3583, %v3588
    %v3590 = vsel %vm3589, 1, 0
    %v3591 = vcvt.s32.f32 %v3590
    %v3592 = vsel %vm915, %v3591, 0.0
    %3593 = vadd.xlane.f32.xlu0 %v3592
    %v3594 = vpop.xlane.xlu0 %3593
    %3595 = vmatprep.subr.mxu0 0.0
    %3596 = vmatpush1.msra.mxu0 %v565
    %3597 = vmatprep.subr.mxu0 0.0
    %3598 = vmatpush1.msra.mxu0 %v564
    %3599 = vmatprep.subr.mxu0 0.0
    %3600 = vmatpush1.msra.mxu0 %v563
    %3601 = vmatprep.subr.mxu0 0.0
    %3602 = vmatpush1.msra.mxu0 %v562
    %3603 = vmatprep.subr.mxu0 0.0
    %3604 = vmatpush1.msra.mxu0 %v561
    %3605 = vmatprep.subr.mxu0 0.0
    %3606 = vmatpush1.msra.mxu0 %v560
    %3607 = vmatprep.subr.mxu0 0.0
    %3608 = vmatpush1.msra.mxu0 %v559
    %3609 = vmatprep.subr.mxu0 0.0
    %3610 = vmatpush1.msra.mxu0 %v558
    %3611 = vmatprep.subr.mxu0 0.0
    %3612 = vmatpush1.msra.mxu0 %v557
    %3613 = vmatprep.subr.mxu0 0.0
    %3614 = vmatpush1.msra.mxu0 %v556
    %3615 = vmatprep.subr.mxu0 0.0
    %3616 = vmatpush1.msra.mxu0 %v555
    %3617 = vmatprep.subr.mxu0 0.0
    %3618 = vmatpush1.msra.mxu0 %v554
    %3619 = vmatprep.subr.mxu0 0.0
    %3620 = vmatpush1.msra.mxu0 %v553
    %3621 = vmatprep.subr.mxu0 0.0
    %3622 = vmatpush1.msra.mxu0 %v552
    %3623 = vmatprep.subr.mxu0 0.0
    %3624 = vmatpush1.msra.mxu0 %v551
    %3625 = vmatprep.subr.mxu0 0.0
    %3626 = vmatpush1.msra.mxu0 %v550
    %3627 = vmatprep.subr.mxu0 0.0
    %3628 = vmatpush2.msra.mxu0 0.0
    %3629 = vmatprep.subr.mxu0 0.0
    %3630 = vmatpush2.msra.mxu0 0.0
    %3631 = vmatprep.subr.mxu0 0.0
    %3632 = vmatpush2.msra.mxu0 0.0
    %3633 = vmatprep.subr.mxu0 0.0
    %3634 = vmatpush2.msra.mxu0 0.0
    %3635 = vmatprep.subr.mxu0 0.0
    %3636 = vmatpush2.msra.mxu0 0.0
    %3637 = vmatprep.subr.mxu0 0.0
    %3638 = vmatpush2.msra.mxu0 0.0
    %3639 = vmatprep.subr.mxu0 0.0
    %3640 = vmatpush2.msra.mxu0 0.0
    %3641 = vmatprep.subr.mxu0 0.0
    %3642 = vmatpush2.msra.mxu0 0.0
    %3643 = vmatprep.subr.mxu0 0.0
    %3644 = vmatpush2.msra.mxu0 0.0
    %3645 = vmatprep.subr.mxu0 0.0
    %3646 = vmatpush2.msra.mxu0 0.0
    %3647 = vmatprep.subr.mxu0 0.0
    %3648 = vmatpush2.msra.mxu0 0.0
    %3649 = vmatprep.subr.mxu0 0.0
    %3650 = vmatpush2.msra.mxu0 0.0
    %3651 = vmatprep.subr.mxu0 0.0
    %3652 = vmatpush2.msra.mxu0 0.0
    %3653 = vmatprep.subr.mxu0 0.0
    %3654 = vmatpush2.msra.mxu0 0.0
    %3655 = vmatprep.subr.mxu0 0.0
    %3656 = vmatpush2.msra.mxu0 0.0
    %3657 = vmatprep.subr.mxu0 0.0
    %3658 = vmatpush2.msra.mxu0 0.0
    %3659 = vmatprep.mubr.f32.mxu0 0.0
    %3660 = vmatmul.mubr.f32.gmra.mxu0 %v3591
    %v3661 = vpop.f32.mrf.mxu0
    %v3662 = vadd.f32 0.0, %v3661
    %v3663 = vpop.f32.mrf.mxu0
    %3664 = vdwg.mxu0
    %v3665 = vrcp.pop %v3594
    %v3666 = vmul.f32 %v3662, %v3665
    %v3667 = vrot.slane %v3505, 3
    %v3669 = vmul.f32 %v3667, %v3666
    %v3670 = vadd.f32 %v3515, %v3669
    %v3671 = vtanh.pop %v3670
    %v3672 = vrot.slane %v3505, 2
    %v3674 = vmul.f32 %v3672, %v3671
    %3675 = vst [vmem:[#allocation3 + $0x6] sm:$0x1] %v3674
    %s3676 = sadd.s32 %s1006, 6
    %p3677 = scmp.lt.s32.totalorder %s3676, 8
    %s3678 = scalar_select %p3677, 1, 0
    %v3679 = vstv %s3678
    %vm3680 = vcmp.eq.s32.totalorder %v3679, 1
    %v3681 = vsel %vm3680, %v3674, %v3236
    %v3682 = vsel %vm3680, %v3670, %v3237
    %s3683 = scalar_lea.vmem [#allocation2], 7
    %v3684 = vld [vmem:[%s3683] ss:$8 sm:$0xf]
    %v3685 = vld [vmem:[%s3683] ss:$8 sm:$0x10]
    %v3686 = vor.u32 %v3684, %v3685
    %3687 = vmatprep.subr.mxu0 %v529
    %3688 = vmatpush1.msra.mxu0 %v528
    %3689 = vmatprep.subr.mxu0 %v524
    %3690 = vmatpush1.msra.mxu0 %v523
    %3691 = vmatprep.subr.mxu0 %v519
    %3692 = vmatpush1.msra.mxu0 %v518
    %3693 = vmatprep.subr.mxu0 %v514
    %3694 = vmatpush1.msra.mxu0 %v513
    %3695 = vmatprep.subr.mxu0 %v509
    %3696 = vmatpush1.msra.mxu0 %v508
    %3697 = vmatprep.subr.mxu0 %v504
    %3698 = vmatpush1.msra.mxu0 %v503
    %3699 = vmatprep.subr.mxu0 %v499
    %3700 = vmatpush1.msra.mxu0 %v498
    %3701 = vmatprep.subr.mxu0 %v494
    %3702 = vmatpush1.msra.mxu0 %v493
    %3703 = vmatprep.subr.mxu0 %v489
    %3704 = vmatpush1.msra.mxu0 %v488
    %3705 = vmatprep.subr.mxu0 %v484
    %3706 = vmatpush1.msra.mxu0 %v483
    %3707 = vmatprep.subr.mxu0 %v479
    %3708 = vmatpush1.msra.mxu0 %v478
    %3709 = vmatprep.subr.mxu0 %v474
    %3710 = vmatpush1.msra.mxu0 %v473
    %3711 = vmatprep.subr.mxu0 %v469
    %3712 = vmatpush1.msra.mxu0 %v468
    %3713 = vmatprep.subr.mxu0 %v464
    %3714 = vmatpush1.msra.mxu0 %v463
    %3715 = vmatprep.subr.mxu0 %v459
    %3716 = vmatpush1.msra.mxu0 %v458
    %3717 = vmatprep.subr.mxu0 %v454
    %3718 = vmatpush1.msra.mxu0 %v453
    %3719 = vmatprep.subr.mxu0 0.0
    %3720 = vmatpush2.msra.mxu0 0.0
    %3721 = vmatprep.subr.mxu0 0.0
    %3722 = vmatpush2.msra.mxu0 0.0
    %3723 = vmatprep.subr.mxu0 0.0
    %3724 = vmatpush2.msra.mxu0 0.0
    %3725 = vmatprep.subr.mxu0 0.0
    %3726 = vmatpush2.msra.mxu0 0.0
    %3727 = vmatprep.subr.mxu0 0.0
    %3728 = vmatpush2.msra.mxu0 0.0
    %3729 = vmatprep.subr.mxu0 0.0
    %3730 = vmatpush2.msra.mxu0 0.0
    %3731 = vmatprep.subr.mxu0 0.0
    %3732 = vmatpush2.msra.mxu0 0.0
    %3733 = vmatprep.subr.mxu0 0.0
    %3734 = vmatpush2.msra.mxu0 0.0
    %3735 = vmatprep.subr.mxu0 0.0
    %3736 = vmatpush2.msra.mxu0 0.0
    %3737 = vmatprep.subr.mxu0 0.0
    %3738 = vmatpush2.msra.mxu0 0.0
    %3739 = vmatprep.subr.mxu0 0.0
    %3740 = vmatpush2.msra.mxu0 0.0
    %3741 = vmatprep.subr.mxu0 0.0
    %3742 = vmatpush2.msra.mxu0 0.0
    %3743 = vmatprep.subr.mxu0 0.0
    %3744 = vmatpush2.msra.mxu0 0.0
    %3745 = vmatprep.subr.mxu0 0.0
    %3746 = vmatpush2.msra.mxu0 0.0
    %3747 = vmatprep.subr.mxu0 0.0
    %3748 = vmatpush2.msra.mxu0 0.0
    %3749 = vmatprep.subr.mxu0 0.0
    %3750 = vmatpush2.msra.mxu0 0.0
    %3751 = vmatprep.mubr.f32.mxu0 0.0
    %3752 = vmatmul.mubr.f32.gmra.mxu0 %v3681
    %v3753 = vpop.f32.mrf.mxu0
    %v3754 = vadd.f32 0.0, %v3753
    %v3755 = vpop.f32.mrf.mxu0
    %v3756 = vadd.f32 0.0, %v3755
    %3757 = vdwg.mxu0
    %3758 = vmatprep.subr.mxu0 %v531
    %3759 = vmatpush1.msra.mxu0 %v530
    %3760 = vmatprep.subr.mxu0 %v526
    %3761 = vmatpush1.msra.mxu0 %v525
    %3762 = vmatprep.subr.mxu0 %v521
    %3763 = vmatpush1.msra.mxu0 %v520
    %3764 = vmatprep.subr.mxu0 %v516
    %3765 = vmatpush1.msra.mxu0 %v515
    %3766 = vmatprep.subr.mxu0 %v511
    %3767 = vmatpush1.msra.mxu0 %v510
    %3768 = vmatprep.subr.mxu0 %v506
    %3769 = vmatpush1.msra.mxu0 %v505
    %3770 = vmatprep.subr.mxu0 %v501
    %3771 = vmatpush1.msra.mxu0 %v500
    %3772 = vmatprep.subr.mxu0 %v496
    %3773 = vmatpush1.msra.mxu0 %v495
    %3774 = vmatprep.subr.mxu0 %v491
    %3775 = vmatpush1.msra.mxu0 %v490
    %3776 = vmatprep.subr.mxu0 %v486
    %3777 = vmatpush1.msra.mxu0 %v485
    %3778 = vmatprep.subr.mxu0 %v481
    %3779 = vmatpush1.msra.mxu0 %v480
    %3780 = vmatprep.subr.mxu0 %v476
    %3781 = vmatpush1.msra.mxu0 %v475
    %3782 = vmatprep.subr.mxu0 %v471
    %3783 = vmatpush1.msra.mxu0 %v470
    %3784 = vmatprep.subr.mxu0 %v466
    %3785 = vmatpush1.msra.mxu0 %v465
    %3786 = vmatprep.subr.mxu0 %v461
    %3787 = vmatpush1.msra.mxu0 %v460
    %3788 = vmatprep.subr.mxu0 %v456
    %3789 = vmatpush1.msra.mxu0 %v455
    %3790 = vmatprep.subr.mxu0 0.0
    %3791 = vmatpush2.msra.mxu0 0.0
    %3792 = vmatprep.subr.mxu0 0.0
    %3793 = vmatpush2.msra.mxu0 0.0
    %3794 = vmatprep.subr.mxu0 0.0
    %3795 = vmatpush2.msra.mxu0 0.0
    %3796 = vmatprep.subr.mxu0 0.0
    %3797 = vmatpush2.msra.mxu0 0.0
    %3798 = vmatprep.subr.mxu0 0.0
    %3799 = vmatpush2.msra.mxu0 0.0
    %3800 = vmatprep.subr.mxu0 0.0
    %3801 = vmatpush2.msra.mxu0 0.0
    %3802 = vmatprep.subr.mxu0 0.0
    %3803 = vmatpush2.msra.mxu0 0.0
    %3804 = vmatprep.subr.mxu0 0.0
    %3805 = vmatpush2.msra.mxu0 0.0
    %3806 = vmatprep.subr.mxu0 0.0
    %3807 = vmatpush2.msra.mxu0 0.0
    %3808 = vmatprep.subr.mxu0 0.0
    %3809 = vmatpush2.msra.mxu0 0.0
    %3810 = vmatprep.subr.mxu0 0.0
    %3811 = vmatpush2.msra.mxu0 0.0
    %3812 = vmatprep.subr.mxu0 0.0
    %3813 = vmatpush2.msra.mxu0 0.0
    %3814 = vmatprep.subr.mxu0 0.0
    %3815 = vmatpush2.msra.mxu0 0.0
    %3816 = vmatprep.subr.mxu0 0.0
    %3817 = vmatpush2.msra.mxu0 0.0
    %3818 = vmatprep.subr.mxu0 0.0
    %3819 = vmatpush2.msra.mxu0 0.0
    %3820 = vmatprep.subr.mxu0 0.0
    %3821 = vmatpush2.msra.mxu0 0.0
    %3822 = vmatprep.mubr.f32.mxu0 0.0
    %3823 = vmatmul.mubr.f32.gmra.mxu0 %v3681
    %v3824 = vpop.f32.mrf.mxu0
    %v3825 = vadd.f32 0.0, %v3824
    %v3826 = vpop.f32.mrf.mxu0
    %v3827 = vadd.f32 0.0, %v3826
    %3828 = vdwg.mxu0
    %3829 = vmatprep.subr.mxu0 0.0
    %3830 = vmatpush1.msra.mxu0 %v532
    %3831 = vmatprep.subr.mxu0 0.0
    %3832 = vmatpush1.msra.mxu0 %v527
    %3833 = vmatprep.subr.mxu0 0.0
    %3834 = vmatpush1.msra.mxu0 %v522
    %3835 = vmatprep.subr.mxu0 0.0
    %3836 = vmatpush1.msra.mxu0 %v517
    %3837 = vmatprep.subr.mxu0 0.0
    %3838 = vmatpush1.msra.mxu0 %v512
    %3839 = vmatprep.subr.mxu0 0.0
    %3840 = vmatpush1.msra.mxu0 %v507
    %3841 = vmatprep.subr.mxu0 0.0
    %3842 = vmatpush1.msra.mxu0 %v502
    %3843 = vmatprep.subr.mxu0 0.0
    %3844 = vmatpush1.msra.mxu0 %v497
    %3845 = vmatprep.subr.mxu0 0.0
    %3846 = vmatpush1.msra.mxu0 %v492
    %3847 = vmatprep.subr.mxu0 0.0
    %3848 = vmatpush1.msra.mxu0 %v487
    %3849 = vmatprep.subr.mxu0 0.0
    %3850 = vmatpush1.msra.mxu0 %v482
    %3851 = vmatprep.subr.mxu0 0.0
    %3852 = vmatpush1.msra.mxu0 %v477
    %3853 = vmatprep.subr.mxu0 0.0
    %3854 = vmatpush1.msra.mxu0 %v472
    %3855 = vmatprep.subr.mxu0 0.0
    %3856 = vmatpush1.msra.mxu0 %v467
    %3857 = vmatprep.subr.mxu0 0.0
    %3858 = vmatpush1.msra.mxu0 %v462
    %3859 = vmatprep.subr.mxu0 0.0
    %3860 = vmatpush1.msra.mxu0 %v457
    %3861 = vmatprep.subr.mxu0 0.0
    %3862 = vmatpush2.msra.mxu0 0.0
    %3863 = vmatprep.subr.mxu0 0.0
    %3864 = vmatpush2.msra.mxu0 0.0
    %3865 = vmatprep.subr.mxu0 0.0
    %3866 = vmatpush2.msra.mxu0 0.0
    %3867 = vmatprep.subr.mxu0 0.0
    %3868 = vmatpush2.msra.mxu0 0.0
    %3869 = vmatprep.subr.mxu0 0.0
    %3870 = vmatpush2.msra.mxu0 0.0
    %3871 = vmatprep.subr.mxu0 0.0
    %3872 = vmatpush2.msra.mxu0 0.0
    %3873 = vmatprep.subr.mxu0 0.0
    %3874 = vmatpush2.msra.mxu0 0.0
    %3875 = vmatprep.subr.mxu0 0.0
    %3876 = vmatpush2.msra.mxu0 0.0
    %3877 = vmatprep.subr.mxu0 0.0
    %3878 = vmatpush2.msra.mxu0 0.0
    %3879 = vmatprep.subr.mxu0 0.0
    %3880 = vmatpush2.msra.mxu0 0.0
    %3881 = vmatprep.subr.mxu0 0.0
    %3882 = vmatpush2.msra.mxu0 0.0
    %3883 = vmatprep.subr.mxu0 0.0
    %3884 = vmatpush2.msra.mxu0 0.0
    %3885 = vmatprep.subr.mxu0 0.0
    %3886 = vmatpush2.msra.mxu0 0.0
    %3887 = vmatprep.subr.mxu0 0.0
    %3888 = vmatpush2.msra.mxu0 0.0
    %3889 = vmatprep.subr.mxu0 0.0
    %3890 = vmatpush2.msra.mxu0 0.0
    %3891 = vmatprep.subr.mxu0 0.0
    %3892 = vmatpush2.msra.mxu0 0.0
    %3893 = vmatprep.mubr.f32.mxu0 0.0
    %3894 = vmatmul.mubr.f32.gmra.mxu0 %v3681
    %v3895 = vpop.f32.mrf.mxu0
    %v3896 = vadd.f32 0.0, %v3895
    %v3897 = vpop.f32.mrf.mxu0
    %3898 = vdwg.mxu0
    %v3904 = vcombine.low %v3754, %v3756
    %v3905 = vcombine.low %v3825, %v3827
    %v3907 = vunpack.c.l.s4 1966171168
    %v3908 = vunpack.c.0.s8 %v3907
    %v3909 = vlaneseq
    %v3910 = vshrl.u32 %v3909, 7
    %v3911 = vsub.s32 %v3908, %v3910
    %v3912 = vrot.slane %v3904, %v3911
    %v3914 = vunpack.c.l.s4 1966171168
    %v3915 = vunpack.c.0.s8 %v3914
    %v3916 = vlaneseq
    %v3917 = vshrl.u32 %v3916, 7
    %v3918 = vsub.s32 %v3915, %v3917
    %v3919 = vrot.slane %v3905, %v3918
    %v3921 = vunpack.c.l.s4 1966171168
    %v3922 = vunpack.c.0.s8 %v3921
    %v3923 = vlaneseq
    %v3924 = vshrl.u32 %v3923, 7
    %v3925 = vsub.s32 %v3922, %v3924
    %v3926 = vrot.slane %v3896, %v3925
    %v3927 = vcombine.low %v3912, %v3919
    %v3929 = vunpack.c.l.s4 1966171168
    %v3930 = vunpack.c.0.s8 %v3929
    %v3931 = vlaneseq
    %v3932 = vshrl.u32 %v3931, 7
    %v3933 = vsub.s32 %v3930, %v3932
    %v3934 = vrot.slane %v3927, %v3933
    %v3936 = vunpack.c.l.s4 1966171168
    %v3937 = vunpack.c.0.s8 %v3936
    %v3938 = vlaneseq
    %v3939 = vshrl.u32 %v3938, 7
    %v3940 = vsub.s32 %v3937, %v3939
    %v3941 = vrot.slane %v3926, %v3940
    %v3942 = vcombine.low %v3934, %v3941
    %v3944 = vadd.f32 %v3686, %v3942
    %v3945 = vxor.u32 %v3944, 2147483648
    %v3946 = vmul.f32 %v3945, 1.442695
    %v3947 = vpow.pop %v3946
    %v3948 = vadd.f32 %v3947, 1.0
    %v3949 = vrcp.pop %v3948
    %v3950 = vmul.f32 1.0, %v3949
    %v3952 = vrot.slane %v3944, 4
    %v3954 = vtanh.pop %v3952
    %v3955 = vmul.f32 %v3950, %v3682
    %v3957 = vrot.slane %v3950, 1
    %v3959 = vmul.f32 %v3957, %v3954
    %v3960 = vadd.f32 %v3955, %v3959
    %3961 = vmatprep.subr.mxu0 0.0
    %3962 = vmatpush1.msra.mxu0 %v548
    %3963 = vmatprep.subr.mxu0 0.0
    %3964 = vmatpush1.msra.mxu0 %v547
    %3965 = vmatprep.subr.mxu0 0.0
    %3966 = vmatpush1.msra.mxu0 %v546
    %3967 = vmatprep.subr.mxu0 0.0
    %3968 = vmatpush1.msra.mxu0 %v545
    %3969 = vmatprep.subr.mxu0 0.0
    %3970 = vmatpush1.msra.mxu0 %v544
    %3971 = vmatprep.subr.mxu0 0.0
    %3972 = vmatpush1.msra.mxu0 %v543
    %3973 = vmatprep.subr.mxu0 0.0
    %3974 = vmatpush1.msra.mxu0 %v542
    %3975 = vmatprep.subr.mxu0 0.0
    %3976 = vmatpush1.msra.mxu0 %v541
    %3977 = vmatprep.subr.mxu0 0.0
    %3978 = vmatpush1.msra.mxu0 %v540
    %3979 = vmatprep.subr.mxu0 0.0
    %3980 = vmatpush1.msra.mxu0 %v539
    %3981 = vmatprep.subr.mxu0 0.0
    %3982 = vmatpush1.msra.mxu0 %v538
    %3983 = vmatprep.subr.mxu0 0.0
    %3984 = vmatpush1.msra.mxu0 %v537
    %3985 = vmatprep.subr.mxu0 0.0
    %3986 = vmatpush1.msra.mxu0 %v536
    %3987 = vmatprep.subr.mxu0 0.0
    %3988 = vmatpush1.msra.mxu0 %v535
    %3989 = vmatprep.subr.mxu0 0.0
    %3990 = vmatpush1.msra.mxu0 %v534
    %3991 = vmatprep.subr.mxu0 0.0
    %3992 = vmatpush1.msra.mxu0 %v533
    %3993 = vmatprep.subr.mxu0 0.0
    %3994 = vmatpush2.msra.mxu0 0.0
    %3995 = vmatprep.subr.mxu0 0.0
    %3996 = vmatpush2.msra.mxu0 0.0
    %3997 = vmatprep.subr.mxu0 0.0
    %3998 = vmatpush2.msra.mxu0 0.0
    %3999 = vmatprep.subr.mxu0 0.0
    %4000 = vmatpush2.msra.mxu0 0.0
    %4001 = vmatprep.subr.mxu0 0.0
    %4002 = vmatpush2.msra.mxu0 0.0
    %4003 = vmatprep.subr.mxu0 0.0
    %4004 = vmatpush2.msra.mxu0 0.0
    %4005 = vmatprep.subr.mxu0 0.0
    %4006 = vmatpush2.msra.mxu0 0.0
    %4007 = vmatprep.subr.mxu0 0.0
    %4008 = vmatpush2.msra.mxu0 0.0
    %4009 = vmatprep.subr.mxu0 0.0
    %4010 = vmatpush2.msra.mxu0 0.0
    %4011 = vmatprep.subr.mxu0 0.0
    %4012 = vmatpush2.msra.mxu0 0.0
    %4013 = vmatprep.subr.mxu0 0.0
    %4014 = vmatpush2.msra.mxu0 0.0
    %4015 = vmatprep.subr.mxu0 0.0
    %4016 = vmatpush2.msra.mxu0 0.0
    %4017 = vmatprep.subr.mxu0 0.0
    %4018 = vmatpush2.msra.mxu0 0.0
    %4019 = vmatprep.subr.mxu0 0.0
    %4020 = vmatpush2.msra.mxu0 0.0
    %4021 = vmatprep.subr.mxu0 0.0
    %4022 = vmatpush2.msra.mxu0 0.0
    %4023 = vmatprep.subr.mxu0 0.0
    %4024 = vmatpush2.msra.mxu0 0.0
    %4025 = vmatprep.mubr.f32.mxu0 0.0
    %4026 = vmatmul.mubr.f32.gmra.mxu0 %v3960
    %v4027 = vpop.f32.mrf.mxu0
    %v4028 = vadd.f32 %v549, %v4027
    %v4029 = vpop.f32.mrf.mxu0
    %4030 = vdwg.mxu0
    %v4031 = vsel %vm915, %v4028, -inf
    %4032 = vmax.xlane.f32.xlu0 %v4031
    %v4033 = vpop.xlane.xlu0 %4032
    %vm4034 = vcmp.ge.f32.partialorder %v4028, %v4033
    %v4035 = vsel %vm4034, 1, 0
    %v4036 = vcvt.s32.f32 %v4035
    %v4037 = vsel %vm915, %v4036, 0.0
    %4038 = vadd.xlane.f32.xlu0 %v4037
    %v4039 = vpop.xlane.xlu0 %4038
    %4040 = vmatprep.subr.mxu0 0.0
    %4041 = vmatpush1.msra.mxu0 %v565
    %4042 = vmatprep.subr.mxu0 0.0
    %4043 = vmatpush1.msra.mxu0 %v564
    %4044 = vmatprep.subr.mxu0 0.0
    %4045 = vmatpush1.msra.mxu0 %v563
    %4046 = vmatprep.subr.mxu0 0.0
    %4047 = vmatpush1.msra.mxu0 %v562
    %4048 = vmatprep.subr.mxu0 0.0
    %4049 = vmatpush1.msra.mxu0 %v561
    %4050 = vmatprep.subr.mxu0 0.0
    %4051 = vmatpush1.msra.mxu0 %v560
    %4052 = vmatprep.subr.mxu0 0.0
    %4053 = vmatpush1.msra.mxu0 %v559
    %4054 = vmatprep.subr.mxu0 0.0
    %4055 = vmatpush1.msra.mxu0 %v558
    %4056 = vmatprep.subr.mxu0 0.0
    %4057 = vmatpush1.msra.mxu0 %v557
    %4058 = vmatprep.subr.mxu0 0.0
    %4059 = vmatpush1.msra.mxu0 %v556
    %4060 = vmatprep.subr.mxu0 0.0
    %4061 = vmatpush1.msra.mxu0 %v555
    %4062 = vmatprep.subr.mxu0 0.0
    %4063 = vmatpush1.msra.mxu0 %v554
    %4064 = vmatprep.subr.mxu0 0.0
    %4065 = vmatpush1.msra.mxu0 %v553
    %4066 = vmatprep.subr.mxu0 0.0
    %4067 = vmatpush1.msra.mxu0 %v552
    %4068 = vmatprep.subr.mxu0 0.0
    %4069 = vmatpush1.msra.mxu0 %v551
    %4070 = vmatprep.subr.mxu0 0.0
    %4071 = vmatpush1.msra.mxu0 %v550
    %4072 = vmatprep.subr.mxu0 0.0
    %4073 = vmatpush2.msra.mxu0 0.0
    %4074 = vmatprep.subr.mxu0 0.0
    %4075 = vmatpush2.msra.mxu0 0.0
    %4076 = vmatprep.subr.mxu0 0.0
    %4077 = vmatpush2.msra.mxu0 0.0
    %4078 = vmatprep.subr.mxu0 0.0
    %4079 = vmatpush2.msra.mxu0 0.0
    %4080 = vmatprep.subr.mxu0 0.0
    %4081 = vmatpush2.msra.mxu0 0.0
    %4082 = vmatprep.subr.mxu0 0.0
    %4083 = vmatpush2.msra.mxu0 0.0
    %4084 = vmatprep.subr.mxu0 0.0
    %4085 = vmatpush2.msra.mxu0 0.0
    %4086 = vmatprep.subr.mxu0 0.0
    %4087 = vmatpush2.msra.mxu0 0.0
    %4088 = vmatprep.subr.mxu0 0.0
    %4089 = vmatpush2.msra.mxu0 0.0
    %4090 = vmatprep.subr.mxu0 0.0
    %4091 = vmatpush2.msra.mxu0 0.0
    %4092 = vmatprep.subr.mxu0 0.0
    %4093 = vmatpush2.msra.mxu0 0.0
    %4094 = vmatprep.subr.mxu0 0.0
    %4095 = vmatpush2.msra.mxu0 0.0
    %4096 = vmatprep.subr.mxu0 0.0
    %4097 = vmatpush2.msra.mxu0 0.0
    %4098 = vmatprep.subr.mxu0 0.0
    %4099 = vmatpush2.msra.mxu0 0.0
    %4100 = vmatprep.subr.mxu0 0.0
    %4101 = vmatpush2.msra.mxu0 0.0
    %4102 = vmatprep.subr.mxu0 0.0
    %4103 = vmatpush2.msra.mxu0 0.0
    %4104 = vmatprep.mubr.f32.mxu0 0.0
    %4105 = vmatmul.mubr.f32.gmra.mxu0 %v4036
    %v4106 = vpop.f32.mrf.mxu0
    %v4107 = vadd.f32 0.0, %v4106
    %v4108 = vpop.f32.mrf.mxu0
    %4109 = vdwg.mxu0
    %v4110 = vrcp.pop %v4039
    %v4111 = vmul.f32 %v4107, %v4110
    %v4112 = vrot.slane %v3950, 3
    %v4114 = vmul.f32 %v4112, %v4111
    %v4115 = vadd.f32 %v3960, %v4114
    %v4116 = vtanh.pop %v4115
    %v4117 = vrot.slane %v3950, 2
    %v4119 = vmul.f32 %v4117, %v4116
    %4120 = vst [vmem:[#allocation3 + $0x7] sm:$0x1] %v4119
    %s4121 = sadd.s32 %s1006, 7
    %p4122 = scmp.lt.s32.totalorder %s4121, 8
    %s4123 = scalar_select %p4122, 1, 0
    %v4124 = vstv %s4123
    %vm4125 = vcmp.eq.s32.totalorder %v4124, 1
    %v4126 = vsel %vm4125, %v4119, %v3681
    %v4127 = vsel %vm4125, %v4115, %v3682
    %4128 = vst [vmem:[#allocation16] sm:$0x1] %v4126
    %4129 = vst [vmem:[#allocation18] sm:$0x1] %v4127
    %v4130 = vld [vmem:[#allocation3] sm:$0xff]
    %v4131 = vld [vmem:[#allocation13] sm:$0xff]
    %v4132 = vld [vmem:[#allocation13 + $0x8] sm:$0xff]
    %v4133 = vld [vmem:[#allocation13 + $0x10] sm:$0xff]
    %v4134 = vld [vmem:[#allocation13 + $0x18] sm:$0xff]
    %v4135 = vld [vmem:[#allocation13 + $0x20] sm:$0xff]
    %v4136 = vld [vmem:[#allocation13 + $0x28] sm:$0xff]
    %v4137 = vld [vmem:[#allocation13 + $0x30] sm:$0xff]
    %v4138 = vld [vmem:[#allocation13 + $0x38] sm:$0xff]
    %v4139 = vld [vmem:[#allocation13 + $0x40] sm:$0xff]
    %v4140 = vld [vmem:[#allocation13 + $0x48] sm:$0xff]
    %v4141 = vld [vmem:[#allocation13 + $0x50] sm:$0xff]
    %v4142 = vld [vmem:[#allocation13 + $0x58] sm:$0xff]
    %v4143 = vld [vmem:[#allocation13 + $0x60] sm:$0xff]
    %v4144 = vld [vmem:[#allocation13 + $0x68] sm:$0xff]
    %v4145 = vld [vmem:[#allocation13 + $0x70] sm:$0xff]
    %v4146 = vld [vmem:[#allocation13 + $0x78] sm:$0xff]
    %4147 = vmatprep.subr.mxu0 0.0
    %4148 = vmatpush1.msra.mxu0 %v4146
    %4149 = vmatprep.subr.mxu0 0.0
    %4150 = vmatpush1.msra.mxu0 %v4145
    %4151 = vmatprep.subr.mxu0 0.0
    %4152 = vmatpush1.msra.mxu0 %v4144
    %4153 = vmatprep.subr.mxu0 0.0
    %4154 = vmatpush1.msra.mxu0 %v4143
    %4155 = vmatprep.subr.mxu0 0.0
    %4156 = vmatpush1.msra.mxu0 %v4142
    %4157 = vmatprep.subr.mxu0 0.0
    %4158 = vmatpush1.msra.mxu0 %v4141
    %4159 = vmatprep.subr.mxu0 0.0
    %4160 = vmatpush1.msra.mxu0 %v4140
    %4161 = vmatprep.subr.mxu0 0.0
    %4162 = vmatpush1.msra.mxu0 %v4139
    %4163 = vmatprep.subr.mxu0 0.0
    %4164 = vmatpush1.msra.mxu0 %v4138
    %4165 = vmatprep.subr.mxu0 0.0
    %4166 = vmatpush1.msra.mxu0 %v4137
    %4167 = vmatprep.subr.mxu0 0.0
    %4168 = vmatpush1.msra.mxu0 %v4136
    %4169 = vmatprep.subr.mxu0 0.0
    %4170 = vmatpush1.msra.mxu0 %v4135
    %4171 = vmatprep.subr.mxu0 0.0
    %4172 = vmatpush1.msra.mxu0 %v4134
    %4173 = vmatprep.subr.mxu0 0.0
    %4174 = vmatpush1.msra.mxu0 %v4133
    %4175 = vmatprep.subr.mxu0 0.0
    %4176 = vmatpush1.msra.mxu0 %v4132
    %4177 = vmatprep.subr.mxu0 0.0
    %4178 = vmatpush1.msra.mxu0 %v4131
    %4179 = vmatprep.subr.mxu0 0.0
    %4180 = vmatpush2.msra.mxu0 0.0
    %4181 = vmatprep.subr.mxu0 0.0
    %4182 = vmatpush2.msra.mxu0 0.0
    %4183 = vmatprep.subr.mxu0 0.0
    %4184 = vmatpush2.msra.mxu0 0.0
    %4185 = vmatprep.subr.mxu0 0.0
    %4186 = vmatpush2.msra.mxu0 0.0
    %4187 = vmatprep.subr.mxu0 0.0
    %4188 = vmatpush2.msra.mxu0 0.0
    %4189 = vmatprep.subr.mxu0 0.0
    %4190 = vmatpush2.msra.mxu0 0.0
    %4191 = vmatprep.subr.mxu0 0.0
    %4192 = vmatpush2.msra.mxu0 0.0
    %4193 = vmatprep.subr.mxu0 0.0
    %4194 = vmatpush2.msra.mxu0 0.0
    %4195 = vmatprep.subr.mxu0 0.0
    %4196 = vmatpush2.msra.mxu0 0.0
    %4197 = vmatprep.subr.mxu0 0.0
    %4198 = vmatpush2.msra.mxu0 0.0
    %4199 = vmatprep.subr.mxu0 0.0
    %4200 = vmatpush2.msra.mxu0 0.0
    %4201 = vmatprep.subr.mxu0 0.0
    %4202 = vmatpush2.msra.mxu0 0.0
    %4203 = vmatprep.subr.mxu0 0.0
    %4204 = vmatpush2.msra.mxu0 0.0
    %4205 = vmatprep.subr.mxu0 0.0
    %4206 = vmatpush2.msra.mxu0 0.0
    %4207 = vmatprep.subr.mxu0 0.0
    %4208 = vmatpush2.msra.mxu0 0.0
    %4209 = vmatprep.subr.mxu0 0.0
    %4210 = vmatpush2.msra.mxu0 0.0
    %4211 = vmatprep.mubr.f32.mxu0 0.0
    %4212 = vmatmul.mubr.f32.gmra.mxu0 %v4130
    %v4213 = vpop.f32.mrf.mxu0
    %v4214 = vadd.f32 0.0, %v4213
    %v4215 = vpop.f32.mrf.mxu0
    %4216 = vdwg.mxu0
    %4217 = vst [vmem:[#allocation15] sm:$0xff] %v4214
    // Predicated region
    $region70: #{tpu_custom_call.1} parent=1 // pred_check
      _
    $region71: #{tpu_custom_call.1} parent=1 // pred_check_branch
      %4219 = sbr.rel (0) target = $region73
    $region72: #{tpu_custom_call.1} parent=1 // pred_region
      %s4221 = ssub.s32 128, 128
      %4222 = vsyncadd [#allocation6], %s4221
      %s4224 = sshll.u32 [#allocation15], 4
      %s4225 = int_to_ptr.vmem [resolvable:$true] %s4224
      %4227 = dma.vmem_to_hbm [thread:$0]  %s4225, 128, %s10, [#allocation6]
    $region73: #{tpu_custom_call.1} parent=1 // pred_fallthru
      _
    // Predicated region
    $region74: #{tpu_custom_call.1} parent=1 // pred_check
      _
    $region75: #{tpu_custom_call.1} parent=1 // pred_check_branch
      %4229 = sbr.rel (0) target = $region77
    $region76: #{tpu_custom_call.1} parent=1 // pred_region
      %s4231 = ssub.s32 16, 16
      %4232 = vsyncadd [#allocation17], %s4231
      %s4234 = sshll.u32 [#allocation16], 4
      %s4235 = int_to_ptr.vmem [resolvable:$true] %s4234
      %4237 = dma.vmem_to_hbm [thread:$0]  %s4235, 16, %s11, [#allocation17]
    $region77: #{tpu_custom_call.1} parent=1 // pred_fallthru
      _
    // Predicated region
    $region78: #{tpu_custom_call.1} parent=1 // pred_check
      _
    $region79: #{tpu_custom_call.1} parent=1 // pred_check_branch
      %4239 = sbr.rel (0) target = $region81
    $region80: #{tpu_custom_call.1} parent=1 // pred_region
      %s4241 = ssub.s32 16, 16
      %4242 = vsyncadd [#allocation17], %s4241
      %s4244 = sshll.u32 [#allocation18], 4
      %s4245 = int_to_ptr.vmem [resolvable:$true] %s4244
      %4247 = dma.vmem_to_hbm [thread:$0]  %s4245, 16, %s12, [#allocation17]
    $region81: #{tpu_custom_call.1} parent=1 // pred_fallthru
      _
    // Predicated region
    $region82: #{tpu_custom_call.1} parent=1 // pred_check
      _
    $region83: #{tpu_custom_call.1} parent=1 // pred_check_branch
      %4249 = sbr.rel (0) target = $region85
    $region84: #{tpu_custom_call.1} parent=1 // pred_region
      %4250 = dma.done [#allocation6], 128
    $region85: #{tpu_custom_call.1} parent=1 // pred_fallthru
      _
    // Predicated region
    $region86: #{tpu_custom_call.1} parent=1 // pred_check
      _
    $region87: #{tpu_custom_call.1} parent=1 // pred_check_branch
      %4252 = sbr.rel (0) target = $region89
    $region88: #{tpu_custom_call.1} parent=1 // pred_region
      %4253 = dma.done [#allocation17], 16
    $region89: #{tpu_custom_call.1} parent=1 // pred_fallthru
      _
    // Predicated region
    $region90: #{tpu_custom_call.1} parent=1 // pred_check
      _
    $region91: #{tpu_custom_call.1} parent=1 // pred_check_branch
      %4255 = sbr.rel (0) target = $region93
    $region92: #{tpu_custom_call.1} parent=1 // pred_region
      %4256 = dma.done [#allocation17], 16
    $region93: #{tpu_custom_call.1} parent=1 // pred_fallthru
      _
    %4257 = vsyncpa [#allocation5], 1
    %4258 = vsyncpa [#allocation8], 1
    %4259 = vsyncpa [#allocation11], 1
    %4260 = vsyncpa [#allocation14], 1
    %4261 = vsyncpa [#allocation6], 1
    %4262 = vsyncpa [#allocation17], 1

</llo_original>
